<compile_context>
chip_gen: v6e
topology: v6e:2x2x1
jax: 0.10.0
libtpu: 0.0.40
codegen_flags: <defaults>
</compile_context>

<pallas_src>
import functools

import jax
import jax.numpy as jnp
from jax.experimental import pallas as pl
from jax.experimental.pallas import tpu as pltpu

_PARALLEL_1D = pltpu.CompilerParams(dimension_semantics=("parallel",))
_VMEM_SPEC = pl.BlockSpec(memory_space=pltpu.MemorySpace.VMEM)


def _round_up(x, m):
    return (x + m - 1) // m * m


# ----------------------------- Pallas kernels ------------------------------ #

def _conv_kernel(*refs, has_bias, has_residual, has_bn):
    """Fused conv tile:  o = epilogue( patches @ w (+ bias) (+ residual) ).

    patches tile : (TM, K*Cin)   bf16   (taps fused into contraction dim)
    weight       : (K*Cin, Cout) bf16   (resident across the M grid)
    bias         : (1, Cout)     f32    (optional)
    residual     : (TM, Cout)    f32    (optional, fused add)
    scale/shift  : (1, Cout)     f32    (optional, fused BN+ReLU epilogue)
    out tile     : (TM, Cout)    f32
    """
    it = iter(refs)
    p_ref = next(it)
    w_ref = next(it)
    b_ref = next(it) if has_bias else None
    r_ref = next(it) if has_residual else None
    s_ref = next(it) if has_bn else None
    t_ref = next(it) if has_bn else None
    o_ref = next(it)

    acc = jnp.dot(p_ref[...], w_ref[...], preferred_element_type=jnp.float32)
    if has_bias:
        acc = acc + b_ref[...]
    if has_residual:
        acc = acc + r_ref[...]
    if has_bn:                               # fused BN + ReLU epilogue (f32)
        acc = jnp.maximum(acc * s_ref[...] + t_ref[...], 0.0)
    o_ref[...] = acc.astype(o_ref.dtype)


def _bnrelu_kernel(x_ref, s_ref, b_ref, o_ref):
    """o = relu(x * scale + shift), scale/shift broadcast per channel."""
    o_ref[...] = jnp.maximum(x_ref[...] * s_ref[...] + b_ref[...], 0.0)


def _head_kernel(x_ref, s_ref, b_ref, wl_ref, bl_ref, o_ref):
    """Final BN+ReLU -> global avg pool -> linear.

    x_ref:  (N, HW, C);  s_ref/b_ref: (1, 1, C)
    wl_ref: (C, num_classes);  bl_ref: (1, num_classes);  o_ref: (N, classes)
    """
    x = jnp.maximum(x_ref[...] * s_ref[...] + b_ref[...], 0.0)
    pooled = jnp.sum(x, axis=1) * (1.0 / x_ref.shape[1])          # (N, C)
    o_ref[...] = (jnp.dot(pooled, wl_ref[...],
                          preferred_element_type=jnp.float32) + bl_ref[...])


# ------------------------------- wrappers ---------------------------------- #

def conv2d_pallas(x, w, b=None, stride=1, residual=None,
                  bn_scale=None, bn_shift=None, tm=512):
    """2-D conv (NHWC) as a single M-gridded Pallas matmul.

    Matches PyTorch Conv2d(kernel k, stride s, padding=(k-1)//2); optionally
    fuses bias, a residual add and a BN+ReLU epilogue.
    """
    N, H, W, Cin = x.shape
    kh, kw, _, Cout = w.shape
    pad = (kh - 1) // 2
    Ho = (H + 2 * pad - kh) // stride + 1
    Wo = (W + 2 * pad - kw) // stride + 1
    M = N * Ho * Wo
    KC = kh * kw * Cin

    # im2col with the taps fused into the contraction dimension: (M, K*Cin).
    if kh == 1 and kw == 1:
        patches = x[:, ::stride, ::stride, :].reshape(M, Cin)
    else:
        xp = jnp.pad(x, ((0, 0), (pad, pad), (pad, pad), (0, 0)))
        taps = [
            xp[:, dy:dy + stride * Ho:stride, dx:dx + stride * Wo:stride, :]
            .reshape(M, Cin)
            for dy in range(kh) for dx in range(kw)
        ]
        patches = jnp.concatenate(taps, axis=1)
    patches = patches.astype(jnp.bfloat16)              # halve HBM/VMEM traffic
    w_flat = w.reshape(KC, Cout).astype(jnp.bfloat16)   # f32 MXU accumulation

    tm = min(tm, _round_up(M, 8))
    grid = (pl.cdiv(M, tm),)

    operands = [patches, w_flat]
    in_specs = [pl.BlockSpec((tm, KC), lambda i: (i, 0)),
                pl.BlockSpec((KC, Cout), lambda i: (0, 0))]

    has_bias = b is not None
    if has_bias:
        operands.append(b.reshape(1, Cout).astype(jnp.float32))
        in_specs.append(pl.BlockSpec((1, Cout), lambda i: (0, 0)))

    has_residual = residual is not None
    if has_residual:
        operands.append(residual.reshape(M, Cout).astype(jnp.float32))
        in_specs.append(pl.BlockSpec((tm, Cout), lambda i: (i, 0)))

    has_bn = bn_scale is not None
    if has_bn:
        operands += [bn_scale.reshape(1, Cout).astype(jnp.float32),
                     bn_shift.reshape(1, Cout).astype(jnp.float32)]
        in_specs += [pl.BlockSpec((1, Cout), lambda i: (0, 0)),
                     pl.BlockSpec((1, Cout), lambda i: (0, 0))]

    kernel = functools.partial(_conv_kernel, has_bias=has_bias,
                               has_residual=has_residual, has_bn=has_bn)
    out = pl.pallas_call(
        kernel,
        out_shape=jax.ShapeDtypeStruct((M, Cout), jnp.float32),
        grid=grid,
        in_specs=in_specs,
        out_specs=pl.BlockSpec((tm, Cout), lambda i: (i, 0)),
        compiler_params=_PARALLEL_1D,
    )(*operands)
    return out.reshape(N, Ho, Wo, Cout)


def bn_relu_pallas(x, scale, shift, tm=1024):
    N, H, W, C = x.shape
    M = N * H * W
    tm = min(tm, _round_up(M, 8))
    out = pl.pallas_call(
        _bnrelu_kernel,
        out_shape=jax.ShapeDtypeStruct((M, C), jnp.float32),
        grid=(pl.cdiv(M, tm),),
        in_specs=[pl.BlockSpec((tm, C), lambda i: (i, 0)),
                  pl.BlockSpec((1, C), lambda i: (0, 0)),
                  pl.BlockSpec((1, C), lambda i: (0, 0))],
        out_specs=pl.BlockSpec((tm, C), lambda i: (i, 0)),
        compiler_params=_PARALLEL_1D,
    )(x.reshape(M, C), scale.reshape(1, C), shift.reshape(1, C))
    return out.reshape(N, H, W, C)


def head_pallas(x, scale, shift, wl, bl):
    N, H, W, C = x.shape
    nc = wl.shape[1]
    return pl.pallas_call(
        _head_kernel,
        out_shape=jax.ShapeDtypeStruct((N, nc), jnp.float32),
        in_specs=[_VMEM_SPEC] * 5,
        out_specs=_VMEM_SPEC,
    )(x.reshape(N, H * W, C), scale.reshape(1, 1, C), shift.reshape(1, 1, C),
      wl, bl.reshape(1, nc))


# --------------------------- parameters / model ----------------------------- #

def _fold_bn(gamma, beta, mean, var, eps=1e-5):
    scale = gamma / jnp.sqrt(var + eps)
    shift = beta - mean * scale
    return scale, shift


def init_resnet_params(key, depth, width, num_classes, skeleton=(16, 32, 64)):
    num_blocks = (depth - 4) // 6
    widths = [s * width for s in skeleton]
    keys = iter(jax.random.split(key, 4096))

    def conv_w(cin, cout, k):
        return jax.random.normal(next(keys), (k, k, cin, cout), jnp.float32) * 0.1

    def bn_p(c):
        gamma = jax.random.uniform(next(keys), (c,), jnp.float32, 0.5, 1.5)
        beta = jax.random.normal(next(keys), (c,), jnp.float32) * 0.1
        mean = jax.random.normal(next(keys), (c,), jnp.float32) * 0.1
        var = jax.random.uniform(next(keys), (c,), jnp.float32, 0.5, 1.5)
        return _fold_bn(gamma, beta, mean, var)

    params = {
        "conv0_w": conv_w(3, skeleton[0], 3),
        "conv0_b": jax.random.normal(next(keys), (skeleton[0],), jnp.float32) * 0.1,
    }

    groups = []
    ni, stride = skeleton[0], 1
    for no in widths:
        blocks = []
        bni, bstride = ni, stride
        for _ in range(num_blocks):
            blk = {
                "bn0": bn_p(bni),
                "conv0_w": conv_w(bni, no, 3),
                "conv0_b": jax.random.normal(next(keys), (no,), jnp.float32) * 0.1,
                "bn1": bn_p(no),
                "conv1_w": conv_w(no, no, 3),
                "convdim_w": conv_w(bni, no, 1) if bni != no else None,
                "stride": bstride,
            }
            blocks.append(blk)
            bni, bstride = no, 1
        groups.append(blocks)
        ni, stride = no, 2

    params["groups"] = groups
    params["bn"] = bn_p(widths[2])
    params["linear_w"] = jax.random.normal(next(keys), (widths[2], num_classes),
                                           jnp.float32) * 0.1
    params["linear_b"] = jax.random.normal(next(keys), (num_classes,),
                                           jnp.float32) * 0.1
    return params


def res_block(x, p):
    o1 = bn_relu_pallas(x, *p["bn0"])
    # conv0 with BN1 + ReLU fused into its epilogue -> o2 directly.
    o2 = conv2d_pallas(o1, p["conv0_w"], b=p["conv0_b"], stride=p["stride"],
                       bn_scale=p["bn1"][0], bn_shift=p["bn1"][1])
    if p["convdim_w"] is not None:
        shortcut = conv2d_pallas(o1, p["convdim_w"], stride=p["stride"])
    else:
        shortcut = x
    # conv1 (no bias) with the residual add fused into the same kernel.
    return conv2d_pallas(o2, p["conv1_w"], stride=1, residual=shortcut)


def resnet_forward(params, x_nchw):
    x = jnp.transpose(x_nchw, (0, 2, 3, 1))          # NCHW -> NHWC
    x = conv2d_pallas(x, params["conv0_w"], b=params["conv0_b"], stride=1)
    for blocks in params["groups"]:
        for blk in blocks:
            x = res_block(x, blk)
    return head_pallas(x, *params["bn"], params["linear_w"], params["linear_b"])


# ---------------------------------- main ------------------------------------ #

if __name__ == "__main__":
    key = jax.random.PRNGKey(0)
    pkey, xkey = jax.random.split(key)

    depth, width, num_classes = 10, 1, 10            # num_blocks = 1 per group
    params = init_resnet_params(pkey, depth, width, num_classes)

    x = jax.random.normal(xkey, (2, 3, 16, 16), jnp.float32)   # NCHW like PyTorch

    fwd = jax.jit(functools.partial(resnet_forward, params))
    out = fwd(x)
    jax.block_until_ready(out)

    assert out.shape == (2, num_classes), out.shape
    assert bool(jnp.all(jnp.isfinite(out)))
    print("KERNEL_OK")
</pallas_src>

<mosaic_0001>
module attributes {stable_mosaic.version = 11 : i64} {
  func.func @_conv_kernel(%arg0: i32, %arg1: memref<512x27xbf16, #tpu.memory_space<vmem>>, %arg2: memref<27x16xbf16, #tpu.memory_space<vmem>>, %arg3: memref<1x16xf32, #tpu.memory_space<vmem>>, %arg4: memref<512x16xf32, #tpu.memory_space<vmem>>) attributes {dimension_semantics = [#tpu.dimension_semantics<parallel>], iteration_bounds = array<i64: 1>, scalar_prefetch = 0 : i64, scratch_operands = 0 : i64, tpu.core_type = #tpu.core_type<tc>, window_params = [{transform_indices = @transform_0, window_bounds = array<i64: 512, 27>}, {pipeline_mode = #tpu.pipeline_mode<synchronous>, transform_indices = @transform_1, window_bounds = array<i64: 27, 16>}, {pipeline_mode = #tpu.pipeline_mode<synchronous>, transform_indices = @transform_2, window_bounds = array<i64: 1, 16>}, {transform_indices = @transform_3, window_bounds = array<i64: 512, 16>}]} {
    %c0 = arith.constant 0 : index
    %c0_0 = arith.constant 0 : index
    %0 = vector.load %arg1[%c0, %c0_0] : memref<512x27xbf16, #tpu.memory_space<vmem>>, vector<512x27xbf16>
    %c0_1 = arith.constant 0 : index
    %c0_2 = arith.constant 0 : index
    %1 = vector.load %arg2[%c0_1, %c0_2] : memref<27x16xbf16, #tpu.memory_space<vmem>>, vector<27x16xbf16>
    %cst = arith.constant dense<0.000000e+00> : vector<512x16xf32>
    %2 = tpu.matmul %0, %1, %cst {dimension_numbers = #tpu.dot_dimension_numbers<[1], [0], [0], [1], [0, 0, 1, 1], [], []>} : vector<512x27xbf16>, vector<27x16xbf16>, vector<512x16xf32> -> vector<512x16xf32>
    %c0_3 = arith.constant 0 : index
    %c0_4 = arith.constant 0 : index
    %3 = vector.load %arg3[%c0_3, %c0_4] : memref<1x16xf32, #tpu.memory_space<vmem>>, vector<1x16xf32>
    %4 = vector.broadcast %3 : vector<1x16xf32> to vector<512x16xf32>
    %5 = arith.addf %2, %4 : vector<512x16xf32>
    %c0_5 = arith.constant 0 : index
    %c0_6 = arith.constant 0 : index
    %6 = vector.load %arg4[%c0_5, %c0_6] : memref<512x16xf32, #tpu.memory_space<vmem>>, vector<512x16xf32>
    tpu.vector_store %arg4[%c0_5, %c0_6], %5 {strides = array<i32>} : memref<512x16xf32, #tpu.memory_space<vmem>>, vector<512x16xf32>,
    return
  }
  func.func @transform_0(%arg0: i32) -> (i32, i32) {
    %c0_i32 = arith.constant 0 : i32
    %c0_i32_0 = arith.constant 0 : i32
    return %arg0, %c0_i32 : i32, i32
  }
  func.func @transform_1(%arg0: i32) -> (i32, i32) {
    %c0_i32 = arith.constant 0 : i32
    %c0_i32_0 = arith.constant 0 : i32
    %c0_i32_1 = arith.constant 0 : i32
    return %c0_i32, %c0_i32_0 : i32, i32
  }
  func.func @transform_2(%arg0: i32) -> (i32, i32) {
    %c0_i32 = arith.constant 0 : i32
    %c0_i32_0 = arith.constant 0 : i32
    %c0_i32_1 = arith.constant 0 : i32
    return %c0_i32, %c0_i32_0 : i32, i32
  }
  func.func @transform_3(%arg0: i32) -> (i32, i32) {
    %c0_i32 = arith.constant 0 : i32
    %c0_i32_0 = arith.constant 0 : i32
    return %arg0, %c0_i32 : i32, i32
  }
}

module attributes {stable_mosaic.version = 11 : i64} {
  func.func @_bnrelu_kernel(%arg0: i32, %arg1: memref<512x16xf32, #tpu.memory_space<vmem>>, %arg2: memref<1x16xf32, #tpu.memory_space<vmem>>, %arg3: memref<1x16xf32, #tpu.memory_space<vmem>>, %arg4: memref<512x16xf32, #tpu.memory_space<vmem>>) attributes {dimension_semantics = [#tpu.dimension_semantics<parallel>], iteration_bounds = array<i64: 1>, scalar_prefetch = 0 : i64, scratch_operands = 0 : i64, tpu.core_type = #tpu.core_type<tc>, window_params = [{transform_indices = @transform_0, window_bounds = array<i64: 512, 16>}, {pipeline_mode = #tpu.pipeline_mode<synchronous>, transform_indices = @transform_1, window_bounds = array<i64: 1, 16>}, {pipeline_mode = #tpu.pipeline_mode<synchronous>, transform_indices = @transform_2, window_bounds = array<i64: 1, 16>}, {transform_indices = @transform_3, window_bounds = array<i64: 512, 16>}]} {
    %c0 = arith.constant 0 : index
    %c0_0 = arith.constant 0 : index
    %0 = vector.load %arg1[%c0, %c0_0] : memref<512x16xf32, #tpu.memory_space<vmem>>, vector<512x16xf32>
    %c0_1 = arith.constant 0 : index
    %c0_2 = arith.constant 0 : index
    %1 = vector.load %arg2[%c0_1, %c0_2] : memref<1x16xf32, #tpu.memory_space<vmem>>, vector<1x16xf32>
    %2 = vector.broadcast %1 : vector<1x16xf32> to vector<512x16xf32>
    %3 = arith.mulf %0, %2 : vector<512x16xf32>
    %c0_3 = arith.constant 0 : index
    %c0_4 = arith.constant 0 : index
    %4 = vector.load %arg3[%c0_3, %c0_4] : memref<1x16xf32, #tpu.memory_space<vmem>>, vector<1x16xf32>
    %5 = vector.broadcast %4 : vector<1x16xf32> to vector<512x16xf32>
    %6 = arith.addf %3, %5 : vector<512x16xf32>
    %cst = arith.constant 0.000000e+00 : f32
    %7 = vector.broadcast %cst : f32 to vector<512x16xf32>
    %8 = arith.maximumf %6, %7 : vector<512x16xf32>
    %c0_5 = arith.constant 0 : index
    %c0_6 = arith.constant 0 : index
    %9 = vector.load %arg4[%c0_5, %c0_6] : memref<512x16xf32, #tpu.memory_space<vmem>>, vector<512x16xf32>
    tpu.vector_store %arg4[%c0_5, %c0_6], %8 {strides = array<i32>} : memref<512x16xf32, #tpu.memory_space<vmem>>, vector<512x16xf32>,
    return
  }
  func.func @transform_0(%arg0: i32) -> (i32, i32) {
    %c0_i32 = arith.constant 0 : i32
    %c0_i32_0 = arith.constant 0 : i32
    return %arg0, %c0_i32 : i32, i32
  }
  func.func @transform_1(%arg0: i32) -> (i32, i32) {
    %c0_i32 = arith.constant 0 : i32
    %c0_i32_0 = arith.constant 0 : i32
    %c0_i32_1 = arith.constant 0 : i32
    return %c0_i32, %c0_i32_0 : i32, i32
  }
  func.func @transform_2(%arg0: i32) -> (i32, i32) {
    %c0_i32 = arith.constant 0 : i32
    %c0_i32_0 = arith.constant 0 : i32
    %c0_i32_1 = arith.constant 0 : i32
    return %c0_i32, %c0_i32_0 : i32, i32
  }
  func.func @transform_3(%arg0: i32) -> (i32, i32) {
    %c0_i32 = arith.constant 0 : i32
    %c0_i32_0 = arith.constant 0 : i32
    return %arg0, %c0_i32 : i32, i32
  }
}

module attributes {stable_mosaic.version = 11 : i64} {
  func.func @_conv_kernel(%arg0: i32, %arg1: memref<512x144xbf16, #tpu.memory_space<vmem>>, %arg2: memref<144x16xbf16, #tpu.memory_space<vmem>>, %arg3: memref<1x16xf32, #tpu.memory_space<vmem>>, %arg4: memref<1x16xf32, #tpu.memory_space<vmem>>, %arg5: memref<1x16xf32, #tpu.memory_space<vmem>>, %arg6: memref<512x16xf32, #tpu.memory_space<vmem>>) attributes {dimension_semantics = [#tpu.dimension_semantics<parallel>], iteration_bounds = array<i64: 1>, scalar_prefetch = 0 : i64, scratch_operands = 0 : i64, tpu.core_type = #tpu.core_type<tc>, window_params = [{transform_indices = @transform_0, window_bounds = array<i64: 512, 144>}, {pipeline_mode = #tpu.pipeline_mode<synchronous>, transform_indices = @transform_1, window_bounds = array<i64: 144, 16>}, {pipeline_mode = #tpu.pipeline_mode<synchronous>, transform_indices = @transform_2, window_bounds = array<i64: 1, 16>}, {pipeline_mode = #tpu.pipeline_mode<synchronous>, transform_indices = @transform_3, window_bounds = array<i64: 1, 16>}, {pipeline_mode = #tpu.pipeline_mode<synchronous>, transform_indices = @transform_4, window_bounds = array<i64: 1, 16>}, {transform_indices = @transform_5, window_bounds = array<i64: 512, 16>}]} {
    %c0 = arith.constant 0 : index
    %c0_0 = arith.constant 0 : index
    %0 = vector.load %arg1[%c0, %c0_0] : memref<512x144xbf16, #tpu.memory_space<vmem>>, vector<512x144xbf16>
    %c0_1 = arith.constant 0 : index
    %c0_2 = arith.constant 0 : index
    %1 = vector.load %arg2[%c0_1, %c0_2] : memref<144x16xbf16, #tpu.memory_space<vmem>>, vector<144x16xbf16>
    %cst = arith.constant dense<0.000000e+00> : vector<512x16xf32>
    %2 = tpu.matmul %0, %1, %cst {dimension_numbers = #tpu.dot_dimension_numbers<[1], [0], [0], [1], [0, 0, 1, 1], [], []>} : vector<512x144xbf16>, vector<144x16xbf16>, vector<512x16xf32> -> vector<512x16xf32>
    %c0_3 = arith.constant 0 : index
    %c0_4 = arith.constant 0 : index
    %3 = vector.load %arg3[%c0_3, %c0_4] : memref<1x16xf32, #tpu.memory_space<vmem>>, vector<1x16xf32>
    %4 = vector.broadcast %3 : vector<1x16xf32> to vector<512x16xf32>
    %5 = arith.addf %2, %4 : vector<512x16xf32>
    %c0_5 = arith.constant 0 : index
    %c0_6 = arith.constant 0 : index
    %6 = vector.load %arg4[%c0_5, %c0_6] : memref<1x16xf32, #tpu.memory_space<vmem>>, vector<1x16xf32>
    %7 = vector.broadcast %6 : vector<1x16xf32> to vector<512x16xf32>
    %8 = arith.mulf %5, %7 : vector<512x16xf32>
    %c0_7 = arith.constant 0 : index
    %c0_8 = arith.constant 0 : index
    %9 = vector.load %arg5[%c0_7, %c0_8] : memref<1x16xf32, #tpu.memory_space<vmem>>, vector<1x16xf32>
    %10 = vector.broadcast %9 : vector<1x16xf32> to vector<512x16xf32>
    %11 = arith.addf %8, %10 : vector<512x16xf32>
    %cst_9 = arith.constant 0.000000e+00 : f32
    %12 = vector.broadcast %cst_9 : f32 to vector<512x16xf32>
    %13 = arith.maximumf %11, %12 : vector<512x16xf32>
    %c0_10 = arith.constant 0 : index
    %c0_11 = arith.constant 0 : index
    %14 = vector.load %arg6[%c0_10, %c0_11] : memref<512x16xf32, #tpu.memory_space<vmem>>, vector<512x16xf32>
    tpu.vector_store %arg6[%c0_10, %c0_11], %13 {strides = array<i32>} : memref<512x16xf32, #tpu.memory_space<vmem>>, vector<512x16xf32>,
    return
  }
  func.func @transform_0(%arg0: i32) -> (i32, i32) {
    %c0_i32 = arith.constant 0 : i32
    %c0_i32_0 = arith.constant 0 : i32
    return %arg0, %c0_i32 : i32, i32
  }
  func.func @transform_1(%arg0: i32) -> (i32, i32) {
    %c0_i32 = arith.constant 0 : i32
    %c0_i32_0 = arith.constant 0 : i32
    %c0_i32_1 = arith.constant 0 : i32
    return %c0_i32, %c0_i32_0 : i32, i32
  }
  func.func @transform_2(%arg0: i32) -> (i32, i32) {
    %c0_i32 = arith.constant 0 : i32
    %c0_i32_0 = arith.constant 0 : i32
    %c0_i32_1 = arith.constant 0 : i32
    return %c0_i32, %c0_i32_0 : i32, i32
  }
  func.func @transform_3(%arg0: i32) -> (i32, i32) {
    %c0_i32 = arith.constant 0 : i32
    %c0_i32_0 = arith.constant 0 : i32
    %c0_i32_1 = arith.constant 0 : i32
    return %c0_i32, %c0_i32_0 : i32, i32
  }
  func.func @transform_4(%arg0: i32) -> (i32, i32) {
    %c0_i32 = arith.constant 0 : i32
    %c0_i32_0 = arith.constant 0 : i32
    %c0_i32_1 = arith.constant 0 : i32
    return %c0_i32, %c0_i32_0 : i32, i32
  }
  func.func @transform_5(%arg0: i32) -> (i32, i32) {
    %c0_i32 = arith.constant 0 : i32
    %c0_i32_0 = arith.constant 0 : i32
    return %arg0, %c0_i32 : i32, i32
  }
}

module attributes {stable_mosaic.version = 11 : i64} {
  func.func @_conv_kernel(%arg0: i32, %arg1: memref<512x144xbf16, #tpu.memory_space<vmem>>, %arg2: memref<144x16xbf16, #tpu.memory_space<vmem>>, %arg3: memref<512x16xf32, #tpu.memory_space<vmem>>, %arg4: memref<512x16xf32, #tpu.memory_space<vmem>>) attributes {dimension_semantics = [#tpu.dimension_semantics<parallel>], iteration_bounds = array<i64: 1>, scalar_prefetch = 0 : i64, scratch_operands = 0 : i64, tpu.core_type = #tpu.core_type<tc>, window_params = [{transform_indices = @transform_0, window_bounds = array<i64: 512, 144>}, {pipeline_mode = #tpu.pipeline_mode<synchronous>, transform_indices = @transform_1, window_bounds = array<i64: 144, 16>}, {transform_indices = @transform_2, window_bounds = array<i64: 512, 16>}, {transform_indices = @transform_3, window_bounds = array<i64: 512, 16>}]} {
    %c0 = arith.constant 0 : index
    %c0_0 = arith.constant 0 : index
    %0 = vector.load %arg1[%c0, %c0_0] : memref<512x144xbf16, #tpu.memory_space<vmem>>, vector<512x144xbf16>
    %c0_1 = arith.constant 0 : index
    %c0_2 = arith.constant 0 : index
    %1 = vector.load %arg2[%c0_1, %c0_2] : memref<144x16xbf16, #tpu.memory_space<vmem>>, vector<144x16xbf16>
    %cst = arith.constant dense<0.000000e+00> : vector<512x16xf32>
    %2 = tpu.matmul %0, %1, %cst {dimension_numbers = #tpu.dot_dimension_numbers<[1], [0], [0], [1], [0, 0, 1, 1], [], []>} : vector<512x144xbf16>, vector<144x16xbf16>, vector<512x16xf32> -> vector<512x16xf32>
    %c0_3 = arith.constant 0 : index
    %c0_4 = arith.constant 0 : index
    %3 = vector.load %arg3[%c0_3, %c0_4] : memref<512x16xf32, #tpu.memory_space<vmem>>, vector<512x16xf32>
    %4 = arith.addf %2, %3 : vector<512x16xf32>
    %c0_5 = arith.constant 0 : index
    %c0_6 = arith.constant 0 : index
    %5 = vector.load %arg4[%c0_5, %c0_6] : memref<512x16xf32, #tpu.memory_space<vmem>>, vector<512x16xf32>
    tpu.vector_store %arg4[%c0_5, %c0_6], %4 {strides = array<i32>} : memref<512x16xf32, #tpu.memory_space<vmem>>, vector<512x16xf32>,
    return
  }
  func.func @transform_0(%arg0: i32) -> (i32, i32) {
    %c0_i32 = arith.constant 0 : i32
    %c0_i32_0 = arith.constant 0 : i32
    return %arg0, %c0_i32 : i32, i32
  }
  func.func @transform_1(%arg0: i32) -> (i32, i32) {
    %c0_i32 = arith.constant 0 : i32
    %c0_i32_0 = arith.constant 0 : i32
    %c0_i32_1 = arith.constant 0 : i32
    return %c0_i32, %c0_i32_0 : i32, i32
  }
  func.func @transform_2(%arg0: i32) -> (i32, i32) {
    %c0_i32 = arith.constant 0 : i32
    %c0_i32_0 = arith.constant 0 : i32
    return %arg0, %c0_i32 : i32, i32
  }
  func.func @transform_3(%arg0: i32) -> (i32, i32) {
    %c0_i32 = arith.constant 0 : i32
    %c0_i32_0 = arith.constant 0 : i32
    return %arg0, %c0_i32 : i32, i32
  }
}

module attributes {stable_mosaic.version = 11 : i64} {
  func.func @_conv_kernel(%arg0: i32, %arg1: memref<128x16xbf16, #tpu.memory_space<vmem>>, %arg2: memref<16x32xbf16, #tpu.memory_space<vmem>>, %arg3: memref<128x32xf32, #tpu.memory_space<vmem>>) attributes {dimension_semantics = [#tpu.dimension_semantics<parallel>], iteration_bounds = array<i64: 1>, scalar_prefetch = 0 : i64, scratch_operands = 0 : i64, tpu.core_type = #tpu.core_type<tc>, window_params = [{transform_indices = @transform_0, window_bounds = array<i64: 128, 16>}, {pipeline_mode = #tpu.pipeline_mode<synchronous>, transform_indices = @transform_1, window_bounds = array<i64: 16, 32>}, {transform_indices = @transform_2, window_bounds = array<i64: 128, 32>}]} {
    %c0 = arith.constant 0 : index
    %c0_0 = arith.constant 0 : index
    %0 = vector.load %arg1[%c0, %c0_0] : memref<128x16xbf16, #tpu.memory_space<vmem>>, vector<128x16xbf16>
    %c0_1 = arith.constant 0 : index
    %c0_2 = arith.constant 0 : index
    %1 = vector.load %arg2[%c0_1, %c0_2] : memref<16x32xbf16, #tpu.memory_space<vmem>>, vector<16x32xbf16>
    %cst = arith.constant dense<0.000000e+00> : vector<128x32xf32>
    %2 = tpu.matmul %0, %1, %cst {dimension_numbers = #tpu.dot_dimension_numbers<[1], [0], [0], [1], [0, 0, 1, 1], [], []>} : vector<128x16xbf16>, vector<16x32xbf16>, vector<128x32xf32> -> vector<128x32xf32>
    %c0_3 = arith.constant 0 : index
    %c0_4 = arith.constant 0 : index
    %3 = vector.load %arg3[%c0_3, %c0_4] : memref<128x32xf32, #tpu.memory_space<vmem>>, vector<128x32xf32>
    tpu.vector_store %arg3[%c0_3, %c0_4], %2 {strides = array<i32>} : memref<128x32xf32, #tpu.memory_space<vmem>>, vector<128x32xf32>,
    return
  }
  func.func @transform_0(%arg0: i32) -> (i32, i32) {
    %c0_i32 = arith.constant 0 : i32
    %c0_i32_0 = arith.constant 0 : i32
    return %arg0, %c0_i32 : i32, i32
  }
  func.func @transform_1(%arg0: i32) -> (i32, i32) {
    %c0_i32 = arith.constant 0 : i32
    %c0_i32_0 = arith.constant 0 : i32
    %c0_i32_1 = arith.constant 0 : i32
    return %c0_i32, %c0_i32_0 : i32, i32
  }
  func.func @transform_2(%arg0: i32) -> (i32, i32) {
    %c0_i32 = arith.constant 0 : i32
    %c0_i32_0 = arith.constant 0 : i32
    return %arg0, %c0_i32 : i32, i32
  }
}

module attributes {stable_mosaic.version = 11 : i64} {
  func.func @_conv_kernel(%arg0: i32, %arg1: memref<128x144xbf16, #tpu.memory_space<vmem>>, %arg2: memref<144x32xbf16, #tpu.memory_space<vmem>>, %arg3: memref<1x32xf32, #tpu.memory_space<vmem>>, %arg4: memref<1x32xf32, #tpu.memory_space<vmem>>, %arg5: memref<1x32xf32, #tpu.memory_space<vmem>>, %arg6: memref<128x32xf32, #tpu.memory_space<vmem>>) attributes {dimension_semantics = [#tpu.dimension_semantics<parallel>], iteration_bounds = array<i64: 1>, scalar_prefetch = 0 : i64, scratch_operands = 0 : i64, tpu.core_type = #tpu.core_type<tc>, window_params = [{transform_indices = @transform_0, window_bounds = array<i64: 128, 144>}, {pipeline_mode = #tpu.pipeline_mode<synchronous>, transform_indices = @transform_1, window_bounds = array<i64: 144, 32>}, {pipeline_mode = #tpu.pipeline_mode<synchronous>, transform_indices = @transform_2, window_bounds = array<i64: 1, 32>}, {pipeline_mode = #tpu.pipeline_mode<synchronous>, transform_indices = @transform_3, window_bounds = array<i64: 1, 32>}, {pipeline_mode = #tpu.pipeline_mode<synchronous>, transform_indices = @transform_4, window_bounds = array<i64: 1, 32>}, {transform_indices = @transform_5, window_bounds = array<i64: 128, 32>}]} {
    %c0 = arith.constant 0 : index
    %c0_0 = arith.constant 0 : index
    %0 = vector.load %arg1[%c0, %c0_0] : memref<128x144xbf16, #tpu.memory_space<vmem>>, vector<128x144xbf16>
    %c0_1 = arith.constant 0 : index
    %c0_2 = arith.constant 0 : index
    %1 = vector.load %arg2[%c0_1, %c0_2] : memref<144x32xbf16, #tpu.memory_space<vmem>>, vector<144x32xbf16>
    %cst = arith.constant dense<0.000000e+00> : vector<128x32xf32>
    %2 = tpu.matmul %0, %1, %cst {dimension_numbers = #tpu.dot_dimension_numbers<[1], [0], [0], [1], [0, 0, 1, 1], [], []>} : vector<128x144xbf16>, vector<144x32xbf16>, vector<128x32xf32> -> vector<128x32xf32>
    %c0_3 = arith.constant 0 : index
    %c0_4 = arith.constant 0 : index
    %3 = vector.load %arg3[%c0_3, %c0_4] : memref<1x32xf32, #tpu.memory_space<vmem>>, vector<1x32xf32>
    %4 = vector.broadcast %3 : vector<1x32xf32> to vector<128x32xf32>
    %5 = arith.addf %2, %4 : vector<128x32xf32>
    %c0_5 = arith.constant 0 : index
    %c0_6 = arith.constant 0 : index
    %6 = vector.load %arg4[%c0_5, %c0_6] : memref<1x32xf32, #tpu.memory_space<vmem>>, vector<1x32xf32>
    %7 = vector.broadcast %6 : vector<1x32xf32> to vector<128x32xf32>
    %8 = arith.mulf %5, %7 : vector<128x32xf32>
    %c0_7 = arith.constant 0 : index
    %c0_8 = arith.constant 0 : index
    %9 = vector.load %arg5[%c0_7, %c0_8] : memref<1x32xf32, #tpu.memory_space<vmem>>, vector<1x32xf32>
    %10 = vector.broadcast %9 : vector<1x32xf32> to vector<128x32xf32>
    %11 = arith.addf %8, %10 : vector<128x32xf32>
    %cst_9 = arith.constant 0.000000e+00 : f32
    %12 = vector.broadcast %cst_9 : f32 to vector<128x32xf32>
    %13 = arith.maximumf %11, %12 : vector<128x32xf32>
    %c0_10 = arith.constant 0 : index
    %c0_11 = arith.constant 0 : index
    %14 = vector.load %arg6[%c0_10, %c0_11] : memref<128x32xf32, #tpu.memory_space<vmem>>, vector<128x32xf32>
    tpu.vector_store %arg6[%c0_10, %c0_11], %13 {strides = array<i32>} : memref<128x32xf32, #tpu.memory_space<vmem>>, vector<128x32xf32>,
    return
  }
  func.func @transform_0(%arg0: i32) -> (i32, i32) {
    %c0_i32 = arith.constant 0 : i32
    %c0_i32_0 = arith.constant 0 : i32
    return %arg0, %c0_i32 : i32, i32
  }
  func.func @transform_1(%arg0: i32) -> (i32, i32) {
    %c0_i32 = arith.constant 0 : i32
    %c0_i32_0 = arith.constant 0 : i32
    %c0_i32_1 = arith.constant 0 : i32
    return %c0_i32, %c0_i32_0 : i32, i32
  }
  func.func @transform_2(%arg0: i32) -> (i32, i32) {
    %c0_i32 = arith.constant 0 : i32
    %c0_i32_0 = arith.constant 0 : i32
    %c0_i32_1 = arith.constant 0 : i32
    return %c0_i32, %c0_i32_0 : i32, i32
  }
  func.func @transform_3(%arg0: i32) -> (i32, i32) {
    %c0_i32 = arith.constant 0 : i32
    %c0_i32_0 = arith.constant 0 : i32
    %c0_i32_1 = arith.constant 0 : i32
    return %c0_i32, %c0_i32_0 : i32, i32
  }
  func.func @transform_4(%arg0: i32) -> (i32, i32) {
    %c0_i32 = arith.constant 0 : i32
    %c0_i32_0 = arith.constant 0 : i32
    %c0_i32_1 = arith.constant 0 : i32
    return %c0_i32, %c0_i32_0 : i32, i32
  }
  func.func @transform_5(%arg0: i32) -> (i32, i32) {
    %c0_i32 = arith.constant 0 : i32
    %c0_i32_0 = arith.constant 0 : i32
    return %arg0, %c0_i32 : i32, i32
  }
}

module attributes {stable_mosaic.version = 11 : i64} {
  func.func @_conv_kernel(%arg0: i32, %arg1: memref<128x288xbf16, #tpu.memory_space<vmem>>, %arg2: memref<288x32xbf16, #tpu.memory_space<vmem>>, %arg3: memref<128x32xf32, #tpu.memory_space<vmem>>, %arg4: memref<128x32xf32, #tpu.memory_space<vmem>>) attributes {dimension_semantics = [#tpu.dimension_semantics<parallel>], iteration_bounds = array<i64: 1>, scalar_prefetch = 0 : i64, scratch_operands = 0 : i64, tpu.core_type = #tpu.core_type<tc>, window_params = [{transform_indices = @transform_0, window_bounds = array<i64: 128, 288>}, {pipeline_mode = #tpu.pipeline_mode<synchronous>, transform_indices = @transform_1, window_bounds = array<i64: 288, 32>}, {transform_indices = @transform_2, window_bounds = array<i64: 128, 32>}, {transform_indices = @transform_3, window_bounds = array<i64: 128, 32>}]} {
    %c0 = arith.constant 0 : index
    %c0_0 = arith.constant 0 : index
    %0 = vector.load %arg1[%c0, %c0_0] : memref<128x288xbf16, #tpu.memory_space<vmem>>, vector<128x288xbf16>
    %c0_1 = arith.constant 0 : index
    %c0_2 = arith.constant 0 : index
    %1 = vector.load %arg2[%c0_1, %c0_2] : memref<288x32xbf16, #tpu.memory_space<vmem>>, vector<288x32xbf16>
    %cst = arith.constant dense<0.000000e+00> : vector<128x32xf32>
    %2 = tpu.matmul %0, %1, %cst {dimension_numbers = #tpu.dot_dimension_numbers<[1], [0], [0], [1], [0, 0, 1, 1], [], []>} : vector<128x288xbf16>, vector<288x32xbf16>, vector<128x32xf32> -> vector<128x32xf32>
    %c0_3 = arith.constant 0 : index
    %c0_4 = arith.constant 0 : index
    %3 = vector.load %arg3[%c0_3, %c0_4] : memref<128x32xf32, #tpu.memory_space<vmem>>, vector<128x32xf32>
    %4 = arith.addf %2, %3 : vector<128x32xf32>
    %c0_5 = arith.constant 0 : index
    %c0_6 = arith.constant 0 : index
    %5 = vector.load %arg4[%c0_5, %c0_6] : memref<128x32xf32, #tpu.memory_space<vmem>>, vector<128x32xf32>
    tpu.vector_store %arg4[%c0_5, %c0_6], %4 {strides = array<i32>} : memref<128x32xf32, #tpu.memory_space<vmem>>, vector<128x32xf32>,
    return
  }
  func.func @transform_0(%arg0: i32) -> (i32, i32) {
    %c0_i32 = arith.constant 0 : i32
    %c0_i32_0 = arith.constant 0 : i32
    return %arg0, %c0_i32 : i32, i32
  }
  func.func @transform_1(%arg0: i32) -> (i32, i32) {
    %c0_i32 = arith.constant 0 : i32
    %c0_i32_0 = arith.constant 0 : i32
    %c0_i32_1 = arith.constant 0 : i32
    return %c0_i32, %c0_i32_0 : i32, i32
  }
  func.func @transform_2(%arg0: i32) -> (i32, i32) {
    %c0_i32 = arith.constant 0 : i32
    %c0_i32_0 = arith.constant 0 : i32
    return %arg0, %c0_i32 : i32, i32
  }
  func.func @transform_3(%arg0: i32) -> (i32, i32) {
    %c0_i32 = arith.constant 0 : i32
    %c0_i32_0 = arith.constant 0 : i32
    return %arg0, %c0_i32 : i32, i32
  }
}

module attributes {stable_mosaic.version = 11 : i64} {
  func.func @_bnrelu_kernel(%arg0: i32, %arg1: memref<128x32xf32, #tpu.memory_space<vmem>>, %arg2: memref<1x32xf32, #tpu.memory_space<vmem>>, %arg3: memref<1x32xf32, #tpu.memory_space<vmem>>, %arg4: memref<128x32xf32, #tpu.memory_space<vmem>>) attributes {dimension_semantics = [#tpu.dimension_semantics<parallel>], iteration_bounds = array<i64: 1>, scalar_prefetch = 0 : i64, scratch_operands = 0 : i64, tpu.core_type = #tpu.core_type<tc>, window_params = [{transform_indices = @transform_0, window_bounds = array<i64: 128, 32>}, {pipeline_mode = #tpu.pipeline_mode<synchronous>, transform_indices = @transform_1, window_bounds = array<i64: 1, 32>}, {pipeline_mode = #tpu.pipeline_mode<synchronous>, transform_indices = @transform_2, window_bounds = array<i64: 1, 32>}, {transform_indices = @transform_3, window_bounds = array<i64: 128, 32>}]} {
    %c0 = arith.constant 0 : index
    %c0_0 = arith.constant 0 : index
    %0 = vector.load %arg1[%c0, %c0_0] : memref<128x32xf32, #tpu.memory_space<vmem>>, vector<128x32xf32>
    %c0_1 = arith.constant 0 : index
    %c0_2 = arith.constant 0 : index
    %1 = vector.load %arg2[%c0_1, %c0_2] : memref<1x32xf32, #tpu.memory_space<vmem>>, vector<1x32xf32>
    %2 = vector.broadcast %1 : vector<1x32xf32> to vector<128x32xf32>
    %3 = arith.mulf %0, %2 : vector<128x32xf32>
    %c0_3 = arith.constant 0 : index
    %c0_4 = arith.constant 0 : index
    %4 = vector.load %arg3[%c0_3, %c0_4] : memref<1x32xf32, #tpu.memory_space<vmem>>, vector<1x32xf32>
    %5 = vector.broadcast %4 : vector<1x32xf32> to vector<128x32xf32>
    %6 = arith.addf %3, %5 : vector<128x32xf32>
    %cst = arith.constant 0.000000e+00 : f32
    %7 = vector.broadcast %cst : f32 to vector<128x32xf32>
    %8 = arith.maximumf %6, %7 : vector<128x32xf32>
    %c0_5 = arith.constant 0 : index
    %c0_6 = arith.constant 0 : index
    %9 = vector.load %arg4[%c0_5, %c0_6] : memref<128x32xf32, #tpu.memory_space<vmem>>, vector<128x32xf32>
    tpu.vector_store %arg4[%c0_5, %c0_6], %8 {strides = array<i32>} : memref<128x32xf32, #tpu.memory_space<vmem>>, vector<128x32xf32>,
    return
  }
  func.func @transform_0(%arg0: i32) -> (i32, i32) {
    %c0_i32 = arith.constant 0 : i32
    %c0_i32_0 = arith.constant 0 : i32
    return %arg0, %c0_i32 : i32, i32
  }
  func.func @transform_1(%arg0: i32) -> (i32, i32) {
    %c0_i32 = arith.constant 0 : i32
    %c0_i32_0 = arith.constant 0 : i32
    %c0_i32_1 = arith.constant 0 : i32
    return %c0_i32, %c0_i32_0 : i32, i32
  }
  func.func @transform_2(%arg0: i32) -> (i32, i32) {
    %c0_i32 = arith.constant 0 : i32
    %c0_i32_0 = arith.constant 0 : i32
    %c0_i32_1 = arith.constant 0 : i32
    return %c0_i32, %c0_i32_0 : i32, i32
  }
  func.func @transform_3(%arg0: i32) -> (i32, i32) {
    %c0_i32 = arith.constant 0 : i32
    %c0_i32_0 = arith.constant 0 : i32
    return %arg0, %c0_i32 : i32, i32
  }
}

module attributes {stable_mosaic.version = 11 : i64} {
  func.func @_conv_kernel(%arg0: i32, %arg1: memref<32x32xbf16, #tpu.memory_space<vmem>>, %arg2: memref<32x64xbf16, #tpu.memory_space<vmem>>, %arg3: memref<32x64xf32, #tpu.memory_space<vmem>>) attributes {dimension_semantics = [#tpu.dimension_semantics<parallel>], iteration_bounds = array<i64: 1>, scalar_prefetch = 0 : i64, scratch_operands = 0 : i64, tpu.core_type = #tpu.core_type<tc>, window_params = [{transform_indices = @transform_0, window_bounds = array<i64: 32, 32>}, {pipeline_mode = #tpu.pipeline_mode<synchronous>, transform_indices = @transform_1, window_bounds = array<i64: 32, 64>}, {transform_indices = @transform_2, window_bounds = array<i64: 32, 64>}]} {
    %c0 = arith.constant 0 : index
    %c0_0 = arith.constant 0 : index
    %0 = vector.load %arg1[%c0, %c0_0] : memref<32x32xbf16, #tpu.memory_space<vmem>>, vector<32x32xbf16>
    %c0_1 = arith.constant 0 : index
    %c0_2 = arith.constant 0 : index
    %1 = vector.load %arg2[%c0_1, %c0_2] : memref<32x64xbf16, #tpu.memory_space<vmem>>, vector<32x64xbf16>
    %cst = arith.constant dense<0.000000e+00> : vector<32x64xf32>
    %2 = tpu.matmul %0, %1, %cst {dimension_numbers = #tpu.dot_dimension_numbers<[1], [0], [0], [1], [0, 0, 1, 1], [], []>} : vector<32x32xbf16>, vector<32x64xbf16>, vector<32x64xf32> -> vector<32x64xf32>
    %c0_3 = arith.constant 0 : index
    %c0_4 = arith.constant 0 : index
    %3 = vector.load %arg3[%c0_3, %c0_4] : memref<32x64xf32, #tpu.memory_space<vmem>>, vector<32x64xf32>
    tpu.vector_store %arg3[%c0_3, %c0_4], %2 {strides = array<i32>} : memref<32x64xf32, #tpu.memory_space<vmem>>, vector<32x64xf32>,
    return
  }
  func.func @transform_0(%arg0: i32) -> (i32, i32) {
    %c0_i32 = arith.constant 0 : i32
    %c0_i32_0 = arith.constant 0 : i32
    return %arg0, %c0_i32 : i32, i32
  }
  func.func @transform_1(%arg0: i32) -> (i32, i32) {
    %c0_i32 = arith.constant 0 : i32
    %c0_i32_0 = arith.constant 0 : i32
    %c0_i32_1 = arith.constant 0 : i32
    return %c0_i32, %c0_i32_0 : i32, i32
  }
  func.func @transform_2(%arg0: i32) -> (i32, i32) {
    %c0_i32 = arith.constant 0 : i32
    %c0_i32_0 = arith.constant 0 : i32
    return %arg0, %c0_i32 : i32, i32
  }
}

module attributes {stable_mosaic.version = 11 : i64} {
  func.func @_conv_kernel(%arg0: i32, %arg1: memref<32x288xbf16, #tpu.memory_space<vmem>>, %arg2: memref<288x64xbf16, #tpu.memory_space<vmem>>, %arg3: memref<1x64xf32, #tpu.memory_space<vmem>>, %arg4: memref<1x64xf32, #tpu.memory_space<vmem>>, %arg5: memref<1x64xf32, #tpu.memory_space<vmem>>, %arg6: memref<32x64xf32, #tpu.memory_space<vmem>>) attributes {dimension_semantics = [#tpu.dimension_semantics<parallel>], iteration_bounds = array<i64: 1>, scalar_prefetch = 0 : i64, scratch_operands = 0 : i64, tpu.core_type = #tpu.core_type<tc>, window_params = [{transform_indices = @transform_0, window_bounds = array<i64: 32, 288>}, {pipeline_mode = #tpu.pipeline_mode<synchronous>, transform_indices = @transform_1, window_bounds = array<i64: 288, 64>}, {pipeline_mode = #tpu.pipeline_mode<synchronous>, transform_indices = @transform_2, window_bounds = array<i64: 1, 64>}, {pipeline_mode = #tpu.pipeline_mode<synchronous>, transform_indices = @transform_3, window_bounds = array<i64: 1, 64>}, {pipeline_mode = #tpu.pipeline_mode<synchronous>, transform_indices = @transform_4, window_bounds = array<i64: 1, 64>}, {transform_indices = @transform_5, window_bounds = array<i64: 32, 64>}]} {
    %c0 = arith.constant 0 : index
    %c0_0 = arith.constant 0 : index
    %0 = vector.load %arg1[%c0, %c0_0] : memref<32x288xbf16, #tpu.memory_space<vmem>>, vector<32x288xbf16>
    %c0_1 = arith.constant 0 : index
    %c0_2 = arith.constant 0 : index
    %1 = vector.load %arg2[%c0_1, %c0_2] : memref<288x64xbf16, #tpu.memory_space<vmem>>, vector<288x64xbf16>
    %cst = arith.constant dense<0.000000e+00> : vector<32x64xf32>
    %2 = tpu.matmul %0, %1, %cst {dimension_numbers = #tpu.dot_dimension_numbers<[1], [0], [0], [1], [0, 0, 1, 1], [], []>} : vector<32x288xbf16>, vector<288x64xbf16>, vector<32x64xf32> -> vector<32x64xf32>
    %c0_3 = arith.constant 0 : index
    %c0_4 = arith.constant 0 : index
    %3 = vector.load %arg3[%c0_3, %c0_4] : memref<1x64xf32, #tpu.memory_space<vmem>>, vector<1x64xf32>
    %4 = vector.broadcast %3 : vector<1x64xf32> to vector<32x64xf32>
    %5 = arith.addf %2, %4 : vector<32x64xf32>
    %c0_5 = arith.constant 0 : index
    %c0_6 = arith.constant 0 : index
    %6 = vector.load %arg4[%c0_5, %c0_6] : memref<1x64xf32, #tpu.memory_space<vmem>>, vector<1x64xf32>
    %7 = vector.broadcast %6 : vector<1x64xf32> to vector<32x64xf32>
    %8 = arith.mulf %5, %7 : vector<32x64xf32>
    %c0_7 = arith.constant 0 : index
    %c0_8 = arith.constant 0 : index
    %9 = vector.load %arg5[%c0_7, %c0_8] : memref<1x64xf32, #tpu.memory_space<vmem>>, vector<1x64xf32>
    %10 = vector.broadcast %9 : vector<1x64xf32> to vector<32x64xf32>
    %11 = arith.addf %8, %10 : vector<32x64xf32>
    %cst_9 = arith.constant 0.000000e+00 : f32
    %12 = vector.broadcast %cst_9 : f32 to vector<32x64xf32>
    %13 = arith.maximumf %11, %12 : vector<32x64xf32>
    %c0_10 = arith.constant 0 : index
    %c0_11 = arith.constant 0 : index
    %14 = vector.load %arg6[%c0_10, %c0_11] : memref<32x64xf32, #tpu.memory_space<vmem>>, vector<32x64xf32>
    tpu.vector_store %arg6[%c0_10, %c0_11], %13 {strides = array<i32>} : memref<32x64xf32, #tpu.memory_space<vmem>>, vector<32x64xf32>,
    return
  }
  func.func @transform_0(%arg0: i32) -> (i32, i32) {
    %c0_i32 = arith.constant 0 : i32
    %c0_i32_0 = arith.constant 0 : i32
    return %arg0, %c0_i32 : i32, i32
  }
  func.func @transform_1(%arg0: i32) -> (i32, i32) {
    %c0_i32 = arith.constant 0 : i32
    %c0_i32_0 = arith.constant 0 : i32
    %c0_i32_1 = arith.constant 0 : i32
    return %c0_i32, %c0_i32_0 : i32, i32
  }
  func.func @transform_2(%arg0: i32) -> (i32, i32) {
    %c0_i32 = arith.constant 0 : i32
    %c0_i32_0 = arith.constant 0 : i32
    %c0_i32_1 = arith.constant 0 : i32
    return %c0_i32, %c0_i32_0 : i32, i32
  }
  func.func @transform_3(%arg0: i32) -> (i32, i32) {
    %c0_i32 = arith.constant 0 : i32
    %c0_i32_0 = arith.constant 0 : i32
    %c0_i32_1 = arith.constant 0 : i32
    return %c0_i32, %c0_i32_0 : i32, i32
  }
  func.func @transform_4(%arg0: i32) -> (i32, i32) {
    %c0_i32 = arith.constant 0 : i32
    %c0_i32_0 = arith.constant 0 : i32
    %c0_i32_1 = arith.constant 0 : i32
    return %c0_i32, %c0_i32_0 : i32, i32
  }
  func.func @transform_5(%arg0: i32) -> (i32, i32) {
    %c0_i32 = arith.constant 0 : i32
    %c0_i32_0 = arith.constant 0 : i32
    return %arg0, %c0_i32 : i32, i32
  }
}

module attributes {stable_mosaic.version = 11 : i64} {
  func.func @_conv_kernel(%arg0: i32, %arg1: memref<32x576xbf16, #tpu.memory_space<vmem>>, %arg2: memref<576x64xbf16, #tpu.memory_space<vmem>>, %arg3: memref<32x64xf32, #tpu.memory_space<vmem>>, %arg4: memref<32x64xf32, #tpu.memory_space<vmem>>) attributes {dimension_semantics = [#tpu.dimension_semantics<parallel>], iteration_bounds = array<i64: 1>, scalar_prefetch = 0 : i64, scratch_operands = 0 : i64, tpu.core_type = #tpu.core_type<tc>, window_params = [{transform_indices = @transform_0, window_bounds = array<i64: 32, 576>}, {pipeline_mode = #tpu.pipeline_mode<synchronous>, transform_indices = @transform_1, window_bounds = array<i64: 576, 64>}, {transform_indices = @transform_2, window_bounds = array<i64: 32, 64>}, {transform_indices = @transform_3, window_bounds = array<i64: 32, 64>}]} {
    %c0 = arith.constant 0 : index
    %c0_0 = arith.constant 0 : index
    %0 = vector.load %arg1[%c0, %c0_0] : memref<32x576xbf16, #tpu.memory_space<vmem>>, vector<32x576xbf16>
    %c0_1 = arith.constant 0 : index
    %c0_2 = arith.constant 0 : index
    %1 = vector.load %arg2[%c0_1, %c0_2] : memref<576x64xbf16, #tpu.memory_space<vmem>>, vector<576x64xbf16>
    %cst = arith.constant dense<0.000000e+00> : vector<32x64xf32>
    %2 = tpu.matmul %0, %1, %cst {dimension_numbers = #tpu.dot_dimension_numbers<[1], [0], [0], [1], [0, 0, 1, 1], [], []>} : vector<32x576xbf16>, vector<576x64xbf16>, vector<32x64xf32> -> vector<32x64xf32>
    %c0_3 = arith.constant 0 : index
    %c0_4 = arith.constant 0 : index
    %3 = vector.load %arg3[%c0_3, %c0_4] : memref<32x64xf32, #tpu.memory_space<vmem>>, vector<32x64xf32>
    %4 = arith.addf %2, %3 : vector<32x64xf32>
    %c0_5 = arith.constant 0 : index
    %c0_6 = arith.constant 0 : index
    %5 = vector.load %arg4[%c0_5, %c0_6] : memref<32x64xf32, #tpu.memory_space<vmem>>, vector<32x64xf32>
    tpu.vector_store %arg4[%c0_5, %c0_6], %4 {strides = array<i32>} : memref<32x64xf32, #tpu.memory_space<vmem>>, vector<32x64xf32>,
    return
  }
  func.func @transform_0(%arg0: i32) -> (i32, i32) {
    %c0_i32 = arith.constant 0 : i32
    %c0_i32_0 = arith.constant 0 : i32
    return %arg0, %c0_i32 : i32, i32
  }
  func.func @transform_1(%arg0: i32) -> (i32, i32) {
    %c0_i32 = arith.constant 0 : i32
    %c0_i32_0 = arith.constant 0 : i32
    %c0_i32_1 = arith.constant 0 : i32
    return %c0_i32, %c0_i32_0 : i32, i32
  }
  func.func @transform_2(%arg0: i32) -> (i32, i32) {
    %c0_i32 = arith.constant 0 : i32
    %c0_i32_0 = arith.constant 0 : i32
    return %arg0, %c0_i32 : i32, i32
  }
  func.func @transform_3(%arg0: i32) -> (i32, i32) {
    %c0_i32 = arith.constant 0 : i32
    %c0_i32_0 = arith.constant 0 : i32
    return %arg0, %c0_i32 : i32, i32
  }
}

module attributes {stable_mosaic.version = 11 : i64} {
  func.func @_head_kernel(%arg0: memref<2x16x64xf32, #tpu.memory_space<vmem>>, %arg1: memref<1x1x64xf32, #tpu.memory_space<vmem>>, %arg2: memref<1x1x64xf32, #tpu.memory_space<vmem>>, %arg3: memref<64x10xf32, #tpu.memory_space<vmem>>, %arg4: memref<1x10xf32, #tpu.memory_space<vmem>>, %arg5: memref<2x10xf32, #tpu.memory_space<vmem>>) attributes {dimension_semantics = [], scalar_prefetch = 0 : i64, scratch_operands = 0 : i64, tpu.core_type = #tpu.core_type<tc>} {
    %c0 = arith.constant 0 : index
    %c0_0 = arith.constant 0 : index
    %c0_1 = arith.constant 0 : index
    %0 = vector.load %arg0[%c0, %c0_0, %c0_1] : memref<2x16x64xf32, #tpu.memory_space<vmem>>, vector<2x16x64xf32>
    %c0_2 = arith.constant 0 : index
    %c0_3 = arith.constant 0 : index
    %c0_4 = arith.constant 0 : index
    %1 = vector.load %arg1[%c0_2, %c0_3, %c0_4] : memref<1x1x64xf32, #tpu.memory_space<vmem>>, vector<1x1x64xf32>
    %2 = vector.broadcast %1 : vector<1x1x64xf32> to vector<2x16x64xf32>
    %3 = arith.mulf %0, %2 : vector<2x16x64xf32>
    %c0_5 = arith.constant 0 : index
    %c0_6 = arith.constant 0 : index
    %c0_7 = arith.constant 0 : index
    %4 = vector.load %arg2[%c0_5, %c0_6, %c0_7] : memref<1x1x64xf32, #tpu.memory_space<vmem>>, vector<1x1x64xf32>
    %5 = vector.broadcast %4 : vector<1x1x64xf32> to vector<2x16x64xf32>
    %6 = arith.addf %3, %5 : vector<2x16x64xf32>
    %cst = arith.constant 0.000000e+00 : f32
    %7 = vector.broadcast %cst : f32 to vector<2x16x64xf32>
    %8 = arith.maximumf %6, %7 : vector<2x16x64xf32>
    %cst_8 = arith.constant dense<0.000000e+00> : vector<2x64xf32>
    %9 = vector.multi_reduction <add>, %8, %cst_8 [1] : vector<2x16x64xf32> to vector<2x64xf32>
    %cst_9 = arith.constant 6.250000e-02 : f32
    %10 = vector.broadcast %cst_9 : f32 to vector<2x64xf32>
    %11 = arith.mulf %9, %10 : vector<2x64xf32>
    %c0_10 = arith.constant 0 : index
    %c0_11 = arith.constant 0 : index
    %12 = vector.load %arg3[%c0_10, %c0_11] : memref<64x10xf32, #tpu.memory_space<vmem>>, vector<64x10xf32>
    %cst_12 = arith.constant dense<0.000000e+00> : vector<2x10xf32>
    %13 = tpu.matmul %11, %12, %cst_12 {dimension_numbers = #tpu.dot_dimension_numbers<[1], [0], [0], [1], [0, 0, 1, 1], [], []>} : vector<2x64xf32>, vector<64x10xf32>, vector<2x10xf32> -> vector<2x10xf32>
    %c0_13 = arith.constant 0 : index
    %c0_14 = arith.constant 0 : index
    %14 = vector.load %arg4[%c0_13, %c0_14] : memref<1x10xf32, #tpu.memory_space<vmem>>, vector<1x10xf32>
    %15 = vector.broadcast %14 : vector<1x10xf32> to vector<2x10xf32>
    %16 = arith.addf %13, %15 : vector<2x10xf32>
    %c0_15 = arith.constant 0 : index
    %c0_16 = arith.constant 0 : index
    %17 = vector.load %arg5[%c0_15, %c0_16] : memref<2x10xf32, #tpu.memory_space<vmem>>, vector<2x10xf32>
    tpu.vector_store %arg5[%c0_15, %c0_16], %16 {strides = array<i32>} : memref<2x10xf32, #tpu.memory_space<vmem>>, vector<2x10xf32>,
    return
  }
}

</mosaic_0001>

<llo_original>
// kernel: resnet_forward.14
$region0: #{resnet_forward.14}
  #allocation0 [shape = 'u32[]', space=smem, size = 0x4, offset = 0x4, fixed_abs, tag = 'smem constant byte address 0x4 - core index']
  #allocation1 [shape = 'u32[144,128]{1,0:T(1,128)}', space=vmem, size = 0x12000, scoped, tag = 'internal scratch']
  %s0 = inlined_call_operand.vmem [shape: f32[512,16], index: 0, kind: input, shape index: {}]
  %s1 = inlined_call_operand.vmem [shape: f32[1,16], index: 1, kind: input, shape index: {}]
  %s2 = inlined_call_operand.vmem [shape: f32[1,16], index: 2, kind: input, shape index: {}]
  %s3 = inlined_call_operand.vmem [shape: f32[512,16], index: 3, kind: output, shape index: {}]
  %s4 = sld [smem:[#allocation0]]
  $region22: #{resnet_forward.14} parent=0
    _
  %s6 = ssub.s32 1, %s4
  %s7 = scalar_select 0, %s6, %s4
  // Predicated region
  $region2: #{resnet_forward.14} parent=0 // pred_check
    _
  $region3: #{resnet_forward.14} parent=0 // pred_check_branch
    %9 = sbr.rel (0) target = $region5
  $region4: #{resnet_forward.14} parent=0 // pred_region
    _
  $region5: #{resnet_forward.14} parent=0 // pred_fallthru
    _
  // Predicated region
  $region6: #{resnet_forward.14} parent=0 // pred_check
    _
  $region7: #{resnet_forward.14} parent=0 // pred_check_branch
    %11 = sbr.rel (0) target = $region9
  $region8: #{resnet_forward.14} parent=0 // pred_region
    _
  $region9: #{resnet_forward.14} parent=0 // pred_fallthru
    _
  // Predicated region
  $region10: #{resnet_forward.14} parent=0 // pred_check
    _
  $region11: #{resnet_forward.14} parent=0 // pred_check_branch
    %13 = sbr.rel (0) target = $region13
  $region12: #{resnet_forward.14} parent=0 // pred_region
    _
  $region13: #{resnet_forward.14} parent=0 // pred_fallthru
    _
  %v14 = vld [vmem:[%s0] sm:$0xff]
  %v15 = vld [vmem:[%s0 + $0x8] sm:$0xff]
  %v16 = vld [vmem:[%s0 + $0x10] sm:$0xff]
  %v17 = vld [vmem:[%s0 + $0x18] sm:$0xff]
  %v18 = vld [vmem:[%s0 + $0x20] sm:$0xff]
  %v19 = vld [vmem:[%s0 + $0x28] sm:$0xff]
  %v20 = vld [vmem:[%s0 + $0x30] sm:$0xff]
  %v21 = vld [vmem:[%s0 + $0x38] sm:$0xff]
  %v22 = vld [vmem:[%s0 + $0x40] sm:$0xff]
  %v23 = vld [vmem:[%s0 + $0x48] sm:$0xff]
  %v24 = vld [vmem:[%s0 + $0x50] sm:$0xff]
  %v25 = vld [vmem:[%s0 + $0x58] sm:$0xff]
  %v26 = vld [vmem:[%s0 + $0x60] sm:$0xff]
  %v27 = vld [vmem:[%s0 + $0x68] sm:$0xff]
  %v28 = vld [vmem:[%s0 + $0x70] sm:$0xff]
  %v29 = vld [vmem:[%s0 + $0x78] sm:$0xff]
  %v30 = vld [vmem:[%s0 + $0x80] sm:$0xff]
  %v31 = vld [vmem:[%s0 + $0x88] sm:$0xff]
  %v32 = vld [vmem:[%s0 + $0x90] sm:$0xff]
  %v33 = vld [vmem:[%s0 + $0x98] sm:$0xff]
  %v34 = vld [vmem:[%s0 + $0xa0] sm:$0xff]
  %v35 = vld [vmem:[%s0 + $0xa8] sm:$0xff]
  %v36 = vld [vmem:[%s0 + $0xb0] sm:$0xff]
  %v37 = vld [vmem:[%s0 + $0xb8] sm:$0xff]
  %v38 = vld [vmem:[%s0 + $0xc0] sm:$0xff]
  %v39 = vld [vmem:[%s0 + $0xc8] sm:$0xff]
  %v40 = vld [vmem:[%s0 + $0xd0] sm:$0xff]
  %v41 = vld [vmem:[%s0 + $0xd8] sm:$0xff]
  %v42 = vld [vmem:[%s0 + $0xe0] sm:$0xff]
  %v43 = vld [vmem:[%s0 + $0xe8] sm:$0xff]
  %v44 = vld [vmem:[%s0 + $0xf0] sm:$0xff]
  %v45 = vld [vmem:[%s0 + $0xf8] sm:$0xff]
  %v46 = vld [vmem:[%s0 + $0x100] sm:$0xff]
  %v47 = vld [vmem:[%s0 + $0x108] sm:$0xff]
  %v48 = vld [vmem:[%s0 + $0x110] sm:$0xff]
  %v49 = vld [vmem:[%s0 + $0x118] sm:$0xff]
  %v50 = vld [vmem:[%s0 + $0x120] sm:$0xff]
  %v51 = vld [vmem:[%s0 + $0x128] sm:$0xff]
  %v52 = vld [vmem:[%s0 + $0x130] sm:$0xff]
  %v53 = vld [vmem:[%s0 + $0x138] sm:$0xff]
  %v54 = vld [vmem:[%s0 + $0x140] sm:$0xff]
  %v55 = vld [vmem:[%s0 + $0x148] sm:$0xff]
  %v56 = vld [vmem:[%s0 + $0x150] sm:$0xff]
  %v57 = vld [vmem:[%s0 + $0x158] sm:$0xff]
  %v58 = vld [vmem:[%s0 + $0x160] sm:$0xff]
  %v59 = vld [vmem:[%s0 + $0x168] sm:$0xff]
  %v60 = vld [vmem:[%s0 + $0x170] sm:$0xff]
  %v61 = vld [vmem:[%s0 + $0x178] sm:$0xff]
  %v62 = vld [vmem:[%s0 + $0x180] sm:$0xff]
  %v63 = vld [vmem:[%s0 + $0x188] sm:$0xff]
  %v64 = vld [vmem:[%s0 + $0x190] sm:$0xff]
  %v65 = vld [vmem:[%s0 + $0x198] sm:$0xff]
  %v66 = vld [vmem:[%s0 + $0x1a0] sm:$0xff]
  %v67 = vld [vmem:[%s0 + $0x1a8] sm:$0xff]
  %v68 = vld [vmem:[%s0 + $0x1b0] sm:$0xff]
  %v69 = vld [vmem:[%s0 + $0x1b8] sm:$0xff]
  %v70 = vld [vmem:[%s0 + $0x1c0] sm:$0xff]
  %v71 = vld [vmem:[%s0 + $0x1c8] sm:$0xff]
  %v72 = vld [vmem:[%s0 + $0x1d0] sm:$0xff]
  %v73 = vld [vmem:[%s0 + $0x1d8] sm:$0xff]
  %v74 = vld [vmem:[%s0 + $0x1e0] sm:$0xff]
  %v75 = vld [vmem:[%s0 + $0x1e8] sm:$0xff]
  %v76 = vld [vmem:[%s0 + $0x1f0] sm:$0xff]
  %v77 = vld [vmem:[%s0 + $0x1f8] sm:$0xff]
  %v78 = vld [vmem:[%s1] sm:$0x1]
  %v80 = vlaneseq
  %v81 = vshrl.u32 %v80, 7
  %v82 = vsub.s32 0, %v81
  %v83 = vrot.slane %v78, %v82
  %v85 = vmul.f32 %v14, %v83
  %v86 = vmul.f32 %v15, %v83
  %v87 = vmul.f32 %v16, %v83
  %v88 = vmul.f32 %v17, %v83
  %v89 = vmul.f32 %v18, %v83
  %v90 = vmul.f32 %v19, %v83
  %v91 = vmul.f32 %v20, %v83
  %v92 = vmul.f32 %v21, %v83
  %v93 = vmul.f32 %v22, %v83
  %v94 = vmul.f32 %v23, %v83
  %v95 = vmul.f32 %v24, %v83
  %v96 = vmul.f32 %v25, %v83
  %v97 = vmul.f32 %v26, %v83
  %v98 = vmul.f32 %v27, %v83
  %v99 = vmul.f32 %v28, %v83
  %v100 = vmul.f32 %v29, %v83
  %v101 = vmul.f32 %v30, %v83
  %v102 = vmul.f32 %v31, %v83
  %v103 = vmul.f32 %v32, %v83
  %v104 = vmul.f32 %v33, %v83
  %v105 = vmul.f32 %v34, %v83
  %v106 = vmul.f32 %v35, %v83
  %v107 = vmul.f32 %v36, %v83
  %v108 = vmul.f32 %v37, %v83
  %v109 = vmul.f32 %v38, %v83
  %v110 = vmul.f32 %v39, %v83
  %v111 = vmul.f32 %v40, %v83
  %v112 = vmul.f32 %v41, %v83
  %v113 = vmul.f32 %v42, %v83
  %v114 = vmul.f32 %v43, %v83
  %v115 = vmul.f32 %v44, %v83
  %v116 = vmul.f32 %v45, %v83
  %v117 = vmul.f32 %v46, %v83
  %v118 = vmul.f32 %v47, %v83
  %v119 = vmul.f32 %v48, %v83
  %v120 = vmul.f32 %v49, %v83
  %v121 = vmul.f32 %v50, %v83
  %v122 = vmul.f32 %v51, %v83
  %v123 = vmul.f32 %v52, %v83
  %v124 = vmul.f32 %v53, %v83
  %v125 = vmul.f32 %v54, %v83
  %v126 = vmul.f32 %v55, %v83
  %v127 = vmul.f32 %v56, %v83
  %v128 = vmul.f32 %v57, %v83
  %v129 = vmul.f32 %v58, %v83
  %v130 = vmul.f32 %v59, %v83
  %v131 = vmul.f32 %v60, %v83
  %v132 = vmul.f32 %v61, %v83
  %v133 = vmul.f32 %v62, %v83
  %v134 = vmul.f32 %v63, %v83
  %v135 = vmul.f32 %v64, %v83
  %v136 = vmul.f32 %v65, %v83
  %v137 = vmul.f32 %v66, %v83
  %v138 = vmul.f32 %v67, %v83
  %v139 = vmul.f32 %v68, %v83
  %v140 = vmul.f32 %v69, %v83
  %v141 = vmul.f32 %v70, %v83
  %v142 = vmul.f32 %v71, %v83
  %v143 = vmul.f32 %v72, %v83
  %v144 = vmul.f32 %v73, %v83
  %v145 = vmul.f32 %v74, %v83
  %v146 = vmul.f32 %v75, %v83
  %v147 = vmul.f32 %v76, %v83
  %v148 = vmul.f32 %v77, %v83
  %v149 = vld [vmem:[%s2] sm:$0x1]
  %v151 = vlaneseq
  %v152 = vshrl.u32 %v151, 7
  %v153 = vsub.s32 0, %v152
  %v154 = vrot.slane %v149, %v153
  %v156 = vadd.f32 %v85, %v154
  %v157 = vadd.f32 %v86, %v154
  %v158 = vadd.f32 %v87, %v154
  %v159 = vadd.f32 %v88, %v154
  %v160 = vadd.f32 %v89, %v154
  %v161 = vadd.f32 %v90, %v154
  %v162 = vadd.f32 %v91, %v154
  %v163 = vadd.f32 %v92, %v154
  %v164 = vadd.f32 %v93, %v154
  %v165 = vadd.f32 %v94, %v154
  %v166 = vadd.f32 %v95, %v154
  %v167 = vadd.f32 %v96, %v154
  %v168 = vadd.f32 %v97, %v154
  %v169 = vadd.f32 %v98, %v154
  %v170 = vadd.f32 %v99, %v154
  %v171 = vadd.f32 %v100, %v154
  %v172 = vadd.f32 %v101, %v154
  %v173 = vadd.f32 %v102, %v154
  %v174 = vadd.f32 %v103, %v154
  %v175 = vadd.f32 %v104, %v154
  %v176 = vadd.f32 %v105, %v154
  %v177 = vadd.f32 %v106, %v154
  %v178 = vadd.f32 %v107, %v154
  %v179 = vadd.f32 %v108, %v154
  %v180 = vadd.f32 %v109, %v154
  %v181 = vadd.f32 %v110, %v154
  %v182 = vadd.f32 %v111, %v154
  %v183 = vadd.f32 %v112, %v154
  %v184 = vadd.f32 %v113, %v154
  %v185 = vadd.f32 %v114, %v154
  %v186 = vadd.f32 %v115, %v154
  %v187 = vadd.f32 %v116, %v154
  %v188 = vadd.f32 %v117, %v154
  %v189 = vadd.f32 %v118, %v154
  %v190 = vadd.f32 %v119, %v154
  %v191 = vadd.f32 %v120, %v154
  %v192 = vadd.f32 %v121, %v154
  %v193 = vadd.f32 %v122, %v154
  %v194 = vadd.f32 %v123, %v154
  %v195 = vadd.f32 %v124, %v154
  %v196 = vadd.f32 %v125, %v154
  %v197 = vadd.f32 %v126, %v154
  %v198 = vadd.f32 %v127, %v154
  %v199 = vadd.f32 %v128, %v154
  %v200 = vadd.f32 %v129, %v154
  %v201 = vadd.f32 %v130, %v154
  %v202 = vadd.f32 %v131, %v154
  %v203 = vadd.f32 %v132, %v154
  %v204 = vadd.f32 %v133, %v154
  %v205 = vadd.f32 %v134, %v154
  %v206 = vadd.f32 %v135, %v154
  %v207 = vadd.f32 %v136, %v154
  %v208 = vadd.f32 %v137, %v154
  %v209 = vadd.f32 %v138, %v154
  %v210 = vadd.f32 %v139, %v154
  %v211 = vadd.f32 %v140, %v154
  %v212 = vadd.f32 %v141, %v154
  %v213 = vadd.f32 %v142, %v154
  %v214 = vadd.f32 %v143, %v154
  %v215 = vadd.f32 %v144, %v154
  %v216 = vadd.f32 %v145, %v154
  %v217 = vadd.f32 %v146, %v154
  %v218 = vadd.f32 %v147, %v154
  %v219 = vadd.f32 %v148, %v154
  %v220 = vmax.f32 %v156, 0.0
  %v221 = vmax.f32 %v157, 0.0
  %v222 = vmax.f32 %v158, 0.0
  %v223 = vmax.f32 %v159, 0.0
  %v224 = vmax.f32 %v160, 0.0
  %v225 = vmax.f32 %v161, 0.0
  %v226 = vmax.f32 %v162, 0.0
  %v227 = vmax.f32 %v163, 0.0
  %v228 = vmax.f32 %v164, 0.0
  %v229 = vmax.f32 %v165, 0.0
  %v230 = vmax.f32 %v166, 0.0
  %v231 = vmax.f32 %v167, 0.0
  %v232 = vmax.f32 %v168, 0.0
  %v233 = vmax.f32 %v169, 0.0
  %v234 = vmax.f32 %v170, 0.0
  %v235 = vmax.f32 %v171, 0.0
  %v236 = vmax.f32 %v172, 0.0
  %v237 = vmax.f32 %v173, 0.0
  %v238 = vmax.f32 %v174, 0.0
  %v239 = vmax.f32 %v175, 0.0
  %v240 = vmax.f32 %v176, 0.0
  %v241 = vmax.f32 %v177, 0.0
  %v242 = vmax.f32 %v178, 0.0
  %v243 = vmax.f32 %v179, 0.0
  %v244 = vmax.f32 %v180, 0.0
  %v245 = vmax.f32 %v181, 0.0
  %v246 = vmax.f32 %v182, 0.0
  %v247 = vmax.f32 %v183, 0.0
  %v248 = vmax.f32 %v184, 0.0
  %v249 = vmax.f32 %v185, 0.0
  %v250 = vmax.f32 %v186, 0.0
  %v251 = vmax.f32 %v187, 0.0
  %v252 = vmax.f32 %v188, 0.0
  %v253 = vmax.f32 %v189, 0.0
  %v254 = vmax.f32 %v190, 0.0
  %v255 = vmax.f32 %v191, 0.0
  %v256 = vmax.f32 %v192, 0.0
  %v257 = vmax.f32 %v193, 0.0
  %v258 = vmax.f32 %v194, 0.0
  %v259 = vmax.f32 %v195, 0.0
  %v260 = vmax.f32 %v196, 0.0
  %v261 = vmax.f32 %v197, 0.0
  %v262 = vmax.f32 %v198, 0.0
  %v263 = vmax.f32 %v199, 0.0
  %v264 = vmax.f32 %v200, 0.0
  %v265 = vmax.f32 %v201, 0.0
  %v266 = vmax.f32 %v202, 0.0
  %v267 = vmax.f32 %v203, 0.0
  %v268 = vmax.f32 %v204, 0.0
  %v269 = vmax.f32 %v205, 0.0
  %v270 = vmax.f32 %v206, 0.0
  %v271 = vmax.f32 %v207, 0.0
  %v272 = vmax.f32 %v208, 0.0
  %v273 = vmax.f32 %v209, 0.0
  %v274 = vmax.f32 %v210, 0.0
  %v275 = vmax.f32 %v211, 0.0
  %v276 = vmax.f32 %v212, 0.0
  %v277 = vmax.f32 %v213, 0.0
  %v278 = vmax.f32 %v214, 0.0
  %v279 = vmax.f32 %v215, 0.0
  %v280 = vmax.f32 %v216, 0.0
  %v281 = vmax.f32 %v217, 0.0
  %v282 = vmax.f32 %v218, 0.0
  %v283 = vmax.f32 %v219, 0.0
  %vm284 = vcmask 130048
  %285 = vst.msk [vmem:[%s3] sm:$0xff] %vm284, %v220
  %286 = vst.msk [vmem:[%s3 + $0x8] sm:$0xff] %vm284, %v221
  %287 = vst.msk [vmem:[%s3 + $0x10] sm:$0xff] %vm284, %v222
  %288 = vst.msk [vmem:[%s3 + $0x18] sm:$0xff] %vm284, %v223
  %289 = vst.msk [vmem:[%s3 + $0x20] sm:$0xff] %vm284, %v224
  %290 = vst.msk [vmem:[%s3 + $0x28] sm:$0xff] %vm284, %v225
  %291 = vst.msk [vmem:[%s3 + $0x30] sm:$0xff] %vm284, %v226
  %292 = vst.msk [vmem:[%s3 + $0x38] sm:$0xff] %vm284, %v227
  %293 = vst.msk [vmem:[%s3 + $0x40] sm:$0xff] %vm284, %v228
  %294 = vst.msk [vmem:[%s3 + $0x48] sm:$0xff] %vm284, %v229
  %295 = vst.msk [vmem:[%s3 + $0x50] sm:$0xff] %vm284, %v230
  %296 = vst.msk [vmem:[%s3 + $0x58] sm:$0xff] %vm284, %v231
  %297 = vst.msk [vmem:[%s3 + $0x60] sm:$0xff] %vm284, %v232
  %298 = vst.msk [vmem:[%s3 + $0x68] sm:$0xff] %vm284, %v233
  %299 = vst.msk [vmem:[%s3 + $0x70] sm:$0xff] %vm284, %v234
  %300 = vst.msk [vmem:[%s3 + $0x78] sm:$0xff] %vm284, %v235
  %301 = vst.msk [vmem:[%s3 + $0x80] sm:$0xff] %vm284, %v236
  %302 = vst.msk [vmem:[%s3 + $0x88] sm:$0xff] %vm284, %v237
  %303 = vst.msk [vmem:[%s3 + $0x90] sm:$0xff] %vm284, %v238
  %304 = vst.msk [vmem:[%s3 + $0x98] sm:$0xff] %vm284, %v239
  %305 = vst.msk [vmem:[%s3 + $0xa0] sm:$0xff] %vm284, %v240
  %306 = vst.msk [vmem:[%s3 + $0xa8] sm:$0xff] %vm284, %v241
  %307 = vst.msk [vmem:[%s3 + $0xb0] sm:$0xff] %vm284, %v242
  %308 = vst.msk [vmem:[%s3 + $0xb8] sm:$0xff] %vm284, %v243
  %309 = vst.msk [vmem:[%s3 + $0xc0] sm:$0xff] %vm284, %v244
  %310 = vst.msk [vmem:[%s3 + $0xc8] sm:$0xff] %vm284, %v245
  %311 = vst.msk [vmem:[%s3 + $0xd0] sm:$0xff] %vm284, %v246
  %312 = vst.msk [vmem:[%s3 + $0xd8] sm:$0xff] %vm284, %v247
  %313 = vst.msk [vmem:[%s3 + $0xe0] sm:$0xff] %vm284, %v248
  %314 = vst.msk [vmem:[%s3 + $0xe8] sm:$0xff] %vm284, %v249
  %315 = vst.msk [vmem:[%s3 + $0xf0] sm:$0xff] %vm284, %v250
  %316 = vst.msk [vmem:[%s3 + $0xf8] sm:$0xff] %vm284, %v251
  %317 = vst.msk [vmem:[%s3 + $0x100] sm:$0xff] %vm284, %v252
  %318 = vst.msk [vmem:[%s3 + $0x108] sm:$0xff] %vm284, %v253
  %319 = vst.msk [vmem:[%s3 + $0x110] sm:$0xff] %vm284, %v254
  %320 = vst.msk [vmem:[%s3 + $0x118] sm:$0xff] %vm284, %v255
  %321 = vst.msk [vmem:[%s3 + $0x120] sm:$0xff] %vm284, %v256
  %322 = vst.msk [vmem:[%s3 + $0x128] sm:$0xff] %vm284, %v257
  %323 = vst.msk [vmem:[%s3 + $0x130] sm:$0xff] %vm284, %v258
  %324 = vst.msk [vmem:[%s3 + $0x138] sm:$0xff] %vm284, %v259
  %325 = vst.msk [vmem:[%s3 + $0x140] sm:$0xff] %vm284, %v260
  %326 = vst.msk [vmem:[%s3 + $0x148] sm:$0xff] %vm284, %v261
  %327 = vst.msk [vmem:[%s3 + $0x150] sm:$0xff] %vm284, %v262
  %328 = vst.msk [vmem:[%s3 + $0x158] sm:$0xff] %vm284, %v263
  %329 = vst.msk [vmem:[%s3 + $0x160] sm:$0xff] %vm284, %v264
  %330 = vst.msk [vmem:[%s3 + $0x168] sm:$0xff] %vm284, %v265
  %331 = vst.msk [vmem:[%s3 + $0x170] sm:$0xff] %vm284, %v266
  %332 = vst.msk [vmem:[%s3 + $0x178] sm:$0xff] %vm284, %v267
  %333 = vst.msk [vmem:[%s3 + $0x180] sm:$0xff] %vm284, %v268
  %334 = vst.msk [vmem:[%s3 + $0x188] sm:$0xff] %vm284, %v269
  %335 = vst.msk [vmem:[%s3 + $0x190] sm:$0xff] %vm284, %v270
  %336 = vst.msk [vmem:[%s3 + $0x198] sm:$0xff] %vm284, %v271
  %337 = vst.msk [vmem:[%s3 + $0x1a0] sm:$0xff] %vm284, %v272
  %338 = vst.msk [vmem:[%s3 + $0x1a8] sm:$0xff] %vm284, %v273
  %339 = vst.msk [vmem:[%s3 + $0x1b0] sm:$0xff] %vm284, %v274
  %340 = vst.msk [vmem:[%s3 + $0x1b8] sm:$0xff] %vm284, %v275
  %341 = vst.msk [vmem:[%s3 + $0x1c0] sm:$0xff] %vm284, %v276
  %342 = vst.msk [vmem:[%s3 + $0x1c8] sm:$0xff] %vm284, %v277
  %343 = vst.msk [vmem:[%s3 + $0x1d0] sm:$0xff] %vm284, %v278
  %344 = vst.msk [vmem:[%s3 + $0x1d8] sm:$0xff] %vm284, %v279
  %345 = vst.msk [vmem:[%s3 + $0x1e0] sm:$0xff] %vm284, %v280
  %346 = vst.msk [vmem:[%s3 + $0x1e8] sm:$0xff] %vm284, %v281
  %347 = vst.msk [vmem:[%s3 + $0x1f0] sm:$0xff] %vm284, %v282
  %348 = vst.msk [vmem:[%s3 + $0x1f8] sm:$0xff] %vm284, %v283
  // Predicated region
  $region14: #{resnet_forward.14} parent=0 // pred_check
    _
  $region15: #{resnet_forward.14} parent=0 // pred_check_branch
    %350 = sbr.rel (0) target = $region17
  $region16: #{resnet_forward.14} parent=0 // pred_region
    _
  $region17: #{resnet_forward.14} parent=0 // pred_fallthru
    _
  // Predicated region
  $region18: #{resnet_forward.14} parent=0 // pred_check
    _
  $region19: #{resnet_forward.14} parent=0 // pred_check_branch
    %352 = sbr.rel (0) target = $region21
  $region20: #{resnet_forward.14} parent=0 // pred_region
    _
  $region21: #{resnet_forward.14} parent=0 // pred_fallthru
    _

// kernel: resnet_forward.13
$region0: #{resnet_forward.13}
  #allocation0 [shape = 'u32[]', space=smem, size = 0x4, offset = 0x4, fixed_abs, tag = 'smem constant byte address 0x4 - core index']
  #allocation1 [shape = 'u32[144,128]{1,0:T(1,128)}', space=vmem, size = 0x12000, scoped, tag = 'internal scratch']
  %s0 = inlined_call_operand.vmem [shape: bf16[512,27], index: 0, kind: input, shape index: {}]
  %s1 = inlined_call_operand.vmem [shape: bf16[27,16], index: 1, kind: input, shape index: {}]
  %s2 = inlined_call_operand.vmem [shape: f32[1,16], index: 2, kind: input, shape index: {}]
  %s3 = inlined_call_operand.vmem [shape: f32[512,16], index: 3, kind: output, shape index: {}]
  %s4 = sld [smem:[#allocation0]]
  $region22: #{resnet_forward.13} parent=0
    _
  %s6 = ssub.s32 1, %s4
  %s7 = scalar_select 0, %s6, %s4
  // Predicated region
  $region2: #{resnet_forward.13} parent=0 // pred_check
    _
  $region3: #{resnet_forward.13} parent=0 // pred_check_branch
    %9 = sbr.rel (0) target = $region5
  $region4: #{resnet_forward.13} parent=0 // pred_region
    _
  $region5: #{resnet_forward.13} parent=0 // pred_fallthru
    _
  // Predicated region
  $region6: #{resnet_forward.13} parent=0 // pred_check
    _
  $region7: #{resnet_forward.13} parent=0 // pred_check_branch
    %11 = sbr.rel (0) target = $region9
  $region8: #{resnet_forward.13} parent=0 // pred_region
    _
  $region9: #{resnet_forward.13} parent=0 // pred_fallthru
    _
  // Predicated region
  $region10: #{resnet_forward.13} parent=0 // pred_check
    _
  $region11: #{resnet_forward.13} parent=0 // pred_check_branch
    %13 = sbr.rel (0) target = $region13
  $region12: #{resnet_forward.13} parent=0 // pred_region
    _
  $region13: #{resnet_forward.13} parent=0 // pred_fallthru
    _
  %v15 = vld [vmem:[%s0] sm:$0xf]
  %v16 = vld [vmem:[%s0 + $0x4] sm:$0xf]
  %v17 = vld [vmem:[%s0 + $0x8] sm:$0xf]
  %v18 = vld [vmem:[%s0 + $0xc] sm:$0xf]
  %v19 = vld [vmem:[%s0 + $0x10] sm:$0xf]
  %v20 = vld [vmem:[%s0 + $0x14] sm:$0xf]
  %v21 = vld [vmem:[%s0 + $0x18] sm:$0xf]
  %v22 = vld [vmem:[%s0 + $0x1c] sm:$0xf]
  %v23 = vld [vmem:[%s0 + $0x20] sm:$0xf]
  %v24 = vld [vmem:[%s0 + $0x24] sm:$0xf]
  %v25 = vld [vmem:[%s0 + $0x28] sm:$0xf]
  %v26 = vld [vmem:[%s0 + $0x2c] sm:$0xf]
  %v27 = vld [vmem:[%s0 + $0x30] sm:$0xf]
  %v28 = vld [vmem:[%s0 + $0x34] sm:$0xf]
  %v29 = vld [vmem:[%s0 + $0x38] sm:$0xf]
  %v30 = vld [vmem:[%s0 + $0x3c] sm:$0xf]
  %v31 = vld [vmem:[%s0 + $0x40] sm:$0xf]
  %v32 = vld [vmem:[%s0 + $0x44] sm:$0xf]
  %v33 = vld [vmem:[%s0 + $0x48] sm:$0xf]
  %v34 = vld [vmem:[%s0 + $0x4c] sm:$0xf]
  %v35 = vld [vmem:[%s0 + $0x50] sm:$0xf]
  %v36 = vld [vmem:[%s0 + $0x54] sm:$0xf]
  %v37 = vld [vmem:[%s0 + $0x58] sm:$0xf]
  %v38 = vld [vmem:[%s0 + $0x5c] sm:$0xf]
  %v39 = vld [vmem:[%s0 + $0x60] sm:$0xf]
  %v40 = vld [vmem:[%s0 + $0x64] sm:$0xf]
  %v41 = vld [vmem:[%s0 + $0x68] sm:$0xf]
  %v42 = vld [vmem:[%s0 + $0x6c] sm:$0xf]
  %v43 = vld [vmem:[%s0 + $0x70] sm:$0xf]
  %v44 = vld [vmem:[%s0 + $0x74] sm:$0xf]
  %v45 = vld [vmem:[%s0 + $0x78] sm:$0xf]
  %v46 = vld [vmem:[%s0 + $0x7c] sm:$0xf]
  %v47 = vld [vmem:[%s0 + $0x80] sm:$0xf]
  %v48 = vld [vmem:[%s0 + $0x84] sm:$0xf]
  %v49 = vld [vmem:[%s0 + $0x88] sm:$0xf]
  %v50 = vld [vmem:[%s0 + $0x8c] sm:$0xf]
  %v51 = vld [vmem:[%s0 + $0x90] sm:$0xf]
  %v52 = vld [vmem:[%s0 + $0x94] sm:$0xf]
  %v53 = vld [vmem:[%s0 + $0x98] sm:$0xf]
  %v54 = vld [vmem:[%s0 + $0x9c] sm:$0xf]
  %v55 = vld [vmem:[%s0 + $0xa0] sm:$0xf]
  %v56 = vld [vmem:[%s0 + $0xa4] sm:$0xf]
  %v57 = vld [vmem:[%s0 + $0xa8] sm:$0xf]
  %v58 = vld [vmem:[%s0 + $0xac] sm:$0xf]
  %v59 = vld [vmem:[%s0 + $0xb0] sm:$0xf]
  %v60 = vld [vmem:[%s0 + $0xb4] sm:$0xf]
  %v61 = vld [vmem:[%s0 + $0xb8] sm:$0xf]
  %v62 = vld [vmem:[%s0 + $0xbc] sm:$0xf]
  %v63 = vld [vmem:[%s0 + $0xc0] sm:$0xf]
  %v64 = vld [vmem:[%s0 + $0xc4] sm:$0xf]
  %v65 = vld [vmem:[%s0 + $0xc8] sm:$0xf]
  %v66 = vld [vmem:[%s0 + $0xcc] sm:$0xf]
  %v67 = vld [vmem:[%s0 + $0xd0] sm:$0xf]
  %v68 = vld [vmem:[%s0 + $0xd4] sm:$0xf]
  %v69 = vld [vmem:[%s0 + $0xd8] sm:$0xf]
  %v70 = vld [vmem:[%s0 + $0xdc] sm:$0xf]
  %v71 = vld [vmem:[%s0 + $0xe0] sm:$0xf]
  %v72 = vld [vmem:[%s0 + $0xe4] sm:$0xf]
  %v73 = vld [vmem:[%s0 + $0xe8] sm:$0xf]
  %v74 = vld [vmem:[%s0 + $0xec] sm:$0xf]
  %v75 = vld [vmem:[%s0 + $0xf0] sm:$0xf]
  %v76 = vld [vmem:[%s0 + $0xf4] sm:$0xf]
  %v77 = vld [vmem:[%s0 + $0xf8] sm:$0xf]
  %v78 = vld [vmem:[%s0 + $0xfc] sm:$0xf]
  %v79 = vld [vmem:[%s1] sm:$0xf]
  %v80 = vld [vmem:[%s1 + $0x4] sm:$0xf]
  %v81 = vld [vmem:[%s1 + $0x8] sm:$0xf]
  %v82 = vld [vmem:[%s1 + $0xc] sm:$0x3]
  %v83 = vld [vmem:[%s2] sm:$0x1]
  %v85 = vlaneseq
  %v86 = vshrl.u32 %v85, 7
  %v87 = vsub.s32 0, %v86
  %v88 = vrot.slane %v83, %v87
  %v154 = vunpack.c.l.b16 %v15
  %v155 = vunpack.c.l.b16 %v16
  %v156 = vunpack.c.l.b16 %v17
  %v157 = vunpack.c.l.b16 %v18
  %v158 = vunpack.c.l.b16 %v19
  %v159 = vunpack.c.l.b16 %v20
  %v160 = vunpack.c.l.b16 %v21
  %v161 = vunpack.c.l.b16 %v22
  %v162 = vunpack.c.l.b16 %v23
  %v163 = vunpack.c.l.b16 %v24
  %v164 = vunpack.c.l.b16 %v25
  %v165 = vunpack.c.l.b16 %v26
  %v166 = vunpack.c.l.b16 %v27
  %v167 = vunpack.c.l.b16 %v28
  %v168 = vunpack.c.l.b16 %v29
  %v169 = vunpack.c.l.b16 %v30
  %v170 = vunpack.c.l.b16 %v31
  %v171 = vunpack.c.l.b16 %v32
  %v172 = vunpack.c.l.b16 %v33
  %v173 = vunpack.c.l.b16 %v34
  %v174 = vunpack.c.l.b16 %v35
  %v175 = vunpack.c.l.b16 %v36
  %v176 = vunpack.c.l.b16 %v37
  %v177 = vunpack.c.l.b16 %v38
  %v178 = vunpack.c.l.b16 %v39
  %v179 = vunpack.c.l.b16 %v40
  %v180 = vunpack.c.l.b16 %v41
  %v181 = vunpack.c.l.b16 %v42
  %v182 = vunpack.c.l.b16 %v43
  %v183 = vunpack.c.l.b16 %v44
  %v184 = vunpack.c.l.b16 %v45
  %v185 = vunpack.c.l.b16 %v46
  %v186 = vunpack.c.l.b16 %v47
  %v187 = vunpack.c.l.b16 %v48
  %v188 = vunpack.c.l.b16 %v49
  %v189 = vunpack.c.l.b16 %v50
  %v190 = vunpack.c.l.b16 %v51
  %v191 = vunpack.c.l.b16 %v52
  %v192 = vunpack.c.l.b16 %v53
  %v193 = vunpack.c.l.b16 %v54
  %v194 = vunpack.c.l.b16 %v55
  %v195 = vunpack.c.l.b16 %v56
  %v196 = vunpack.c.l.b16 %v57
  %v197 = vunpack.c.l.b16 %v58
  %v198 = vunpack.c.l.b16 %v59
  %v199 = vunpack.c.l.b16 %v60
  %v200 = vunpack.c.l.b16 %v61
  %v201 = vunpack.c.l.b16 %v62
  %v202 = vunpack.c.l.b16 %v63
  %v203 = vunpack.c.l.b16 %v64
  %v204 = vunpack.c.l.b16 %v65
  %v205 = vunpack.c.l.b16 %v66
  %v206 = vunpack.c.l.b16 %v67
  %v207 = vunpack.c.l.b16 %v68
  %v208 = vunpack.c.l.b16 %v69
  %v209 = vunpack.c.l.b16 %v70
  %v210 = vunpack.c.l.b16 %v71
  %v211 = vunpack.c.l.b16 %v72
  %v212 = vunpack.c.l.b16 %v73
  %v213 = vunpack.c.l.b16 %v74
  %v214 = vunpack.c.l.b16 %v75
  %v215 = vunpack.c.l.b16 %v76
  %v216 = vunpack.c.l.b16 %v77
  %v217 = vunpack.c.l.b16 %v78
  %v218 = vpack.c.b16 %v155, %v154
  %v219 = vpack.c.b16 %v157, %v156
  %v220 = vpack.c.b16 %v159, %v158
  %v221 = vpack.c.b16 %v161, %v160
  %v222 = vpack.c.b16 %v163, %v162
  %v223 = vpack.c.b16 %v165, %v164
  %v224 = vpack.c.b16 %v167, %v166
  %v225 = vpack.c.b16 %v169, %v168
  %v226 = vpack.c.b16 %v171, %v170
  %v227 = vpack.c.b16 %v173, %v172
  %v228 = vpack.c.b16 %v175, %v174
  %v229 = vpack.c.b16 %v177, %v176
  %v230 = vpack.c.b16 %v179, %v178
  %v231 = vpack.c.b16 %v181, %v180
  %v232 = vpack.c.b16 %v183, %v182
  %v233 = vpack.c.b16 %v185, %v184
  %v234 = vpack.c.b16 %v187, %v186
  %v235 = vpack.c.b16 %v189, %v188
  %v236 = vpack.c.b16 %v191, %v190
  %v237 = vpack.c.b16 %v193, %v192
  %v238 = vpack.c.b16 %v195, %v194
  %v239 = vpack.c.b16 %v197, %v196
  %v240 = vpack.c.b16 %v199, %v198
  %v241 = vpack.c.b16 %v201, %v200
  %v242 = vpack.c.b16 %v203, %v202
  %v243 = vpack.c.b16 %v205, %v204
  %v244 = vpack.c.b16 %v207, %v206
  %v245 = vpack.c.b16 %v209, %v208
  %v246 = vpack.c.b16 %v211, %v210
  %v247 = vpack.c.b16 %v213, %v212
  %v248 = vpack.c.b16 %v215, %v214
  %v249 = vpack.c.b16 %v217, %v216
  %v254 = vunpack.c.l.b16 %v79
  %v255 = vunpack.c.l.b16 %v80
  %v256 = vunpack.c.l.b16 %v81
  %v257 = vunpack.c.l.b16 %v82
  %v258 = vpack.c.b16 %v255, %v254
  %v259 = vpack.c.b16 %v257, %v256
  %vm261 = vcmask 220160
  %v263 = vsel %vm261, %v218, 0
  %v266 = vsel %vm261, %v219, 0
  %v269 = vsel %vm261, %v220, 0
  %v272 = vsel %vm261, %v221, 0
  %v275 = vsel %vm261, %v222, 0
  %v278 = vsel %vm261, %v223, 0
  %v281 = vsel %vm261, %v224, 0
  %v284 = vsel %vm261, %v225, 0
  %v287 = vsel %vm261, %v226, 0
  %v290 = vsel %vm261, %v227, 0
  %v293 = vsel %vm261, %v228, 0
  %v296 = vsel %vm261, %v229, 0
  %v299 = vsel %vm261, %v230, 0
  %v302 = vsel %vm261, %v231, 0
  %v305 = vsel %vm261, %v232, 0
  %v308 = vsel %vm261, %v233, 0
  %v311 = vsel %vm261, %v234, 0
  %v314 = vsel %vm261, %v235, 0
  %v317 = vsel %vm261, %v236, 0
  %v320 = vsel %vm261, %v237, 0
  %v323 = vsel %vm261, %v238, 0
  %v326 = vsel %vm261, %v239, 0
  %v329 = vsel %vm261, %v240, 0
  %v332 = vsel %vm261, %v241, 0
  %v335 = vsel %vm261, %v242, 0
  %v338 = vsel %vm261, %v243, 0
  %v341 = vsel %vm261, %v244, 0
  %v344 = vsel %vm261, %v245, 0
  %v347 = vsel %vm261, %v246, 0
  %v350 = vsel %vm261, %v247, 0
  %v353 = vsel %vm261, %v248, 0
  %v356 = vsel %vm261, %v249, 0
  %vm358 = vcmask 1044480
  %vm359 = vcmask 1045504
  %v360 = vsel %vm358, 4294967295, 65535
  %v361 = vsel %vm359, %v360, 0
  %v363 = vand.u32 %v259, %v361
  %365 = vmatprep.subr.bf16.mxu0 0
  %366 = vmatpush1.bf16.msra.mxu0 0
  %367 = vmatprep.subr.bf16.mxu0 0
  %368 = vmatpush1.bf16.msra.mxu0 0
  %369 = vmatprep.subr.bf16.mxu0 0
  %370 = vmatpush1.bf16.msra.mxu0 0
  %371 = vmatprep.subr.bf16.mxu0 0
  %372 = vmatpush1.bf16.msra.mxu0 0
  %373 = vmatprep.subr.bf16.mxu0 0
  %374 = vmatpush1.bf16.msra.mxu0 0
  %375 = vmatprep.subr.bf16.mxu0 0
  %376 = vmatpush1.bf16.msra.mxu0 0
  %377 = vmatprep.subr.bf16.mxu0 0
  %378 = vmatpush1.bf16.msra.mxu0 %v363
  %379 = vmatprep.subr.bf16.mxu0 0
  %380 = vmatpush1.bf16.msra.mxu0 %v258
  %381 = vmatprep.subr.bf16.mxu0 0
  %382 = vmatpush2.bf16.msra.mxu0 0
  %383 = vmatprep.subr.bf16.mxu0 0
  %384 = vmatpush2.bf16.msra.mxu0 0
  %385 = vmatprep.subr.bf16.mxu0 0
  %386 = vmatpush2.bf16.msra.mxu0 0
  %387 = vmatprep.subr.bf16.mxu0 0
  %388 = vmatpush2.bf16.msra.mxu0 0
  %389 = vmatprep.subr.bf16.mxu0 0
  %390 = vmatpush2.bf16.msra.mxu0 0
  %391 = vmatprep.subr.bf16.mxu0 0
  %392 = vmatpush2.bf16.msra.mxu0 0
  %393 = vmatprep.subr.bf16.mxu0 0
  %394 = vmatpush2.bf16.msra.mxu0 0
  %395 = vmatprep.subr.bf16.mxu0 0
  %396 = vmatpush2.bf16.msra.mxu0 0
  %397 = vmatprep.mubr.bf16.mxu0 0
  %398 = vmatmul.mubr.bf16.gmra.mxu0 %v263
  %v399 = vpop.f32.mrf.mxu0
  %v400 = vadd.f32 %v88, %v399
  %v401 = vpop.f32.mrf.mxu0
  %v402 = vpop.f32.mrf.mxu0
  %v403 = vadd.f32 %v88, %v402
  %v404 = vpop.f32.mrf.mxu0
  %405 = vmatprep.mubr.bf16.mxu0 0
  %406 = vmatmul.mubr.bf16.gmra.mxu0 %v266
  %v407 = vpop.f32.mrf.mxu0
  %v408 = vadd.f32 %v88, %v407
  %v409 = vpop.f32.mrf.mxu0
  %v410 = vpop.f32.mrf.mxu0
  %v411 = vadd.f32 %v88, %v410
  %v412 = vpop.f32.mrf.mxu0
  %413 = vmatprep.mubr.bf16.mxu0 0
  %414 = vmatmul.mubr.bf16.gmra.mxu0 %v269
  %v415 = vpop.f32.mrf.mxu0
  %v416 = vadd.f32 %v88, %v415
  %v417 = vpop.f32.mrf.mxu0
  %v418 = vpop.f32.mrf.mxu0
  %v419 = vadd.f32 %v88, %v418
  %v420 = vpop.f32.mrf.mxu0
  %421 = vmatprep.mubr.bf16.mxu0 0
  %422 = vmatmul.mubr.bf16.gmra.mxu0 %v272
  %v423 = vpop.f32.mrf.mxu0
  %v424 = vadd.f32 %v88, %v423
  %v425 = vpop.f32.mrf.mxu0
  %v426 = vpop.f32.mrf.mxu0
  %v427 = vadd.f32 %v88, %v426
  %v428 = vpop.f32.mrf.mxu0
  %429 = vmatprep.mubr.bf16.mxu0 0
  %430 = vmatmul.mubr.bf16.gmra.mxu0 %v275
  %v431 = vpop.f32.mrf.mxu0
  %v432 = vadd.f32 %v88, %v431
  %v433 = vpop.f32.mrf.mxu0
  %v434 = vpop.f32.mrf.mxu0
  %v435 = vadd.f32 %v88, %v434
  %v436 = vpop.f32.mrf.mxu0
  %437 = vmatprep.mubr.bf16.mxu0 0
  %438 = vmatmul.mubr.bf16.gmra.mxu0 %v278
  %v439 = vpop.f32.mrf.mxu0
  %v440 = vadd.f32 %v88, %v439
  %v441 = vpop.f32.mrf.mxu0
  %v442 = vpop.f32.mrf.mxu0
  %v443 = vadd.f32 %v88, %v442
  %v444 = vpop.f32.mrf.mxu0
  %445 = vmatprep.mubr.bf16.mxu0 0
  %446 = vmatmul.mubr.bf16.gmra.mxu0 %v281
  %v447 = vpop.f32.mrf.mxu0
  %v448 = vadd.f32 %v88, %v447
  %v449 = vpop.f32.mrf.mxu0
  %v450 = vpop.f32.mrf.mxu0
  %v451 = vadd.f32 %v88, %v450
  %v452 = vpop.f32.mrf.mxu0
  %453 = vmatprep.mubr.bf16.mxu0 0
  %454 = vmatmul.mubr.bf16.gmra.mxu0 %v284
  %v455 = vpop.f32.mrf.mxu0
  %v456 = vadd.f32 %v88, %v455
  %v457 = vpop.f32.mrf.mxu0
  %v458 = vpop.f32.mrf.mxu0
  %v459 = vadd.f32 %v88, %v458
  %v460 = vpop.f32.mrf.mxu0
  %461 = vmatprep.mubr.bf16.mxu0 0
  %462 = vmatmul.mubr.bf16.gmra.mxu0 %v287
  %v463 = vpop.f32.mrf.mxu0
  %v464 = vadd.f32 %v88, %v463
  %v465 = vpop.f32.mrf.mxu0
  %v466 = vpop.f32.mrf.mxu0
  %v467 = vadd.f32 %v88, %v466
  %v468 = vpop.f32.mrf.mxu0
  %469 = vmatprep.mubr.bf16.mxu0 0
  %470 = vmatmul.mubr.bf16.gmra.mxu0 %v290
  %v471 = vpop.f32.mrf.mxu0
  %v472 = vadd.f32 %v88, %v471
  %v473 = vpop.f32.mrf.mxu0
  %v474 = vpop.f32.mrf.mxu0
  %v475 = vadd.f32 %v88, %v474
  %v476 = vpop.f32.mrf.mxu0
  %477 = vmatprep.mubr.bf16.mxu0 0
  %478 = vmatmul.mubr.bf16.gmra.mxu0 %v293
  %v479 = vpop.f32.mrf.mxu0
  %v480 = vadd.f32 %v88, %v479
  %v481 = vpop.f32.mrf.mxu0
  %v482 = vpop.f32.mrf.mxu0
  %v483 = vadd.f32 %v88, %v482
  %v484 = vpop.f32.mrf.mxu0
  %485 = vmatprep.mubr.bf16.mxu0 0
  %486 = vmatmul.mubr.bf16.gmra.mxu0 %v296
  %v487 = vpop.f32.mrf.mxu0
  %v488 = vadd.f32 %v88, %v487
  %v489 = vpop.f32.mrf.mxu0
  %v490 = vpop.f32.mrf.mxu0
  %v491 = vadd.f32 %v88, %v490
  %v492 = vpop.f32.mrf.mxu0
  %493 = vmatprep.mubr.bf16.mxu0 0
  %494 = vmatmul.mubr.bf16.gmra.mxu0 %v299
  %v495 = vpop.f32.mrf.mxu0
  %v496 = vadd.f32 %v88, %v495
  %v497 = vpop.f32.mrf.mxu0
  %v498 = vpop.f32.mrf.mxu0
  %v499 = vadd.f32 %v88, %v498
  %v500 = vpop.f32.mrf.mxu0
  %501 = vmatprep.mubr.bf16.mxu0 0
  %502 = vmatmul.mubr.bf16.gmra.mxu0 %v302
  %v503 = vpop.f32.mrf.mxu0
  %v504 = vadd.f32 %v88, %v503
  %v505 = vpop.f32.mrf.mxu0
  %v506 = vpop.f32.mrf.mxu0
  %v507 = vadd.f32 %v88, %v506
  %v508 = vpop.f32.mrf.mxu0
  %509 = vmatprep.mubr.bf16.mxu0 0
  %510 = vmatmul.mubr.bf16.gmra.mxu0 %v305
  %v511 = vpop.f32.mrf.mxu0
  %v512 = vadd.f32 %v88, %v511
  %v513 = vpop.f32.mrf.mxu0
  %v514 = vpop.f32.mrf.mxu0
  %v515 = vadd.f32 %v88, %v514
  %v516 = vpop.f32.mrf.mxu0
  %517 = vmatprep.mubr.bf16.mxu0 0
  %518 = vmatmul.mubr.bf16.gmra.mxu0 %v308
  %v519 = vpop.f32.mrf.mxu0
  %v520 = vadd.f32 %v88, %v519
  %v521 = vpop.f32.mrf.mxu0
  %v522 = vpop.f32.mrf.mxu0
  %v523 = vadd.f32 %v88, %v522
  %v524 = vpop.f32.mrf.mxu0
  %525 = vmatprep.mubr.bf16.mxu0 0
  %526 = vmatmul.mubr.bf16.gmra.mxu0 %v311
  %v527 = vpop.f32.mrf.mxu0
  %v528 = vadd.f32 %v88, %v527
  %v529 = vpop.f32.mrf.mxu0
  %v530 = vpop.f32.mrf.mxu0
  %v531 = vadd.f32 %v88, %v530
  %v532 = vpop.f32.mrf.mxu0
  %533 = vmatprep.mubr.bf16.mxu0 0
  %534 = vmatmul.mubr.bf16.gmra.mxu0 %v314
  %v535 = vpop.f32.mrf.mxu0
  %v536 = vadd.f32 %v88, %v535
  %v537 = vpop.f32.mrf.mxu0
  %v538 = vpop.f32.mrf.mxu0
  %v539 = vadd.f32 %v88, %v538
  %v540 = vpop.f32.mrf.mxu0
  %541 = vmatprep.mubr.bf16.mxu0 0
  %542 = vmatmul.mubr.bf16.gmra.mxu0 %v317
  %v543 = vpop.f32.mrf.mxu0
  %v544 = vadd.f32 %v88, %v543
  %v545 = vpop.f32.mrf.mxu0
  %v546 = vpop.f32.mrf.mxu0
  %v547 = vadd.f32 %v88, %v546
  %v548 = vpop.f32.mrf.mxu0
  %549 = vmatprep.mubr.bf16.mxu0 0
  %550 = vmatmul.mubr.bf16.gmra.mxu0 %v320
  %v551 = vpop.f32.mrf.mxu0
  %v552 = vadd.f32 %v88, %v551
  %v553 = vpop.f32.mrf.mxu0
  %v554 = vpop.f32.mrf.mxu0
  %v555 = vadd.f32 %v88, %v554
  %v556 = vpop.f32.mrf.mxu0
  %557 = vmatprep.mubr.bf16.mxu0 0
  %558 = vmatmul.mubr.bf16.gmra.mxu0 %v323
  %v559 = vpop.f32.mrf.mxu0
  %v560 = vadd.f32 %v88, %v559
  %v561 = vpop.f32.mrf.mxu0
  %v562 = vpop.f32.mrf.mxu0
  %v563 = vadd.f32 %v88, %v562
  %v564 = vpop.f32.mrf.mxu0
  %565 = vmatprep.mubr.bf16.mxu0 0
  %566 = vmatmul.mubr.bf16.gmra.mxu0 %v326
  %v567 = vpop.f32.mrf.mxu0
  %v568 = vadd.f32 %v88, %v567
  %v569 = vpop.f32.mrf.mxu0
  %v570 = vpop.f32.mrf.mxu0
  %v571 = vadd.f32 %v88, %v570
  %v572 = vpop.f32.mrf.mxu0
  %573 = vmatprep.mubr.bf16.mxu0 0
  %574 = vmatmul.mubr.bf16.gmra.mxu0 %v329
  %v575 = vpop.f32.mrf.mxu0
  %v576 = vadd.f32 %v88, %v575
  %v577 = vpop.f32.mrf.mxu0
  %v578 = vpop.f32.mrf.mxu0
  %v579 = vadd.f32 %v88, %v578
  %v580 = vpop.f32.mrf.mxu0
  %581 = vmatprep.mubr.bf16.mxu0 0
  %582 = vmatmul.mubr.bf16.gmra.mxu0 %v332
  %v583 = vpop.f32.mrf.mxu0
  %v584 = vadd.f32 %v88, %v583
  %v585 = vpop.f32.mrf.mxu0
  %v586 = vpop.f32.mrf.mxu0
  %v587 = vadd.f32 %v88, %v586
  %v588 = vpop.f32.mrf.mxu0
  %589 = vmatprep.mubr.bf16.mxu0 0
  %590 = vmatmul.mubr.bf16.gmra.mxu0 %v335
  %v591 = vpop.f32.mrf.mxu0
  %v592 = vadd.f32 %v88, %v591
  %v593 = vpop.f32.mrf.mxu0
  %v594 = vpop.f32.mrf.mxu0
  %v595 = vadd.f32 %v88, %v594
  %v596 = vpop.f32.mrf.mxu0
  %597 = vmatprep.mubr.bf16.mxu0 0
  %598 = vmatmul.mubr.bf16.gmra.mxu0 %v338
  %v599 = vpop.f32.mrf.mxu0
  %v600 = vadd.f32 %v88, %v599
  %v601 = vpop.f32.mrf.mxu0
  %v602 = vpop.f32.mrf.mxu0
  %v603 = vadd.f32 %v88, %v602
  %v604 = vpop.f32.mrf.mxu0
  %605 = vmatprep.mubr.bf16.mxu0 0
  %606 = vmatmul.mubr.bf16.gmra.mxu0 %v341
  %v607 = vpop.f32.mrf.mxu0
  %v608 = vadd.f32 %v88, %v607
  %v609 = vpop.f32.mrf.mxu0
  %v610 = vpop.f32.mrf.mxu0
  %v611 = vadd.f32 %v88, %v610
  %v612 = vpop.f32.mrf.mxu0
  %613 = vmatprep.mubr.bf16.mxu0 0
  %614 = vmatmul.mubr.bf16.gmra.mxu0 %v344
  %v615 = vpop.f32.mrf.mxu0
  %v616 = vadd.f32 %v88, %v615
  %v617 = vpop.f32.mrf.mxu0
  %v618 = vpop.f32.mrf.mxu0
  %v619 = vadd.f32 %v88, %v618
  %v620 = vpop.f32.mrf.mxu0
  %621 = vmatprep.mubr.bf16.mxu0 0
  %622 = vmatmul.mubr.bf16.gmra.mxu0 %v347
  %v623 = vpop.f32.mrf.mxu0
  %v624 = vadd.f32 %v88, %v623
  %v625 = vpop.f32.mrf.mxu0
  %v626 = vpop.f32.mrf.mxu0
  %v627 = vadd.f32 %v88, %v626
  %v628 = vpop.f32.mrf.mxu0
  %629 = vmatprep.mubr.bf16.mxu0 0
  %630 = vmatmul.mubr.bf16.gmra.mxu0 %v350
  %v631 = vpop.f32.mrf.mxu0
  %v632 = vadd.f32 %v88, %v631
  %v633 = vpop.f32.mrf.mxu0
  %v634 = vpop.f32.mrf.mxu0
  %v635 = vadd.f32 %v88, %v634
  %v636 = vpop.f32.mrf.mxu0
  %637 = vmatprep.mubr.bf16.mxu0 0
  %638 = vmatmul.mubr.bf16.gmra.mxu0 %v353
  %v639 = vpop.f32.mrf.mxu0
  %v640 = vadd.f32 %v88, %v639
  %v641 = vpop.f32.mrf.mxu0
  %v642 = vpop.f32.mrf.mxu0
  %v643 = vadd.f32 %v88, %v642
  %v644 = vpop.f32.mrf.mxu0
  %645 = vmatprep.mubr.bf16.mxu0 0
  %646 = vmatmul.mubr.bf16.gmra.mxu0 %v356
  %v647 = vpop.f32.mrf.mxu0
  %v648 = vadd.f32 %v88, %v647
  %v649 = vpop.f32.mrf.mxu0
  %v650 = vpop.f32.mrf.mxu0
  %v651 = vadd.f32 %v88, %v650
  %v652 = vpop.f32.mrf.mxu0
  %653 = vdwg.mxu0
  %vm654 = vcmask 130048
  %655 = vst.msk [vmem:[%s3] sm:$0xff] %vm654, %v400
  %656 = vst.msk [vmem:[%s3 + $0x8] sm:$0xff] %vm654, %v403
  %657 = vst.msk [vmem:[%s3 + $0x10] sm:$0xff] %vm654, %v408
  %658 = vst.msk [vmem:[%s3 + $0x18] sm:$0xff] %vm654, %v411
  %659 = vst.msk [vmem:[%s3 + $0x20] sm:$0xff] %vm654, %v416
  %660 = vst.msk [vmem:[%s3 + $0x28] sm:$0xff] %vm654, %v419
  %661 = vst.msk [vmem:[%s3 + $0x30] sm:$0xff] %vm654, %v424
  %662 = vst.msk [vmem:[%s3 + $0x38] sm:$0xff] %vm654, %v427
  %663 = vst.msk [vmem:[%s3 + $0x40] sm:$0xff] %vm654, %v432
  %664 = vst.msk [vmem:[%s3 + $0x48] sm:$0xff] %vm654, %v435
  %665 = vst.msk [vmem:[%s3 + $0x50] sm:$0xff] %vm654, %v440
  %666 = vst.msk [vmem:[%s3 + $0x58] sm:$0xff] %vm654, %v443
  %667 = vst.msk [vmem:[%s3 + $0x60] sm:$0xff] %vm654, %v448
  %668 = vst.msk [vmem:[%s3 + $0x68] sm:$0xff] %vm654, %v451
  %669 = vst.msk [vmem:[%s3 + $0x70] sm:$0xff] %vm654, %v456
  %670 = vst.msk [vmem:[%s3 + $0x78] sm:$0xff] %vm654, %v459
  %671 = vst.msk [vmem:[%s3 + $0x80] sm:$0xff] %vm654, %v464
  %672 = vst.msk [vmem:[%s3 + $0x88] sm:$0xff] %vm654, %v467
  %673 = vst.msk [vmem:[%s3 + $0x90] sm:$0xff] %vm654, %v472
  %674 = vst.msk [vmem:[%s3 + $0x98] sm:$0xff] %vm654, %v475
  %675 = vst.msk [vmem:[%s3 + $0xa0] sm:$0xff] %vm654, %v480
  %676 = vst.msk [vmem:[%s3 + $0xa8] sm:$0xff] %vm654, %v483
  %677 = vst.msk [vmem:[%s3 + $0xb0] sm:$0xff] %vm654, %v488
  %678 = vst.msk [vmem:[%s3 + $0xb8] sm:$0xff] %vm654, %v491
  %679 = vst.msk [vmem:[%s3 + $0xc0] sm:$0xff] %vm654, %v496
  %680 = vst.msk [vmem:[%s3 + $0xc8] sm:$0xff] %vm654, %v499
  %681 = vst.msk [vmem:[%s3 + $0xd0] sm:$0xff] %vm654, %v504
  %682 = vst.msk [vmem:[%s3 + $0xd8] sm:$0xff] %vm654, %v507
  %683 = vst.msk [vmem:[%s3 + $0xe0] sm:$0xff] %vm654, %v512
  %684 = vst.msk [vmem:[%s3 + $0xe8] sm:$0xff] %vm654, %v515
  %685 = vst.msk [vmem:[%s3 + $0xf0] sm:$0xff] %vm654, %v520
  %686 = vst.msk [vmem:[%s3 + $0xf8] sm:$0xff] %vm654, %v523
  %687 = vst.msk [vmem:[%s3 + $0x100] sm:$0xff] %vm654, %v528
  %688 = vst.msk [vmem:[%s3 + $0x108] sm:$0xff] %vm654, %v531
  %689 = vst.msk [vmem:[%s3 + $0x110] sm:$0xff] %vm654, %v536
  %690 = vst.msk [vmem:[%s3 + $0x118] sm:$0xff] %vm654, %v539
  %691 = vst.msk [vmem:[%s3 + $0x120] sm:$0xff] %vm654, %v544
  %692 = vst.msk [vmem:[%s3 + $0x128] sm:$0xff] %vm654, %v547
  %693 = vst.msk [vmem:[%s3 + $0x130] sm:$0xff] %vm654, %v552
  %694 = vst.msk [vmem:[%s3 + $0x138] sm:$0xff] %vm654, %v555
  %695 = vst.msk [vmem:[%s3 + $0x140] sm:$0xff] %vm654, %v560
  %696 = vst.msk [vmem:[%s3 + $0x148] sm:$0xff] %vm654, %v563
  %697 = vst.msk [vmem:[%s3 + $0x150] sm:$0xff] %vm654, %v568
  %698 = vst.msk [vmem:[%s3 + $0x158] sm:$0xff] %vm654, %v571
  %699 = vst.msk [vmem:[%s3 + $0x160] sm:$0xff] %vm654, %v576
  %700 = vst.msk [vmem:[%s3 + $0x168] sm:$0xff] %vm654, %v579
  %701 = vst.msk [vmem:[%s3 + $0x170] sm:$0xff] %vm654, %v584
  %702 = vst.msk [vmem:[%s3 + $0x178] sm:$0xff] %vm654, %v587
  %703 = vst.msk [vmem:[%s3 + $0x180] sm:$0xff] %vm654, %v592
  %704 = vst.msk [vmem:[%s3 + $0x188] sm:$0xff] %vm654, %v595
  %705 = vst.msk [vmem:[%s3 + $0x190] sm:$0xff] %vm654, %v600
  %706 = vst.msk [vmem:[%s3 + $0x198] sm:$0xff] %vm654, %v603
  %707 = vst.msk [vmem:[%s3 + $0x1a0] sm:$0xff] %vm654, %v608
  %708 = vst.msk [vmem:[%s3 + $0x1a8] sm:$0xff] %vm654, %v611
  %709 = vst.msk [vmem:[%s3 + $0x1b0] sm:$0xff] %vm654, %v616
  %710 = vst.msk [vmem:[%s3 + $0x1b8] sm:$0xff] %vm654, %v619
  %711 = vst.msk [vmem:[%s3 + $0x1c0] sm:$0xff] %vm654, %v624
  %712 = vst.msk [vmem:[%s3 + $0x1c8] sm:$0xff] %vm654, %v627
  %713 = vst.msk [vmem:[%s3 + $0x1d0] sm:$0xff] %vm654, %v632
  %714 = vst.msk [vmem:[%s3 + $0x1d8] sm:$0xff] %vm654, %v635
  %715 = vst.msk [vmem:[%s3 + $0x1e0] sm:$0xff] %vm654, %v640
  %716 = vst.msk [vmem:[%s3 + $0x1e8] sm:$0xff] %vm654, %v643
  %717 = vst.msk [vmem:[%s3 + $0x1f0] sm:$0xff] %vm654, %v648
  %718 = vst.msk [vmem:[%s3 + $0x1f8] sm:$0xff] %vm654, %v651
  // Predicated region
  $region14: #{resnet_forward.13} parent=0 // pred_check
    _
  $region15: #{resnet_forward.13} parent=0 // pred_check_branch
    %720 = sbr.rel (0) target = $region17
  $region16: #{resnet_forward.13} parent=0 // pred_region
    _
  $region17: #{resnet_forward.13} parent=0 // pred_fallthru
    _
  // Predicated region
  $region18: #{resnet_forward.13} parent=0 // pred_check
    _
  $region19: #{resnet_forward.13} parent=0 // pred_check_branch
    %722 = sbr.rel (0) target = $region21
  $region20: #{resnet_forward.13} parent=0 // pred_region
    _
  $region21: #{resnet_forward.13} parent=0 // pred_fallthru
    _

// kernel: resnet_forward.15
$region0: #{resnet_forward.15}
  #allocation0 [shape = 'u32[]', space=smem, size = 0x4, offset = 0x4, fixed_abs, tag = 'smem constant byte address 0x4 - core index']
  #allocation1 [shape = 'u32[144,128]{1,0:T(1,128)}', space=vmem, size = 0x12000, scoped, tag = 'internal scratch']
  %s0 = inlined_call_operand.vmem [shape: bf16[512,144], index: 0, kind: input, shape index: {}]
  %s1 = inlined_call_operand.vmem [shape: bf16[144,16], index: 1, kind: input, shape index: {}]
  %s2 = inlined_call_operand.vmem [shape: f32[1,16], index: 2, kind: input, shape index: {}]
  %s3 = inlined_call_operand.vmem [shape: f32[1,16], index: 3, kind: input, shape index: {}]
  %s4 = inlined_call_operand.vmem [shape: f32[1,16], index: 4, kind: input, shape index: {}]
  %s5 = inlined_call_operand.vmem [shape: f32[512,16], index: 5, kind: output, shape index: {}]
  %s6 = sld [smem:[#allocation0]]
  $region30: #{resnet_forward.15} parent=0
    _
  %s8 = ssub.s32 1, %s6
  %s9 = scalar_select 0, %s8, %s6
  // Predicated region
  $region2: #{resnet_forward.15} parent=0 // pred_check
    _
  $region3: #{resnet_forward.15} parent=0 // pred_check_branch
    %11 = sbr.rel (0) target = $region5
  $region4: #{resnet_forward.15} parent=0 // pred_region
    _
  $region5: #{resnet_forward.15} parent=0 // pred_fallthru
    _
  // Predicated region
  $region6: #{resnet_forward.15} parent=0 // pred_check
    _
  $region7: #{resnet_forward.15} parent=0 // pred_check_branch
    %13 = sbr.rel (0) target = $region9
  $region8: #{resnet_forward.15} parent=0 // pred_region
    _
  $region9: #{resnet_forward.15} parent=0 // pred_fallthru
    _
  // Predicated region
  $region10: #{resnet_forward.15} parent=0 // pred_check
    _
  $region11: #{resnet_forward.15} parent=0 // pred_check_branch
    %15 = sbr.rel (0) target = $region13
  $region12: #{resnet_forward.15} parent=0 // pred_region
    _
  $region13: #{resnet_forward.15} parent=0 // pred_fallthru
    _
  // Predicated region
  $region14: #{resnet_forward.15} parent=0 // pred_check
    _
  $region15: #{resnet_forward.15} parent=0 // pred_check_branch
    %17 = sbr.rel (0) target = $region17
  $region16: #{resnet_forward.15} parent=0 // pred_region
    _
  $region17: #{resnet_forward.15} parent=0 // pred_fallthru
    _
  // Predicated region
  $region18: #{resnet_forward.15} parent=0 // pred_check
    _
  $region19: #{resnet_forward.15} parent=0 // pred_check_branch
    %19 = sbr.rel (0) target = $region21
  $region20: #{resnet_forward.15} parent=0 // pred_region
    _
  $region21: #{resnet_forward.15} parent=0 // pred_fallthru
    _
  %v21 = vld [vmem:[%s0] sm:$0xff]
  %v22 = vld [vmem:[%s0 + $0x8] sm:$0xff]
  %v23 = vld [vmem:[%s0 + $0x10] sm:$0xff]
  %v24 = vld [vmem:[%s0 + $0x18] sm:$0xff]
  %v25 = vld [vmem:[%s0 + $0x20] sm:$0xff]
  %v26 = vld [vmem:[%s0 + $0x28] sm:$0xff]
  %v27 = vld [vmem:[%s0 + $0x30] sm:$0xff]
  %v28 = vld [vmem:[%s0 + $0x38] sm:$0xff]
  %v29 = vld [vmem:[%s0 + $0x40] sm:$0xff]
  %v30 = vld [vmem:[%s0 + $0x48] sm:$0xff]
  %v31 = vld [vmem:[%s0 + $0x50] sm:$0xff]
  %v32 = vld [vmem:[%s0 + $0x58] sm:$0xff]
  %v33 = vld [vmem:[%s0 + $0x60] sm:$0xff]
  %v34 = vld [vmem:[%s0 + $0x68] sm:$0xff]
  %v35 = vld [vmem:[%s0 + $0x70] sm:$0xff]
  %v36 = vld [vmem:[%s0 + $0x78] sm:$0xff]
  %v37 = vld [vmem:[%s0 + $0x80] sm:$0xff]
  %v38 = vld [vmem:[%s0 + $0x88] sm:$0xff]
  %v39 = vld [vmem:[%s0 + $0x90] sm:$0xff]
  %v40 = vld [vmem:[%s0 + $0x98] sm:$0xff]
  %v41 = vld [vmem:[%s0 + $0xa0] sm:$0xff]
  %v42 = vld [vmem:[%s0 + $0xa8] sm:$0xff]
  %v43 = vld [vmem:[%s0 + $0xb0] sm:$0xff]
  %v44 = vld [vmem:[%s0 + $0xb8] sm:$0xff]
  %v45 = vld [vmem:[%s0 + $0xc0] sm:$0xff]
  %v46 = vld [vmem:[%s0 + $0xc8] sm:$0xff]
  %v47 = vld [vmem:[%s0 + $0xd0] sm:$0xff]
  %v48 = vld [vmem:[%s0 + $0xd8] sm:$0xff]
  %v49 = vld [vmem:[%s0 + $0xe0] sm:$0xff]
  %v50 = vld [vmem:[%s0 + $0xe8] sm:$0xff]
  %v51 = vld [vmem:[%s0 + $0xf0] sm:$0xff]
  %v52 = vld [vmem:[%s0 + $0xf8] sm:$0xff]
  %v53 = vld [vmem:[%s0 + $0x100] sm:$0xff]
  %v54 = vld [vmem:[%s0 + $0x108] sm:$0xff]
  %v55 = vld [vmem:[%s0 + $0x110] sm:$0xff]
  %v56 = vld [vmem:[%s0 + $0x118] sm:$0xff]
  %v57 = vld [vmem:[%s0 + $0x120] sm:$0xff]
  %v58 = vld [vmem:[%s0 + $0x128] sm:$0xff]
  %v59 = vld [vmem:[%s0 + $0x130] sm:$0xff]
  %v60 = vld [vmem:[%s0 + $0x138] sm:$0xff]
  %v61 = vld [vmem:[%s0 + $0x140] sm:$0xff]
  %v62 = vld [vmem:[%s0 + $0x148] sm:$0xff]
  %v63 = vld [vmem:[%s0 + $0x150] sm:$0xff]
  %v64 = vld [vmem:[%s0 + $0x158] sm:$0xff]
  %v65 = vld [vmem:[%s0 + $0x160] sm:$0xff]
  %v66 = vld [vmem:[%s0 + $0x168] sm:$0xff]
  %v67 = vld [vmem:[%s0 + $0x170] sm:$0xff]
  %v68 = vld [vmem:[%s0 + $0x178] sm:$0xff]
  %v69 = vld [vmem:[%s0 + $0x180] sm:$0xff]
  %v70 = vld [vmem:[%s0 + $0x188] sm:$0xff]
  %v71 = vld [vmem:[%s0 + $0x190] sm:$0xff]
  %v72 = vld [vmem:[%s0 + $0x198] sm:$0xff]
  %v73 = vld [vmem:[%s0 + $0x1a0] sm:$0xff]
  %v74 = vld [vmem:[%s0 + $0x1a8] sm:$0xff]
  %v75 = vld [vmem:[%s0 + $0x1b0] sm:$0xff]
  %v76 = vld [vmem:[%s0 + $0x1b8] sm:$0xff]
  %v77 = vld [vmem:[%s0 + $0x1c0] sm:$0xff]
  %v78 = vld [vmem:[%s0 + $0x1c8] sm:$0xff]
  %v79 = vld [vmem:[%s0 + $0x1d0] sm:$0xff]
  %v80 = vld [vmem:[%s0 + $0x1d8] sm:$0xff]
  %v81 = vld [vmem:[%s0 + $0x1e0] sm:$0xff]
  %v82 = vld [vmem:[%s0 + $0x1e8] sm:$0xff]
  %v83 = vld [vmem:[%s0 + $0x1f0] sm:$0xff]
  %v84 = vld [vmem:[%s0 + $0x1f8] sm:$0xff]
  %v85 = vld [vmem:[%s1] sm:$0xf]
  %v86 = vld [vmem:[%s1 + $0x4] sm:$0xf]
  %v87 = vld [vmem:[%s1 + $0x8] sm:$0xf]
  %v88 = vld [vmem:[%s1 + $0xc] sm:$0xf]
  %v89 = vld [vmem:[%s1 + $0x10] sm:$0xf]
  %v90 = vld [vmem:[%s1 + $0x14] sm:$0xf]
  %v91 = vld [vmem:[%s1 + $0x18] sm:$0xf]
  %v92 = vld [vmem:[%s1 + $0x1c] sm:$0xf]
  %v93 = vld [vmem:[%s1 + $0x20] sm:$0xf]
  %v94 = vld [vmem:[%s1 + $0x24] sm:$0xf]
  %v95 = vld [vmem:[%s1 + $0x28] sm:$0xf]
  %v96 = vld [vmem:[%s1 + $0x2c] sm:$0xf]
  %v97 = vld [vmem:[%s1 + $0x30] sm:$0xf]
  %v98 = vld [vmem:[%s1 + $0x34] sm:$0xf]
  %v99 = vld [vmem:[%s1 + $0x38] sm:$0xf]
  %v100 = vld [vmem:[%s1 + $0x3c] sm:$0xf]
  %v101 = vld [vmem:[%s1 + $0x40] sm:$0xf]
  %v102 = vld [vmem:[%s1 + $0x44] sm:$0xf]
  %v103 = vld [vmem:[%s2] sm:$0x1]
  %v105 = vlaneseq
  %v106 = vshrl.u32 %v105, 7
  %v107 = vsub.s32 0, %v106
  %v108 = vrot.slane %v103, %v107
  %v174 = vunpack.c.l.b16 %v21
  %v175 = vunpack.c.h.b16 %v21
  %v176 = vunpack.c.l.b16 %v22
  %v177 = vunpack.c.h.b16 %v22
  %v178 = vunpack.c.l.b16 %v23
  %v179 = vunpack.c.h.b16 %v23
  %v180 = vunpack.c.l.b16 %v24
  %v181 = vunpack.c.h.b16 %v24
  %v182 = vunpack.c.l.b16 %v25
  %v183 = vunpack.c.h.b16 %v25
  %v184 = vunpack.c.l.b16 %v26
  %v185 = vunpack.c.h.b16 %v26
  %v186 = vunpack.c.l.b16 %v27
  %v187 = vunpack.c.h.b16 %v27
  %v188 = vunpack.c.l.b16 %v28
  %v189 = vunpack.c.h.b16 %v28
  %v190 = vunpack.c.l.b16 %v29
  %v191 = vunpack.c.h.b16 %v29
  %v192 = vunpack.c.l.b16 %v30
  %v193 = vunpack.c.h.b16 %v30
  %v194 = vunpack.c.l.b16 %v31
  %v195 = vunpack.c.h.b16 %v31
  %v196 = vunpack.c.l.b16 %v32
  %v197 = vunpack.c.h.b16 %v32
  %v198 = vunpack.c.l.b16 %v33
  %v199 = vunpack.c.h.b16 %v33
  %v200 = vunpack.c.l.b16 %v34
  %v201 = vunpack.c.h.b16 %v34
  %v202 = vunpack.c.l.b16 %v35
  %v203 = vunpack.c.h.b16 %v35
  %v204 = vunpack.c.l.b16 %v36
  %v205 = vunpack.c.h.b16 %v36
  %v206 = vunpack.c.l.b16 %v37
  %v207 = vunpack.c.h.b16 %v37
  %v208 = vunpack.c.l.b16 %v38
  %v209 = vunpack.c.h.b16 %v38
  %v210 = vunpack.c.l.b16 %v39
  %v211 = vunpack.c.h.b16 %v39
  %v212 = vunpack.c.l.b16 %v40
  %v213 = vunpack.c.h.b16 %v40
  %v214 = vunpack.c.l.b16 %v41
  %v215 = vunpack.c.h.b16 %v41
  %v216 = vunpack.c.l.b16 %v42
  %v217 = vunpack.c.h.b16 %v42
  %v218 = vunpack.c.l.b16 %v43
  %v219 = vunpack.c.h.b16 %v43
  %v220 = vunpack.c.l.b16 %v44
  %v221 = vunpack.c.h.b16 %v44
  %v222 = vunpack.c.l.b16 %v45
  %v223 = vunpack.c.h.b16 %v45
  %v224 = vunpack.c.l.b16 %v46
  %v225 = vunpack.c.h.b16 %v46
  %v226 = vunpack.c.l.b16 %v47
  %v227 = vunpack.c.h.b16 %v47
  %v228 = vunpack.c.l.b16 %v48
  %v229 = vunpack.c.h.b16 %v48
  %v230 = vunpack.c.l.b16 %v49
  %v231 = vunpack.c.h.b16 %v49
  %v232 = vunpack.c.l.b16 %v50
  %v233 = vunpack.c.h.b16 %v50
  %v234 = vunpack.c.l.b16 %v51
  %v235 = vunpack.c.h.b16 %v51
  %v236 = vunpack.c.l.b16 %v52
  %v237 = vunpack.c.h.b16 %v52
  %v238 = vunpack.c.l.b16 %v53
  %v239 = vunpack.c.h.b16 %v53
  %v240 = vunpack.c.l.b16 %v54
  %v241 = vunpack.c.h.b16 %v54
  %v242 = vunpack.c.l.b16 %v55
  %v243 = vunpack.c.h.b16 %v55
  %v244 = vunpack.c.l.b16 %v56
  %v245 = vunpack.c.h.b16 %v56
  %v246 = vunpack.c.l.b16 %v57
  %v247 = vunpack.c.h.b16 %v57
  %v248 = vunpack.c.l.b16 %v58
  %v249 = vunpack.c.h.b16 %v58
  %v250 = vunpack.c.l.b16 %v59
  %v251 = vunpack.c.h.b16 %v59
  %v252 = vunpack.c.l.b16 %v60
  %v253 = vunpack.c.h.b16 %v60
  %v254 = vunpack.c.l.b16 %v61
  %v255 = vunpack.c.h.b16 %v61
  %v256 = vunpack.c.l.b16 %v62
  %v257 = vunpack.c.h.b16 %v62
  %v258 = vunpack.c.l.b16 %v63
  %v259 = vunpack.c.h.b16 %v63
  %v260 = vunpack.c.l.b16 %v64
  %v261 = vunpack.c.h.b16 %v64
  %v262 = vunpack.c.l.b16 %v65
  %v263 = vunpack.c.h.b16 %v65
  %v264 = vunpack.c.l.b16 %v66
  %v265 = vunpack.c.h.b16 %v66
  %v266 = vunpack.c.l.b16 %v67
  %v267 = vunpack.c.h.b16 %v67
  %v268 = vunpack.c.l.b16 %v68
  %v269 = vunpack.c.h.b16 %v68
  %v270 = vunpack.c.l.b16 %v69
  %v271 = vunpack.c.h.b16 %v69
  %v272 = vunpack.c.l.b16 %v70
  %v273 = vunpack.c.h.b16 %v70
  %v274 = vunpack.c.l.b16 %v71
  %v275 = vunpack.c.h.b16 %v71
  %v276 = vunpack.c.l.b16 %v72
  %v277 = vunpack.c.h.b16 %v72
  %v278 = vunpack.c.l.b16 %v73
  %v279 = vunpack.c.h.b16 %v73
  %v280 = vunpack.c.l.b16 %v74
  %v281 = vunpack.c.h.b16 %v74
  %v282 = vunpack.c.l.b16 %v75
  %v283 = vunpack.c.h.b16 %v75
  %v284 = vunpack.c.l.b16 %v76
  %v285 = vunpack.c.h.b16 %v76
  %v286 = vunpack.c.l.b16 %v77
  %v287 = vunpack.c.h.b16 %v77
  %v288 = vunpack.c.l.b16 %v78
  %v289 = vunpack.c.h.b16 %v78
  %v290 = vunpack.c.l.b16 %v79
  %v291 = vunpack.c.h.b16 %v79
  %v292 = vunpack.c.l.b16 %v80
  %v293 = vunpack.c.h.b16 %v80
  %v294 = vunpack.c.l.b16 %v81
  %v295 = vunpack.c.h.b16 %v81
  %v296 = vunpack.c.l.b16 %v82
  %v297 = vunpack.c.h.b16 %v82
  %v298 = vunpack.c.l.b16 %v83
  %v299 = vunpack.c.h.b16 %v83
  %v300 = vunpack.c.l.b16 %v84
  %v301 = vunpack.c.h.b16 %v84
  %v302 = vpack.c.b16 %v176, %v174
  %v303 = vpack.c.b16 %v177, %v175
  %v304 = vpack.c.b16 %v180, %v178
  %v305 = vpack.c.b16 %v181, %v179
  %v306 = vpack.c.b16 %v184, %v182
  %v307 = vpack.c.b16 %v185, %v183
  %v308 = vpack.c.b16 %v188, %v186
  %v309 = vpack.c.b16 %v189, %v187
  %v310 = vpack.c.b16 %v192, %v190
  %v311 = vpack.c.b16 %v193, %v191
  %v312 = vpack.c.b16 %v196, %v194
  %v313 = vpack.c.b16 %v197, %v195
  %v314 = vpack.c.b16 %v200, %v198
  %v315 = vpack.c.b16 %v201, %v199
  %v316 = vpack.c.b16 %v204, %v202
  %v317 = vpack.c.b16 %v205, %v203
  %v318 = vpack.c.b16 %v208, %v206
  %v319 = vpack.c.b16 %v209, %v207
  %v320 = vpack.c.b16 %v212, %v210
  %v321 = vpack.c.b16 %v213, %v211
  %v322 = vpack.c.b16 %v216, %v214
  %v323 = vpack.c.b16 %v217, %v215
  %v324 = vpack.c.b16 %v220, %v218
  %v325 = vpack.c.b16 %v221, %v219
  %v326 = vpack.c.b16 %v224, %v222
  %v327 = vpack.c.b16 %v225, %v223
  %v328 = vpack.c.b16 %v228, %v226
  %v329 = vpack.c.b16 %v229, %v227
  %v330 = vpack.c.b16 %v232, %v230
  %v331 = vpack.c.b16 %v233, %v231
  %v332 = vpack.c.b16 %v236, %v234
  %v333 = vpack.c.b16 %v237, %v235
  %v334 = vpack.c.b16 %v240, %v238
  %v335 = vpack.c.b16 %v241, %v239
  %v336 = vpack.c.b16 %v244, %v242
  %v337 = vpack.c.b16 %v245, %v243
  %v338 = vpack.c.b16 %v248, %v246
  %v339 = vpack.c.b16 %v249, %v247
  %v340 = vpack.c.b16 %v252, %v250
  %v341 = vpack.c.b16 %v253, %v251
  %v342 = vpack.c.b16 %v256, %v254
  %v343 = vpack.c.b16 %v257, %v255
  %v344 = vpack.c.b16 %v260, %v258
  %v345 = vpack.c.b16 %v261, %v259
  %v346 = vpack.c.b16 %v264, %v262
  %v347 = vpack.c.b16 %v265, %v263
  %v348 = vpack.c.b16 %v268, %v266
  %v349 = vpack.c.b16 %v269, %v267
  %v350 = vpack.c.b16 %v272, %v270
  %v351 = vpack.c.b16 %v273, %v271
  %v352 = vpack.c.b16 %v276, %v274
  %v353 = vpack.c.b16 %v277, %v275
  %v354 = vpack.c.b16 %v280, %v278
  %v355 = vpack.c.b16 %v281, %v279
  %v356 = vpack.c.b16 %v284, %v282
  %v357 = vpack.c.b16 %v285, %v283
  %v358 = vpack.c.b16 %v288, %v286
  %v359 = vpack.c.b16 %v289, %v287
  %v360 = vpack.c.b16 %v292, %v290
  %v361 = vpack.c.b16 %v293, %v291
  %v362 = vpack.c.b16 %v296, %v294
  %v363 = vpack.c.b16 %v297, %v295
  %v364 = vpack.c.b16 %v300, %v298
  %v365 = vpack.c.b16 %v301, %v299
  %v416 = vunpack.c.l.b16 %v85
  %v417 = vunpack.c.l.b16 %v86
  %v418 = vunpack.c.l.b16 %v87
  %v419 = vunpack.c.l.b16 %v88
  %v420 = vunpack.c.l.b16 %v89
  %v421 = vunpack.c.l.b16 %v90
  %v422 = vunpack.c.l.b16 %v91
  %v423 = vunpack.c.l.b16 %v92
  %v424 = vunpack.c.l.b16 %v93
  %v425 = vunpack.c.l.b16 %v94
  %v426 = vunpack.c.l.b16 %v95
  %v427 = vunpack.c.l.b16 %v96
  %v428 = vunpack.c.l.b16 %v97
  %v429 = vunpack.c.l.b16 %v98
  %v430 = vunpack.c.l.b16 %v99
  %v431 = vunpack.c.l.b16 %v100
  %v432 = vunpack.c.l.b16 %v101
  %v433 = vunpack.c.l.b16 %v102
  %v434 = vpack.c.b16 %v417, %v416
  %v435 = vpack.c.b16 %v419, %v418
  %v436 = vpack.c.b16 %v421, %v420
  %v437 = vpack.c.b16 %v423, %v422
  %v438 = vpack.c.b16 %v425, %v424
  %v439 = vpack.c.b16 %v427, %v426
  %v440 = vpack.c.b16 %v429, %v428
  %v441 = vpack.c.b16 %v431, %v430
  %v442 = vpack.c.b16 %v433, %v432
  %vm452 = vcmask 130048
  %v454 = vsel %vm452, %v303, 0
  %v457 = vsel %vm452, %v305, 0
  %v460 = vsel %vm452, %v307, 0
  %v463 = vsel %vm452, %v309, 0
  %v466 = vsel %vm452, %v311, 0
  %v469 = vsel %vm452, %v313, 0
  %v472 = vsel %vm452, %v315, 0
  %v475 = vsel %vm452, %v317, 0
  %v478 = vsel %vm452, %v319, 0
  %v481 = vsel %vm452, %v321, 0
  %v484 = vsel %vm452, %v323, 0
  %v487 = vsel %vm452, %v325, 0
  %v490 = vsel %vm452, %v327, 0
  %v493 = vsel %vm452, %v329, 0
  %v496 = vsel %vm452, %v331, 0
  %v499 = vsel %vm452, %v333, 0
  %v502 = vsel %vm452, %v335, 0
  %v505 = vsel %vm452, %v337, 0
  %v508 = vsel %vm452, %v339, 0
  %v511 = vsel %vm452, %v341, 0
  %v514 = vsel %vm452, %v343, 0
  %v517 = vsel %vm452, %v345, 0
  %v520 = vsel %vm452, %v347, 0
  %v523 = vsel %vm452, %v349, 0
  %v526 = vsel %vm452, %v351, 0
  %v529 = vsel %vm452, %v353, 0
  %v532 = vsel %vm452, %v355, 0
  %v535 = vsel %vm452, %v357, 0
  %v538 = vsel %vm452, %v359, 0
  %v541 = vsel %vm452, %v361, 0
  %v544 = vsel %vm452, %v363, 0
  %v547 = vsel %vm452, %v365, 0
  %549 = vmatprep.subr.bf16.mxu0 0
  %550 = vmatpush1.bf16.msra.mxu0 %v441
  %551 = vmatprep.subr.bf16.mxu0 0
  %552 = vmatpush1.bf16.msra.mxu0 %v440
  %553 = vmatprep.subr.bf16.mxu0 0
  %554 = vmatpush1.bf16.msra.mxu0 %v439
  %555 = vmatprep.subr.bf16.mxu0 0
  %556 = vmatpush1.bf16.msra.mxu0 %v438
  %557 = vmatprep.subr.bf16.mxu0 0
  %558 = vmatpush1.bf16.msra.mxu0 %v437
  %559 = vmatprep.subr.bf16.mxu0 0
  %560 = vmatpush1.bf16.msra.mxu0 %v436
  %561 = vmatprep.subr.bf16.mxu0 0
  %562 = vmatpush1.bf16.msra.mxu0 %v435
  %563 = vmatprep.subr.bf16.mxu0 0
  %564 = vmatpush1.bf16.msra.mxu0 %v434
  %565 = vmatprep.subr.bf16.mxu0 0
  %566 = vmatpush2.bf16.msra.mxu0 0
  %567 = vmatprep.subr.bf16.mxu0 0
  %568 = vmatpush2.bf16.msra.mxu0 0
  %569 = vmatprep.subr.bf16.mxu0 0
  %570 = vmatpush2.bf16.msra.mxu0 0
  %571 = vmatprep.subr.bf16.mxu0 0
  %572 = vmatpush2.bf16.msra.mxu0 0
  %573 = vmatprep.subr.bf16.mxu0 0
  %574 = vmatpush2.bf16.msra.mxu0 0
  %575 = vmatprep.subr.bf16.mxu0 0
  %576 = vmatpush2.bf16.msra.mxu0 0
  %577 = vmatprep.subr.bf16.mxu0 0
  %578 = vmatpush2.bf16.msra.mxu0 0
  %579 = vmatprep.subr.bf16.mxu0 0
  %580 = vmatpush2.bf16.msra.mxu0 %v442
  %581 = vmatprep.mubr.bf16.mxu0 %v454
  %582 = vmatmul.mubr.bf16.gmra.mxu0 %v302
  %v583 = vpop.f32.mrf.mxu0
  %v584 = vadd.f32 %v108, %v583
  %v585 = vpop.f32.mrf.mxu0
  %v586 = vpop.f32.mrf.mxu0
  %v587 = vadd.f32 %v108, %v586
  %v588 = vpop.f32.mrf.mxu0
  %589 = vmatprep.mubr.bf16.mxu0 %v457
  %590 = vmatmul.mubr.bf16.gmra.mxu0 %v304
  %v591 = vpop.f32.mrf.mxu0
  %v592 = vadd.f32 %v108, %v591
  %v593 = vpop.f32.mrf.mxu0
  %v594 = vpop.f32.mrf.mxu0
  %v595 = vadd.f32 %v108, %v594
  %v596 = vpop.f32.mrf.mxu0
  %597 = vmatprep.mubr.bf16.mxu0 %v460
  %598 = vmatmul.mubr.bf16.gmra.mxu0 %v306
  %v599 = vpop.f32.mrf.mxu0
  %v600 = vadd.f32 %v108, %v599
  %v601 = vpop.f32.mrf.mxu0
  %v602 = vpop.f32.mrf.mxu0
  %v603 = vadd.f32 %v108, %v602
  %v604 = vpop.f32.mrf.mxu0
  %605 = vmatprep.mubr.bf16.mxu0 %v463
  %606 = vmatmul.mubr.bf16.gmra.mxu0 %v308
  %v607 = vpop.f32.mrf.mxu0
  %v608 = vadd.f32 %v108, %v607
  %v609 = vpop.f32.mrf.mxu0
  %v610 = vpop.f32.mrf.mxu0
  %v611 = vadd.f32 %v108, %v610
  %v612 = vpop.f32.mrf.mxu0
  %613 = vmatprep.mubr.bf16.mxu0 %v466
  %614 = vmatmul.mubr.bf16.gmra.mxu0 %v310
  %v615 = vpop.f32.mrf.mxu0
  %v616 = vadd.f32 %v108, %v615
  %v617 = vpop.f32.mrf.mxu0
  %v618 = vpop.f32.mrf.mxu0
  %v619 = vadd.f32 %v108, %v618
  %v620 = vpop.f32.mrf.mxu0
  %621 = vmatprep.mubr.bf16.mxu0 %v469
  %622 = vmatmul.mubr.bf16.gmra.mxu0 %v312
  %v623 = vpop.f32.mrf.mxu0
  %v624 = vadd.f32 %v108, %v623
  %v625 = vpop.f32.mrf.mxu0
  %v626 = vpop.f32.mrf.mxu0
  %v627 = vadd.f32 %v108, %v626
  %v628 = vpop.f32.mrf.mxu0
  %629 = vmatprep.mubr.bf16.mxu0 %v472
  %630 = vmatmul.mubr.bf16.gmra.mxu0 %v314
  %v631 = vpop.f32.mrf.mxu0
  %v632 = vadd.f32 %v108, %v631
  %v633 = vpop.f32.mrf.mxu0
  %v634 = vpop.f32.mrf.mxu0
  %v635 = vadd.f32 %v108, %v634
  %v636 = vpop.f32.mrf.mxu0
  %637 = vmatprep.mubr.bf16.mxu0 %v475
  %638 = vmatmul.mubr.bf16.gmra.mxu0 %v316
  %v639 = vpop.f32.mrf.mxu0
  %v640 = vadd.f32 %v108, %v639
  %v641 = vpop.f32.mrf.mxu0
  %v642 = vpop.f32.mrf.mxu0
  %v643 = vadd.f32 %v108, %v642
  %v644 = vpop.f32.mrf.mxu0
  %645 = vmatprep.mubr.bf16.mxu0 %v478
  %646 = vmatmul.mubr.bf16.gmra.mxu0 %v318
  %v647 = vpop.f32.mrf.mxu0
  %v648 = vadd.f32 %v108, %v647
  %v649 = vpop.f32.mrf.mxu0
  %v650 = vpop.f32.mrf.mxu0
  %v651 = vadd.f32 %v108, %v650
  %v652 = vpop.f32.mrf.mxu0
  %653 = vmatprep.mubr.bf16.mxu0 %v481
  %654 = vmatmul.mubr.bf16.gmra.mxu0 %v320
  %v655 = vpop.f32.mrf.mxu0
  %v656 = vadd.f32 %v108, %v655
  %v657 = vpop.f32.mrf.mxu0
  %v658 = vpop.f32.mrf.mxu0
  %v659 = vadd.f32 %v108, %v658
  %v660 = vpop.f32.mrf.mxu0
  %661 = vmatprep.mubr.bf16.mxu0 %v484
  %662 = vmatmul.mubr.bf16.gmra.mxu0 %v322
  %v663 = vpop.f32.mrf.mxu0
  %v664 = vadd.f32 %v108, %v663
  %v665 = vpop.f32.mrf.mxu0
  %v666 = vpop.f32.mrf.mxu0
  %v667 = vadd.f32 %v108, %v666
  %v668 = vpop.f32.mrf.mxu0
  %669 = vmatprep.mubr.bf16.mxu0 %v487
  %670 = vmatmul.mubr.bf16.gmra.mxu0 %v324
  %v671 = vpop.f32.mrf.mxu0
  %v672 = vadd.f32 %v108, %v671
  %v673 = vpop.f32.mrf.mxu0
  %v674 = vpop.f32.mrf.mxu0
  %v675 = vadd.f32 %v108, %v674
  %v676 = vpop.f32.mrf.mxu0
  %677 = vmatprep.mubr.bf16.mxu0 %v490
  %678 = vmatmul.mubr.bf16.gmra.mxu0 %v326
  %v679 = vpop.f32.mrf.mxu0
  %v680 = vadd.f32 %v108, %v679
  %v681 = vpop.f32.mrf.mxu0
  %v682 = vpop.f32.mrf.mxu0
  %v683 = vadd.f32 %v108, %v682
  %v684 = vpop.f32.mrf.mxu0
  %685 = vmatprep.mubr.bf16.mxu0 %v493
  %686 = vmatmul.mubr.bf16.gmra.mxu0 %v328
  %v687 = vpop.f32.mrf.mxu0
  %v688 = vadd.f32 %v108, %v687
  %v689 = vpop.f32.mrf.mxu0
  %v690 = vpop.f32.mrf.mxu0
  %v691 = vadd.f32 %v108, %v690
  %v692 = vpop.f32.mrf.mxu0
  %693 = vmatprep.mubr.bf16.mxu0 %v496
  %694 = vmatmul.mubr.bf16.gmra.mxu0 %v330
  %v695 = vpop.f32.mrf.mxu0
  %v696 = vadd.f32 %v108, %v695
  %v697 = vpop.f32.mrf.mxu0
  %v698 = vpop.f32.mrf.mxu0
  %v699 = vadd.f32 %v108, %v698
  %v700 = vpop.f32.mrf.mxu0
  %701 = vmatprep.mubr.bf16.mxu0 %v499
  %702 = vmatmul.mubr.bf16.gmra.mxu0 %v332
  %v703 = vpop.f32.mrf.mxu0
  %v704 = vadd.f32 %v108, %v703
  %v705 = vpop.f32.mrf.mxu0
  %v706 = vpop.f32.mrf.mxu0
  %v707 = vadd.f32 %v108, %v706
  %v708 = vpop.f32.mrf.mxu0
  %709 = vmatprep.mubr.bf16.mxu0 %v502
  %710 = vmatmul.mubr.bf16.gmra.mxu0 %v334
  %v711 = vpop.f32.mrf.mxu0
  %v712 = vadd.f32 %v108, %v711
  %v713 = vpop.f32.mrf.mxu0
  %v714 = vpop.f32.mrf.mxu0
  %v715 = vadd.f32 %v108, %v714
  %v716 = vpop.f32.mrf.mxu0
  %717 = vmatprep.mubr.bf16.mxu0 %v505
  %718 = vmatmul.mubr.bf16.gmra.mxu0 %v336
  %v719 = vpop.f32.mrf.mxu0
  %v720 = vadd.f32 %v108, %v719
  %v721 = vpop.f32.mrf.mxu0
  %v722 = vpop.f32.mrf.mxu0
  %v723 = vadd.f32 %v108, %v722
  %v724 = vpop.f32.mrf.mxu0
  %725 = vmatprep.mubr.bf16.mxu0 %v508
  %726 = vmatmul.mubr.bf16.gmra.mxu0 %v338
  %v727 = vpop.f32.mrf.mxu0
  %v728 = vadd.f32 %v108, %v727
  %v729 = vpop.f32.mrf.mxu0
  %v730 = vpop.f32.mrf.mxu0
  %v731 = vadd.f32 %v108, %v730
  %v732 = vpop.f32.mrf.mxu0
  %733 = vmatprep.mubr.bf16.mxu0 %v511
  %734 = vmatmul.mubr.bf16.gmra.mxu0 %v340
  %v735 = vpop.f32.mrf.mxu0
  %v736 = vadd.f32 %v108, %v735
  %v737 = vpop.f32.mrf.mxu0
  %v738 = vpop.f32.mrf.mxu0
  %v739 = vadd.f32 %v108, %v738
  %v740 = vpop.f32.mrf.mxu0
  %741 = vmatprep.mubr.bf16.mxu0 %v514
  %742 = vmatmul.mubr.bf16.gmra.mxu0 %v342
  %v743 = vpop.f32.mrf.mxu0
  %v744 = vadd.f32 %v108, %v743
  %v745 = vpop.f32.mrf.mxu0
  %v746 = vpop.f32.mrf.mxu0
  %v747 = vadd.f32 %v108, %v746
  %v748 = vpop.f32.mrf.mxu0
  %749 = vmatprep.mubr.bf16.mxu0 %v517
  %750 = vmatmul.mubr.bf16.gmra.mxu0 %v344
  %v751 = vpop.f32.mrf.mxu0
  %v752 = vadd.f32 %v108, %v751
  %v753 = vpop.f32.mrf.mxu0
  %v754 = vpop.f32.mrf.mxu0
  %v755 = vadd.f32 %v108, %v754
  %v756 = vpop.f32.mrf.mxu0
  %757 = vmatprep.mubr.bf16.mxu0 %v520
  %758 = vmatmul.mubr.bf16.gmra.mxu0 %v346
  %v759 = vpop.f32.mrf.mxu0
  %v760 = vadd.f32 %v108, %v759
  %v761 = vpop.f32.mrf.mxu0
  %v762 = vpop.f32.mrf.mxu0
  %v763 = vadd.f32 %v108, %v762
  %v764 = vpop.f32.mrf.mxu0
  %765 = vmatprep.mubr.bf16.mxu0 %v523
  %766 = vmatmul.mubr.bf16.gmra.mxu0 %v348
  %v767 = vpop.f32.mrf.mxu0
  %v768 = vadd.f32 %v108, %v767
  %v769 = vpop.f32.mrf.mxu0
  %v770 = vpop.f32.mrf.mxu0
  %v771 = vadd.f32 %v108, %v770
  %v772 = vpop.f32.mrf.mxu0
  %773 = vmatprep.mubr.bf16.mxu0 %v526
  %774 = vmatmul.mubr.bf16.gmra.mxu0 %v350
  %v775 = vpop.f32.mrf.mxu0
  %v776 = vadd.f32 %v108, %v775
  %v777 = vpop.f32.mrf.mxu0
  %v778 = vpop.f32.mrf.mxu0
  %v779 = vadd.f32 %v108, %v778
  %v780 = vpop.f32.mrf.mxu0
  %781 = vmatprep.mubr.bf16.mxu0 %v529
  %782 = vmatmul.mubr.bf16.gmra.mxu0 %v352
  %v783 = vpop.f32.mrf.mxu0
  %v784 = vadd.f32 %v108, %v783
  %v785 = vpop.f32.mrf.mxu0
  %v786 = vpop.f32.mrf.mxu0
  %v787 = vadd.f32 %v108, %v786
  %v788 = vpop.f32.mrf.mxu0
  %789 = vmatprep.mubr.bf16.mxu0 %v532
  %790 = vmatmul.mubr.bf16.gmra.mxu0 %v354
  %v791 = vpop.f32.mrf.mxu0
  %v792 = vadd.f32 %v108, %v791
  %v793 = vpop.f32.mrf.mxu0
  %v794 = vpop.f32.mrf.mxu0
  %v795 = vadd.f32 %v108, %v794
  %v796 = vpop.f32.mrf.mxu0
  %797 = vmatprep.mubr.bf16.mxu0 %v535
  %798 = vmatmul.mubr.bf16.gmra.mxu0 %v356
  %v799 = vpop.f32.mrf.mxu0
  %v800 = vadd.f32 %v108, %v799
  %v801 = vpop.f32.mrf.mxu0
  %v802 = vpop.f32.mrf.mxu0
  %v803 = vadd.f32 %v108, %v802
  %v804 = vpop.f32.mrf.mxu0
  %805 = vmatprep.mubr.bf16.mxu0 %v538
  %806 = vmatmul.mubr.bf16.gmra.mxu0 %v358
  %v807 = vpop.f32.mrf.mxu0
  %v808 = vadd.f32 %v108, %v807
  %v809 = vpop.f32.mrf.mxu0
  %v810 = vpop.f32.mrf.mxu0
  %v811 = vadd.f32 %v108, %v810
  %v812 = vpop.f32.mrf.mxu0
  %813 = vmatprep.mubr.bf16.mxu0 %v541
  %814 = vmatmul.mubr.bf16.gmra.mxu0 %v360
  %v815 = vpop.f32.mrf.mxu0
  %v816 = vadd.f32 %v108, %v815
  %v817 = vpop.f32.mrf.mxu0
  %v818 = vpop.f32.mrf.mxu0
  %v819 = vadd.f32 %v108, %v818
  %v820 = vpop.f32.mrf.mxu0
  %821 = vmatprep.mubr.bf16.mxu0 %v544
  %822 = vmatmul.mubr.bf16.gmra.mxu0 %v362
  %v823 = vpop.f32.mrf.mxu0
  %v824 = vadd.f32 %v108, %v823
  %v825 = vpop.f32.mrf.mxu0
  %v826 = vpop.f32.mrf.mxu0
  %v827 = vadd.f32 %v108, %v826
  %v828 = vpop.f32.mrf.mxu0
  %829 = vmatprep.mubr.bf16.mxu0 %v547
  %830 = vmatmul.mubr.bf16.gmra.mxu0 %v364
  %v831 = vpop.f32.mrf.mxu0
  %v832 = vadd.f32 %v108, %v831
  %v833 = vpop.f32.mrf.mxu0
  %v834 = vpop.f32.mrf.mxu0
  %v835 = vadd.f32 %v108, %v834
  %v836 = vpop.f32.mrf.mxu0
  %837 = vdwg.mxu0
  %v838 = vld [vmem:[%s3] sm:$0x1]
  %v840 = vlaneseq
  %v841 = vshrl.u32 %v840, 7
  %v842 = vsub.s32 0, %v841
  %v843 = vrot.slane %v838, %v842
  %v845 = vmul.f32 %v584, %v843
  %v846 = vmul.f32 %v587, %v843
  %v847 = vmul.f32 %v592, %v843
  %v848 = vmul.f32 %v595, %v843
  %v849 = vmul.f32 %v600, %v843
  %v850 = vmul.f32 %v603, %v843
  %v851 = vmul.f32 %v608, %v843
  %v852 = vmul.f32 %v611, %v843
  %v853 = vmul.f32 %v616, %v843
  %v854 = vmul.f32 %v619, %v843
  %v855 = vmul.f32 %v624, %v843
  %v856 = vmul.f32 %v627, %v843
  %v857 = vmul.f32 %v632, %v843
  %v858 = vmul.f32 %v635, %v843
  %v859 = vmul.f32 %v640, %v843
  %v860 = vmul.f32 %v643, %v843
  %v861 = vmul.f32 %v648, %v843
  %v862 = vmul.f32 %v651, %v843
  %v863 = vmul.f32 %v656, %v843
  %v864 = vmul.f32 %v659, %v843
  %v865 = vmul.f32 %v664, %v843
  %v866 = vmul.f32 %v667, %v843
  %v867 = vmul.f32 %v672, %v843
  %v868 = vmul.f32 %v675, %v843
  %v869 = vmul.f32 %v680, %v843
  %v870 = vmul.f32 %v683, %v843
  %v871 = vmul.f32 %v688, %v843
  %v872 = vmul.f32 %v691, %v843
  %v873 = vmul.f32 %v696, %v843
  %v874 = vmul.f32 %v699, %v843
  %v875 = vmul.f32 %v704, %v843
  %v876 = vmul.f32 %v707, %v843
  %v877 = vmul.f32 %v712, %v843
  %v878 = vmul.f32 %v715, %v843
  %v879 = vmul.f32 %v720, %v843
  %v880 = vmul.f32 %v723, %v843
  %v881 = vmul.f32 %v728, %v843
  %v882 = vmul.f32 %v731, %v843
  %v883 = vmul.f32 %v736, %v843
  %v884 = vmul.f32 %v739, %v843
  %v885 = vmul.f32 %v744, %v843
  %v886 = vmul.f32 %v747, %v843
  %v887 = vmul.f32 %v752, %v843
  %v888 = vmul.f32 %v755, %v843
  %v889 = vmul.f32 %v760, %v843
  %v890 = vmul.f32 %v763, %v843
  %v891 = vmul.f32 %v768, %v843
  %v892 = vmul.f32 %v771, %v843
  %v893 = vmul.f32 %v776, %v843
  %v894 = vmul.f32 %v779, %v843
  %v895 = vmul.f32 %v784, %v843
  %v896 = vmul.f32 %v787, %v843
  %v897 = vmul.f32 %v792, %v843
  %v898 = vmul.f32 %v795, %v843
  %v899 = vmul.f32 %v800, %v843
  %v900 = vmul.f32 %v803, %v843
  %v901 = vmul.f32 %v808, %v843
  %v902 = vmul.f32 %v811, %v843
  %v903 = vmul.f32 %v816, %v843
  %v904 = vmul.f32 %v819, %v843
  %v905 = vmul.f32 %v824, %v843
  %v906 = vmul.f32 %v827, %v843
  %v907 = vmul.f32 %v832, %v843
  %v908 = vmul.f32 %v835, %v843
  %v909 = vld [vmem:[%s4] sm:$0x1]
  %v911 = vlaneseq
  %v912 = vshrl.u32 %v911, 7
  %v913 = vsub.s32 0, %v912
  %v914 = vrot.slane %v909, %v913
  %v916 = vadd.f32 %v845, %v914
  %v917 = vadd.f32 %v846, %v914
  %v918 = vadd.f32 %v847, %v914
  %v919 = vadd.f32 %v848, %v914
  %v920 = vadd.f32 %v849, %v914
  %v921 = vadd.f32 %v850, %v914
  %v922 = vadd.f32 %v851, %v914
  %v923 = vadd.f32 %v852, %v914
  %v924 = vadd.f32 %v853, %v914
  %v925 = vadd.f32 %v854, %v914
  %v926 = vadd.f32 %v855, %v914
  %v927 = vadd.f32 %v856, %v914
  %v928 = vadd.f32 %v857, %v914
  %v929 = vadd.f32 %v858, %v914
  %v930 = vadd.f32 %v859, %v914
  %v931 = vadd.f32 %v860, %v914
  %v932 = vadd.f32 %v861, %v914
  %v933 = vadd.f32 %v862, %v914
  %v934 = vadd.f32 %v863, %v914
  %v935 = vadd.f32 %v864, %v914
  %v936 = vadd.f32 %v865, %v914
  %v937 = vadd.f32 %v866, %v914
  %v938 = vadd.f32 %v867, %v914
  %v939 = vadd.f32 %v868, %v914
  %v940 = vadd.f32 %v869, %v914
  %v941 = vadd.f32 %v870, %v914
  %v942 = vadd.f32 %v871, %v914
  %v943 = vadd.f32 %v872, %v914
  %v944 = vadd.f32 %v873, %v914
  %v945 = vadd.f32 %v874, %v914
  %v946 = vadd.f32 %v875, %v914
  %v947 = vadd.f32 %v876, %v914
  %v948 = vadd.f32 %v877, %v914
  %v949 = vadd.f32 %v878, %v914
  %v950 = vadd.f32 %v879, %v914
  %v951 = vadd.f32 %v880, %v914
  %v952 = vadd.f32 %v881, %v914
  %v953 = vadd.f32 %v882, %v914
  %v954 = vadd.f32 %v883, %v914
  %v955 = vadd.f32 %v884, %v914
  %v956 = vadd.f32 %v885, %v914
  %v957 = vadd.f32 %v886, %v914
  %v958 = vadd.f32 %v887, %v914
  %v959 = vadd.f32 %v888, %v914
  %v960 = vadd.f32 %v889, %v914
  %v961 = vadd.f32 %v890, %v914
  %v962 = vadd.f32 %v891, %v914
  %v963 = vadd.f32 %v892, %v914
  %v964 = vadd.f32 %v893, %v914
  %v965 = vadd.f32 %v894, %v914
  %v966 = vadd.f32 %v895, %v914
  %v967 = vadd.f32 %v896, %v914
  %v968 = vadd.f32 %v897, %v914
  %v969 = vadd.f32 %v898, %v914
  %v970 = vadd.f32 %v899, %v914
  %v971 = vadd.f32 %v900, %v914
  %v972 = vadd.f32 %v901, %v914
  %v973 = vadd.f32 %v902, %v914
  %v974 = vadd.f32 %v903, %v914
  %v975 = vadd.f32 %v904, %v914
  %v976 = vadd.f32 %v905, %v914
  %v977 = vadd.f32 %v906, %v914
  %v978 = vadd.f32 %v907, %v914
  %v979 = vadd.f32 %v908, %v914
  %v980 = vmax.f32 %v916, 0.0
  %v981 = vmax.f32 %v917, 0.0
  %v982 = vmax.f32 %v918, 0.0
  %v983 = vmax.f32 %v919, 0.0
  %v984 = vmax.f32 %v920, 0.0
  %v985 = vmax.f32 %v921, 0.0
  %v986 = vmax.f32 %v922, 0.0
  %v987 = vmax.f32 %v923, 0.0
  %v988 = vmax.f32 %v924, 0.0
  %v989 = vmax.f32 %v925, 0.0
  %v990 = vmax.f32 %v926, 0.0
  %v991 = vmax.f32 %v927, 0.0
  %v992 = vmax.f32 %v928, 0.0
  %v993 = vmax.f32 %v929, 0.0
  %v994 = vmax.f32 %v930, 0.0
  %v995 = vmax.f32 %v931, 0.0
  %v996 = vmax.f32 %v932, 0.0
  %v997 = vmax.f32 %v933, 0.0
  %v998 = vmax.f32 %v934, 0.0
  %v999 = vmax.f32 %v935, 0.0
  %v1000 = vmax.f32 %v936, 0.0
  %v1001 = vmax.f32 %v937, 0.0
  %v1002 = vmax.f32 %v938, 0.0
  %v1003 = vmax.f32 %v939, 0.0
  %v1004 = vmax.f32 %v940, 0.0
  %v1005 = vmax.f32 %v941, 0.0
  %v1006 = vmax.f32 %v942, 0.0
  %v1007 = vmax.f32 %v943, 0.0
  %v1008 = vmax.f32 %v944, 0.0
  %v1009 = vmax.f32 %v945, 0.0
  %v1010 = vmax.f32 %v946, 0.0
  %v1011 = vmax.f32 %v947, 0.0
  %v1012 = vmax.f32 %v948, 0.0
  %v1013 = vmax.f32 %v949, 0.0
  %v1014 = vmax.f32 %v950, 0.0
  %v1015 = vmax.f32 %v951, 0.0
  %v1016 = vmax.f32 %v952, 0.0
  %v1017 = vmax.f32 %v953, 0.0
  %v1018 = vmax.f32 %v954, 0.0
  %v1019 = vmax.f32 %v955, 0.0
  %v1020 = vmax.f32 %v956, 0.0
  %v1021 = vmax.f32 %v957, 0.0
  %v1022 = vmax.f32 %v958, 0.0
  %v1023 = vmax.f32 %v959, 0.0
  %v1024 = vmax.f32 %v960, 0.0
  %v1025 = vmax.f32 %v961, 0.0
  %v1026 = vmax.f32 %v962, 0.0
  %v1027 = vmax.f32 %v963, 0.0
  %v1028 = vmax.f32 %v964, 0.0
  %v1029 = vmax.f32 %v965, 0.0
  %v1030 = vmax.f32 %v966, 0.0
  %v1031 = vmax.f32 %v967, 0.0
  %v1032 = vmax.f32 %v968, 0.0
  %v1033 = vmax.f32 %v969, 0.0
  %v1034 = vmax.f32 %v970, 0.0
  %v1035 = vmax.f32 %v971, 0.0
  %v1036 = vmax.f32 %v972, 0.0
  %v1037 = vmax.f32 %v973, 0.0
  %v1038 = vmax.f32 %v974, 0.0
  %v1039 = vmax.f32 %v975, 0.0
  %v1040 = vmax.f32 %v976, 0.0
  %v1041 = vmax.f32 %v977, 0.0
  %v1042 = vmax.f32 %v978, 0.0
  %v1043 = vmax.f32 %v979, 0.0
  %1044 = vst.msk [vmem:[%s5] sm:$0xff] %vm452, %v980
  %1045 = vst.msk [vmem:[%s5 + $0x8] sm:$0xff] %vm452, %v981
  %1046 = vst.msk [vmem:[%s5 + $0x10] sm:$0xff] %vm452, %v982
  %1047 = vst.msk [vmem:[%s5 + $0x18] sm:$0xff] %vm452, %v983
  %1048 = vst.msk [vmem:[%s5 + $0x20] sm:$0xff] %vm452, %v984
  %1049 = vst.msk [vmem:[%s5 + $0x28] sm:$0xff] %vm452, %v985
  %1050 = vst.msk [vmem:[%s5 + $0x30] sm:$0xff] %vm452, %v986
  %1051 = vst.msk [vmem:[%s5 + $0x38] sm:$0xff] %vm452, %v987
  %1052 = vst.msk [vmem:[%s5 + $0x40] sm:$0xff] %vm452, %v988
  %1053 = vst.msk [vmem:[%s5 + $0x48] sm:$0xff] %vm452, %v989
  %1054 = vst.msk [vmem:[%s5 + $0x50] sm:$0xff] %vm452, %v990
  %1055 = vst.msk [vmem:[%s5 + $0x58] sm:$0xff] %vm452, %v991
  %1056 = vst.msk [vmem:[%s5 + $0x60] sm:$0xff] %vm452, %v992
  %1057 = vst.msk [vmem:[%s5 + $0x68] sm:$0xff] %vm452, %v993
  %1058 = vst.msk [vmem:[%s5 + $0x70] sm:$0xff] %vm452, %v994
  %1059 = vst.msk [vmem:[%s5 + $0x78] sm:$0xff] %vm452, %v995
  %1060 = vst.msk [vmem:[%s5 + $0x80] sm:$0xff] %vm452, %v996
  %1061 = vst.msk [vmem:[%s5 + $0x88] sm:$0xff] %vm452, %v997
  %1062 = vst.msk [vmem:[%s5 + $0x90] sm:$0xff] %vm452, %v998
  %1063 = vst.msk [vmem:[%s5 + $0x98] sm:$0xff] %vm452, %v999
  %1064 = vst.msk [vmem:[%s5 + $0xa0] sm:$0xff] %vm452, %v1000
  %1065 = vst.msk [vmem:[%s5 + $0xa8] sm:$0xff] %vm452, %v1001
  %1066 = vst.msk [vmem:[%s5 + $0xb0] sm:$0xff] %vm452, %v1002
  %1067 = vst.msk [vmem:[%s5 + $0xb8] sm:$0xff] %vm452, %v1003
  %1068 = vst.msk [vmem:[%s5 + $0xc0] sm:$0xff] %vm452, %v1004
  %1069 = vst.msk [vmem:[%s5 + $0xc8] sm:$0xff] %vm452, %v1005
  %1070 = vst.msk [vmem:[%s5 + $0xd0] sm:$0xff] %vm452, %v1006
  %1071 = vst.msk [vmem:[%s5 + $0xd8] sm:$0xff] %vm452, %v1007
  %1072 = vst.msk [vmem:[%s5 + $0xe0] sm:$0xff] %vm452, %v1008
  %1073 = vst.msk [vmem:[%s5 + $0xe8] sm:$0xff] %vm452, %v1009
  %1074 = vst.msk [vmem:[%s5 + $0xf0] sm:$0xff] %vm452, %v1010
  %1075 = vst.msk [vmem:[%s5 + $0xf8] sm:$0xff] %vm452, %v1011
  %1076 = vst.msk [vmem:[%s5 + $0x100] sm:$0xff] %vm452, %v1012
  %1077 = vst.msk [vmem:[%s5 + $0x108] sm:$0xff] %vm452, %v1013
  %1078 = vst.msk [vmem:[%s5 + $0x110] sm:$0xff] %vm452, %v1014
  %1079 = vst.msk [vmem:[%s5 + $0x118] sm:$0xff] %vm452, %v1015
  %1080 = vst.msk [vmem:[%s5 + $0x120] sm:$0xff] %vm452, %v1016
  %1081 = vst.msk [vmem:[%s5 + $0x128] sm:$0xff] %vm452, %v1017
  %1082 = vst.msk [vmem:[%s5 + $0x130] sm:$0xff] %vm452, %v1018
  %1083 = vst.msk [vmem:[%s5 + $0x138] sm:$0xff] %vm452, %v1019
  %1084 = vst.msk [vmem:[%s5 + $0x140] sm:$0xff] %vm452, %v1020
  %1085 = vst.msk [vmem:[%s5 + $0x148] sm:$0xff] %vm452, %v1021
  %1086 = vst.msk [vmem:[%s5 + $0x150] sm:$0xff] %vm452, %v1022
  %1087 = vst.msk [vmem:[%s5 + $0x158] sm:$0xff] %vm452, %v1023
  %1088 = vst.msk [vmem:[%s5 + $0x160] sm:$0xff] %vm452, %v1024
  %1089 = vst.msk [vmem:[%s5 + $0x168] sm:$0xff] %vm452, %v1025
  %1090 = vst.msk [vmem:[%s5 + $0x170] sm:$0xff] %vm452, %v1026
  %1091 = vst.msk [vmem:[%s5 + $0x178] sm:$0xff] %vm452, %v1027
  %1092 = vst.msk [vmem:[%s5 + $0x180] sm:$0xff] %vm452, %v1028
  %1093 = vst.msk [vmem:[%s5 + $0x188] sm:$0xff] %vm452, %v1029
  %1094 = vst.msk [vmem:[%s5 + $0x190] sm:$0xff] %vm452, %v1030
  %1095 = vst.msk [vmem:[%s5 + $0x198] sm:$0xff] %vm452, %v1031
  %1096 = vst.msk [vmem:[%s5 + $0x1a0] sm:$0xff] %vm452, %v1032
  %1097 = vst.msk [vmem:[%s5 + $0x1a8] sm:$0xff] %vm452, %v1033
  %1098 = vst.msk [vmem:[%s5 + $0x1b0] sm:$0xff] %vm452, %v1034
  %1099 = vst.msk [vmem:[%s5 + $0x1b8] sm:$0xff] %vm452, %v1035
  %1100 = vst.msk [vmem:[%s5 + $0x1c0] sm:$0xff] %vm452, %v1036
  %1101 = vst.msk [vmem:[%s5 + $0x1c8] sm:$0xff] %vm452, %v1037
  %1102 = vst.msk [vmem:[%s5 + $0x1d0] sm:$0xff] %vm452, %v1038
  %1103 = vst.msk [vmem:[%s5 + $0x1d8] sm:$0xff] %vm452, %v1039
  %1104 = vst.msk [vmem:[%s5 + $0x1e0] sm:$0xff] %vm452, %v1040
  %1105 = vst.msk [vmem:[%s5 + $0x1e8] sm:$0xff] %vm452, %v1041
  %1106 = vst.msk [vmem:[%s5 + $0x1f0] sm:$0xff] %vm452, %v1042
  %1107 = vst.msk [vmem:[%s5 + $0x1f8] sm:$0xff] %vm452, %v1043
  // Predicated region
  $region22: #{resnet_forward.15} parent=0 // pred_check
    _
  $region23: #{resnet_forward.15} parent=0 // pred_check_branch
    %1109 = sbr.rel (0) target = $region25
  $region24: #{resnet_forward.15} parent=0 // pred_region
    _
  $region25: #{resnet_forward.15} parent=0 // pred_fallthru
    _
  // Predicated region
  $region26: #{resnet_forward.15} parent=0 // pred_check
    _
  $region27: #{resnet_forward.15} parent=0 // pred_check_branch
    %1111 = sbr.rel (0) target = $region29
  $region28: #{resnet_forward.15} parent=0 // pred_region
    _
  $region29: #{resnet_forward.15} parent=0 // pred_fallthru
    _

// kernel: resnet_forward.16
$region0: #{resnet_forward.16}
  #allocation0 [shape = 'u32[]', space=smem, size = 0x4, offset = 0x4, fixed_abs, tag = 'smem constant byte address 0x4 - core index']
  #allocation1 [shape = 'u32[144,128]{1,0:T(1,128)}', space=vmem, size = 0x12000, scoped, tag = 'internal scratch']
  %s0 = inlined_call_operand.vmem [shape: bf16[512,144], index: 0, kind: input, shape index: {}]
  %s1 = inlined_call_operand.vmem [shape: bf16[144,16], index: 1, kind: input, shape index: {}]
  %s2 = inlined_call_operand.vmem [shape: f32[512,16], index: 2, kind: input, shape index: {}]
  %s3 = inlined_call_operand.vmem [shape: f32[512,16], index: 3, kind: output, shape index: {}]
  %s4 = sld [smem:[#allocation0]]
  $region22: #{resnet_forward.16} parent=0
    _
  %s6 = ssub.s32 1, %s4
  %s7 = scalar_select 0, %s6, %s4
  // Predicated region
  $region2: #{resnet_forward.16} parent=0 // pred_check
    _
  $region3: #{resnet_forward.16} parent=0 // pred_check_branch
    %9 = sbr.rel (0) target = $region5
  $region4: #{resnet_forward.16} parent=0 // pred_region
    _
  $region5: #{resnet_forward.16} parent=0 // pred_fallthru
    _
  // Predicated region
  $region6: #{resnet_forward.16} parent=0 // pred_check
    _
  $region7: #{resnet_forward.16} parent=0 // pred_check_branch
    %11 = sbr.rel (0) target = $region9
  $region8: #{resnet_forward.16} parent=0 // pred_region
    _
  $region9: #{resnet_forward.16} parent=0 // pred_fallthru
    _
  // Predicated region
  $region10: #{resnet_forward.16} parent=0 // pred_check
    _
  $region11: #{resnet_forward.16} parent=0 // pred_check_branch
    %13 = sbr.rel (0) target = $region13
  $region12: #{resnet_forward.16} parent=0 // pred_region
    _
  $region13: #{resnet_forward.16} parent=0 // pred_fallthru
    _
  %v15 = vld [vmem:[%s0] sm:$0xff]
  %v16 = vld [vmem:[%s0 + $0x8] sm:$0xff]
  %v17 = vld [vmem:[%s0 + $0x10] sm:$0xff]
  %v18 = vld [vmem:[%s0 + $0x18] sm:$0xff]
  %v19 = vld [vmem:[%s0 + $0x20] sm:$0xff]
  %v20 = vld [vmem:[%s0 + $0x28] sm:$0xff]
  %v21 = vld [vmem:[%s0 + $0x30] sm:$0xff]
  %v22 = vld [vmem:[%s0 + $0x38] sm:$0xff]
  %v23 = vld [vmem:[%s0 + $0x40] sm:$0xff]
  %v24 = vld [vmem:[%s0 + $0x48] sm:$0xff]
  %v25 = vld [vmem:[%s0 + $0x50] sm:$0xff]
  %v26 = vld [vmem:[%s0 + $0x58] sm:$0xff]
  %v27 = vld [vmem:[%s0 + $0x60] sm:$0xff]
  %v28 = vld [vmem:[%s0 + $0x68] sm:$0xff]
  %v29 = vld [vmem:[%s0 + $0x70] sm:$0xff]
  %v30 = vld [vmem:[%s0 + $0x78] sm:$0xff]
  %v31 = vld [vmem:[%s0 + $0x80] sm:$0xff]
  %v32 = vld [vmem:[%s0 + $0x88] sm:$0xff]
  %v33 = vld [vmem:[%s0 + $0x90] sm:$0xff]
  %v34 = vld [vmem:[%s0 + $0x98] sm:$0xff]
  %v35 = vld [vmem:[%s0 + $0xa0] sm:$0xff]
  %v36 = vld [vmem:[%s0 + $0xa8] sm:$0xff]
  %v37 = vld [vmem:[%s0 + $0xb0] sm:$0xff]
  %v38 = vld [vmem:[%s0 + $0xb8] sm:$0xff]
  %v39 = vld [vmem:[%s0 + $0xc0] sm:$0xff]
  %v40 = vld [vmem:[%s0 + $0xc8] sm:$0xff]
  %v41 = vld [vmem:[%s0 + $0xd0] sm:$0xff]
  %v42 = vld [vmem:[%s0 + $0xd8] sm:$0xff]
  %v43 = vld [vmem:[%s0 + $0xe0] sm:$0xff]
  %v44 = vld [vmem:[%s0 + $0xe8] sm:$0xff]
  %v45 = vld [vmem:[%s0 + $0xf0] sm:$0xff]
  %v46 = vld [vmem:[%s0 + $0xf8] sm:$0xff]
  %v47 = vld [vmem:[%s0 + $0x100] sm:$0xff]
  %v48 = vld [vmem:[%s0 + $0x108] sm:$0xff]
  %v49 = vld [vmem:[%s0 + $0x110] sm:$0xff]
  %v50 = vld [vmem:[%s0 + $0x118] sm:$0xff]
  %v51 = vld [vmem:[%s0 + $0x120] sm:$0xff]
  %v52 = vld [vmem:[%s0 + $0x128] sm:$0xff]
  %v53 = vld [vmem:[%s0 + $0x130] sm:$0xff]
  %v54 = vld [vmem:[%s0 + $0x138] sm:$0xff]
  %v55 = vld [vmem:[%s0 + $0x140] sm:$0xff]
  %v56 = vld [vmem:[%s0 + $0x148] sm:$0xff]
  %v57 = vld [vmem:[%s0 + $0x150] sm:$0xff]
  %v58 = vld [vmem:[%s0 + $0x158] sm:$0xff]
  %v59 = vld [vmem:[%s0 + $0x160] sm:$0xff]
  %v60 = vld [vmem:[%s0 + $0x168] sm:$0xff]
  %v61 = vld [vmem:[%s0 + $0x170] sm:$0xff]
  %v62 = vld [vmem:[%s0 + $0x178] sm:$0xff]
  %v63 = vld [vmem:[%s0 + $0x180] sm:$0xff]
  %v64 = vld [vmem:[%s0 + $0x188] sm:$0xff]
  %v65 = vld [vmem:[%s0 + $0x190] sm:$0xff]
  %v66 = vld [vmem:[%s0 + $0x198] sm:$0xff]
  %v67 = vld [vmem:[%s0 + $0x1a0] sm:$0xff]
  %v68 = vld [vmem:[%s0 + $0x1a8] sm:$0xff]
  %v69 = vld [vmem:[%s0 + $0x1b0] sm:$0xff]
  %v70 = vld [vmem:[%s0 + $0x1b8] sm:$0xff]
  %v71 = vld [vmem:[%s0 + $0x1c0] sm:$0xff]
  %v72 = vld [vmem:[%s0 + $0x1c8] sm:$0xff]
  %v73 = vld [vmem:[%s0 + $0x1d0] sm:$0xff]
  %v74 = vld [vmem:[%s0 + $0x1d8] sm:$0xff]
  %v75 = vld [vmem:[%s0 + $0x1e0] sm:$0xff]
  %v76 = vld [vmem:[%s0 + $0x1e8] sm:$0xff]
  %v77 = vld [vmem:[%s0 + $0x1f0] sm:$0xff]
  %v78 = vld [vmem:[%s0 + $0x1f8] sm:$0xff]
  %v79 = vld [vmem:[%s1] sm:$0xf]
  %v80 = vld [vmem:[%s1 + $0x4] sm:$0xf]
  %v81 = vld [vmem:[%s1 + $0x8] sm:$0xf]
  %v82 = vld [vmem:[%s1 + $0xc] sm:$0xf]
  %v83 = vld [vmem:[%s1 + $0x10] sm:$0xf]
  %v84 = vld [vmem:[%s1 + $0x14] sm:$0xf]
  %v85 = vld [vmem:[%s1 + $0x18] sm:$0xf]
  %v86 = vld [vmem:[%s1 + $0x1c] sm:$0xf]
  %v87 = vld [vmem:[%s1 + $0x20] sm:$0xf]
  %v88 = vld [vmem:[%s1 + $0x24] sm:$0xf]
  %v89 = vld [vmem:[%s1 + $0x28] sm:$0xf]
  %v90 = vld [vmem:[%s1 + $0x2c] sm:$0xf]
  %v91 = vld [vmem:[%s1 + $0x30] sm:$0xf]
  %v92 = vld [vmem:[%s1 + $0x34] sm:$0xf]
  %v93 = vld [vmem:[%s1 + $0x38] sm:$0xf]
  %v94 = vld [vmem:[%s1 + $0x3c] sm:$0xf]
  %v95 = vld [vmem:[%s1 + $0x40] sm:$0xf]
  %v96 = vld [vmem:[%s1 + $0x44] sm:$0xf]
  %v97 = vld [vmem:[%s2] sm:$0xff]
  %v98 = vld [vmem:[%s2 + $0x8] sm:$0xff]
  %v99 = vld [vmem:[%s2 + $0x10] sm:$0xff]
  %v100 = vld [vmem:[%s2 + $0x18] sm:$0xff]
  %v101 = vld [vmem:[%s2 + $0x20] sm:$0xff]
  %v102 = vld [vmem:[%s2 + $0x28] sm:$0xff]
  %v103 = vld [vmem:[%s2 + $0x30] sm:$0xff]
  %v104 = vld [vmem:[%s2 + $0x38] sm:$0xff]
  %v105 = vld [vmem:[%s2 + $0x40] sm:$0xff]
  %v106 = vld [vmem:[%s2 + $0x48] sm:$0xff]
  %v107 = vld [vmem:[%s2 + $0x50] sm:$0xff]
  %v108 = vld [vmem:[%s2 + $0x58] sm:$0xff]
  %v109 = vld [vmem:[%s2 + $0x60] sm:$0xff]
  %v110 = vld [vmem:[%s2 + $0x68] sm:$0xff]
  %v111 = vld [vmem:[%s2 + $0x70] sm:$0xff]
  %v112 = vld [vmem:[%s2 + $0x78] sm:$0xff]
  %v113 = vld [vmem:[%s2 + $0x80] sm:$0xff]
  %v114 = vld [vmem:[%s2 + $0x88] sm:$0xff]
  %v115 = vld [vmem:[%s2 + $0x90] sm:$0xff]
  %v116 = vld [vmem:[%s2 + $0x98] sm:$0xff]
  %v117 = vld [vmem:[%s2 + $0xa0] sm:$0xff]
  %v118 = vld [vmem:[%s2 + $0xa8] sm:$0xff]
  %v119 = vld [vmem:[%s2 + $0xb0] sm:$0xff]
  %v120 = vld [vmem:[%s2 + $0xb8] sm:$0xff]
  %v121 = vld [vmem:[%s2 + $0xc0] sm:$0xff]
  %v122 = vld [vmem:[%s2 + $0xc8] sm:$0xff]
  %v123 = vld [vmem:[%s2 + $0xd0] sm:$0xff]
  %v124 = vld [vmem:[%s2 + $0xd8] sm:$0xff]
  %v125 = vld [vmem:[%s2 + $0xe0] sm:$0xff]
  %v126 = vld [vmem:[%s2 + $0xe8] sm:$0xff]
  %v127 = vld [vmem:[%s2 + $0xf0] sm:$0xff]
  %v128 = vld [vmem:[%s2 + $0xf8] sm:$0xff]
  %v129 = vld [vmem:[%s2 + $0x100] sm:$0xff]
  %v130 = vld [vmem:[%s2 + $0x108] sm:$0xff]
  %v131 = vld [vmem:[%s2 + $0x110] sm:$0xff]
  %v132 = vld [vmem:[%s2 + $0x118] sm:$0xff]
  %v133 = vld [vmem:[%s2 + $0x120] sm:$0xff]
  %v134 = vld [vmem:[%s2 + $0x128] sm:$0xff]
  %v135 = vld [vmem:[%s2 + $0x130] sm:$0xff]
  %v136 = vld [vmem:[%s2 + $0x138] sm:$0xff]
  %v137 = vld [vmem:[%s2 + $0x140] sm:$0xff]
  %v138 = vld [vmem:[%s2 + $0x148] sm:$0xff]
  %v139 = vld [vmem:[%s2 + $0x150] sm:$0xff]
  %v140 = vld [vmem:[%s2 + $0x158] sm:$0xff]
  %v141 = vld [vmem:[%s2 + $0x160] sm:$0xff]
  %v142 = vld [vmem:[%s2 + $0x168] sm:$0xff]
  %v143 = vld [vmem:[%s2 + $0x170] sm:$0xff]
  %v144 = vld [vmem:[%s2 + $0x178] sm:$0xff]
  %v145 = vld [vmem:[%s2 + $0x180] sm:$0xff]
  %v146 = vld [vmem:[%s2 + $0x188] sm:$0xff]
  %v147 = vld [vmem:[%s2 + $0x190] sm:$0xff]
  %v148 = vld [vmem:[%s2 + $0x198] sm:$0xff]
  %v149 = vld [vmem:[%s2 + $0x1a0] sm:$0xff]
  %v150 = vld [vmem:[%s2 + $0x1a8] sm:$0xff]
  %v151 = vld [vmem:[%s2 + $0x1b0] sm:$0xff]
  %v152 = vld [vmem:[%s2 + $0x1b8] sm:$0xff]
  %v153 = vld [vmem:[%s2 + $0x1c0] sm:$0xff]
  %v154 = vld [vmem:[%s2 + $0x1c8] sm:$0xff]
  %v155 = vld [vmem:[%s2 + $0x1d0] sm:$0xff]
  %v156 = vld [vmem:[%s2 + $0x1d8] sm:$0xff]
  %v157 = vld [vmem:[%s2 + $0x1e0] sm:$0xff]
  %v158 = vld [vmem:[%s2 + $0x1e8] sm:$0xff]
  %v159 = vld [vmem:[%s2 + $0x1f0] sm:$0xff]
  %v160 = vld [vmem:[%s2 + $0x1f8] sm:$0xff]
  %v225 = vunpack.c.l.b16 %v15
  %v226 = vunpack.c.h.b16 %v15
  %v227 = vunpack.c.l.b16 %v16
  %v228 = vunpack.c.h.b16 %v16
  %v229 = vunpack.c.l.b16 %v17
  %v230 = vunpack.c.h.b16 %v17
  %v231 = vunpack.c.l.b16 %v18
  %v232 = vunpack.c.h.b16 %v18
  %v233 = vunpack.c.l.b16 %v19
  %v234 = vunpack.c.h.b16 %v19
  %v235 = vunpack.c.l.b16 %v20
  %v236 = vunpack.c.h.b16 %v20
  %v237 = vunpack.c.l.b16 %v21
  %v238 = vunpack.c.h.b16 %v21
  %v239 = vunpack.c.l.b16 %v22
  %v240 = vunpack.c.h.b16 %v22
  %v241 = vunpack.c.l.b16 %v23
  %v242 = vunpack.c.h.b16 %v23
  %v243 = vunpack.c.l.b16 %v24
  %v244 = vunpack.c.h.b16 %v24
  %v245 = vunpack.c.l.b16 %v25
  %v246 = vunpack.c.h.b16 %v25
  %v247 = vunpack.c.l.b16 %v26
  %v248 = vunpack.c.h.b16 %v26
  %v249 = vunpack.c.l.b16 %v27
  %v250 = vunpack.c.h.b16 %v27
  %v251 = vunpack.c.l.b16 %v28
  %v252 = vunpack.c.h.b16 %v28
  %v253 = vunpack.c.l.b16 %v29
  %v254 = vunpack.c.h.b16 %v29
  %v255 = vunpack.c.l.b16 %v30
  %v256 = vunpack.c.h.b16 %v30
  %v257 = vunpack.c.l.b16 %v31
  %v258 = vunpack.c.h.b16 %v31
  %v259 = vunpack.c.l.b16 %v32
  %v260 = vunpack.c.h.b16 %v32
  %v261 = vunpack.c.l.b16 %v33
  %v262 = vunpack.c.h.b16 %v33
  %v263 = vunpack.c.l.b16 %v34
  %v264 = vunpack.c.h.b16 %v34
  %v265 = vunpack.c.l.b16 %v35
  %v266 = vunpack.c.h.b16 %v35
  %v267 = vunpack.c.l.b16 %v36
  %v268 = vunpack.c.h.b16 %v36
  %v269 = vunpack.c.l.b16 %v37
  %v270 = vunpack.c.h.b16 %v37
  %v271 = vunpack.c.l.b16 %v38
  %v272 = vunpack.c.h.b16 %v38
  %v273 = vunpack.c.l.b16 %v39
  %v274 = vunpack.c.h.b16 %v39
  %v275 = vunpack.c.l.b16 %v40
  %v276 = vunpack.c.h.b16 %v40
  %v277 = vunpack.c.l.b16 %v41
  %v278 = vunpack.c.h.b16 %v41
  %v279 = vunpack.c.l.b16 %v42
  %v280 = vunpack.c.h.b16 %v42
  %v281 = vunpack.c.l.b16 %v43
  %v282 = vunpack.c.h.b16 %v43
  %v283 = vunpack.c.l.b16 %v44
  %v284 = vunpack.c.h.b16 %v44
  %v285 = vunpack.c.l.b16 %v45
  %v286 = vunpack.c.h.b16 %v45
  %v287 = vunpack.c.l.b16 %v46
  %v288 = vunpack.c.h.b16 %v46
  %v289 = vunpack.c.l.b16 %v47
  %v290 = vunpack.c.h.b16 %v47
  %v291 = vunpack.c.l.b16 %v48
  %v292 = vunpack.c.h.b16 %v48
  %v293 = vunpack.c.l.b16 %v49
  %v294 = vunpack.c.h.b16 %v49
  %v295 = vunpack.c.l.b16 %v50
  %v296 = vunpack.c.h.b16 %v50
  %v297 = vunpack.c.l.b16 %v51
  %v298 = vunpack.c.h.b16 %v51
  %v299 = vunpack.c.l.b16 %v52
  %v300 = vunpack.c.h.b16 %v52
  %v301 = vunpack.c.l.b16 %v53
  %v302 = vunpack.c.h.b16 %v53
  %v303 = vunpack.c.l.b16 %v54
  %v304 = vunpack.c.h.b16 %v54
  %v305 = vunpack.c.l.b16 %v55
  %v306 = vunpack.c.h.b16 %v55
  %v307 = vunpack.c.l.b16 %v56
  %v308 = vunpack.c.h.b16 %v56
  %v309 = vunpack.c.l.b16 %v57
  %v310 = vunpack.c.h.b16 %v57
  %v311 = vunpack.c.l.b16 %v58
  %v312 = vunpack.c.h.b16 %v58
  %v313 = vunpack.c.l.b16 %v59
  %v314 = vunpack.c.h.b16 %v59
  %v315 = vunpack.c.l.b16 %v60
  %v316 = vunpack.c.h.b16 %v60
  %v317 = vunpack.c.l.b16 %v61
  %v318 = vunpack.c.h.b16 %v61
  %v319 = vunpack.c.l.b16 %v62
  %v320 = vunpack.c.h.b16 %v62
  %v321 = vunpack.c.l.b16 %v63
  %v322 = vunpack.c.h.b16 %v63
  %v323 = vunpack.c.l.b16 %v64
  %v324 = vunpack.c.h.b16 %v64
  %v325 = vunpack.c.l.b16 %v65
  %v326 = vunpack.c.h.b16 %v65
  %v327 = vunpack.c.l.b16 %v66
  %v328 = vunpack.c.h.b16 %v66
  %v329 = vunpack.c.l.b16 %v67
  %v330 = vunpack.c.h.b16 %v67
  %v331 = vunpack.c.l.b16 %v68
  %v332 = vunpack.c.h.b16 %v68
  %v333 = vunpack.c.l.b16 %v69
  %v334 = vunpack.c.h.b16 %v69
  %v335 = vunpack.c.l.b16 %v70
  %v336 = vunpack.c.h.b16 %v70
  %v337 = vunpack.c.l.b16 %v71
  %v338 = vunpack.c.h.b16 %v71
  %v339 = vunpack.c.l.b16 %v72
  %v340 = vunpack.c.h.b16 %v72
  %v341 = vunpack.c.l.b16 %v73
  %v342 = vunpack.c.h.b16 %v73
  %v343 = vunpack.c.l.b16 %v74
  %v344 = vunpack.c.h.b16 %v74
  %v345 = vunpack.c.l.b16 %v75
  %v346 = vunpack.c.h.b16 %v75
  %v347 = vunpack.c.l.b16 %v76
  %v348 = vunpack.c.h.b16 %v76
  %v349 = vunpack.c.l.b16 %v77
  %v350 = vunpack.c.h.b16 %v77
  %v351 = vunpack.c.l.b16 %v78
  %v352 = vunpack.c.h.b16 %v78
  %v353 = vpack.c.b16 %v227, %v225
  %v354 = vpack.c.b16 %v228, %v226
  %v355 = vpack.c.b16 %v231, %v229
  %v356 = vpack.c.b16 %v232, %v230
  %v357 = vpack.c.b16 %v235, %v233
  %v358 = vpack.c.b16 %v236, %v234
  %v359 = vpack.c.b16 %v239, %v237
  %v360 = vpack.c.b16 %v240, %v238
  %v361 = vpack.c.b16 %v243, %v241
  %v362 = vpack.c.b16 %v244, %v242
  %v363 = vpack.c.b16 %v247, %v245
  %v364 = vpack.c.b16 %v248, %v246
  %v365 = vpack.c.b16 %v251, %v249
  %v366 = vpack.c.b16 %v252, %v250
  %v367 = vpack.c.b16 %v255, %v253
  %v368 = vpack.c.b16 %v256, %v254
  %v369 = vpack.c.b16 %v259, %v257
  %v370 = vpack.c.b16 %v260, %v258
  %v371 = vpack.c.b16 %v263, %v261
  %v372 = vpack.c.b16 %v264, %v262
  %v373 = vpack.c.b16 %v267, %v265
  %v374 = vpack.c.b16 %v268, %v266
  %v375 = vpack.c.b16 %v271, %v269
  %v376 = vpack.c.b16 %v272, %v270
  %v377 = vpack.c.b16 %v275, %v273
  %v378 = vpack.c.b16 %v276, %v274
  %v379 = vpack.c.b16 %v279, %v277
  %v380 = vpack.c.b16 %v280, %v278
  %v381 = vpack.c.b16 %v283, %v281
  %v382 = vpack.c.b16 %v284, %v282
  %v383 = vpack.c.b16 %v287, %v285
  %v384 = vpack.c.b16 %v288, %v286
  %v385 = vpack.c.b16 %v291, %v289
  %v386 = vpack.c.b16 %v292, %v290
  %v387 = vpack.c.b16 %v295, %v293
  %v388 = vpack.c.b16 %v296, %v294
  %v389 = vpack.c.b16 %v299, %v297
  %v390 = vpack.c.b16 %v300, %v298
  %v391 = vpack.c.b16 %v303, %v301
  %v392 = vpack.c.b16 %v304, %v302
  %v393 = vpack.c.b16 %v307, %v305
  %v394 = vpack.c.b16 %v308, %v306
  %v395 = vpack.c.b16 %v311, %v309
  %v396 = vpack.c.b16 %v312, %v310
  %v397 = vpack.c.b16 %v315, %v313
  %v398 = vpack.c.b16 %v316, %v314
  %v399 = vpack.c.b16 %v319, %v317
  %v400 = vpack.c.b16 %v320, %v318
  %v401 = vpack.c.b16 %v323, %v321
  %v402 = vpack.c.b16 %v324, %v322
  %v403 = vpack.c.b16 %v327, %v325
  %v404 = vpack.c.b16 %v328, %v326
  %v405 = vpack.c.b16 %v331, %v329
  %v406 = vpack.c.b16 %v332, %v330
  %v407 = vpack.c.b16 %v335, %v333
  %v408 = vpack.c.b16 %v336, %v334
  %v409 = vpack.c.b16 %v339, %v337
  %v410 = vpack.c.b16 %v340, %v338
  %v411 = vpack.c.b16 %v343, %v341
  %v412 = vpack.c.b16 %v344, %v342
  %v413 = vpack.c.b16 %v347, %v345
  %v414 = vpack.c.b16 %v348, %v346
  %v415 = vpack.c.b16 %v351, %v349
  %v416 = vpack.c.b16 %v352, %v350
  %v467 = vunpack.c.l.b16 %v79
  %v468 = vunpack.c.l.b16 %v80
  %v469 = vunpack.c.l.b16 %v81
  %v470 = vunpack.c.l.b16 %v82
  %v471 = vunpack.c.l.b16 %v83
  %v472 = vunpack.c.l.b16 %v84
  %v473 = vunpack.c.l.b16 %v85
  %v474 = vunpack.c.l.b16 %v86
  %v475 = vunpack.c.l.b16 %v87
  %v476 = vunpack.c.l.b16 %v88
  %v477 = vunpack.c.l.b16 %v89
  %v478 = vunpack.c.l.b16 %v90
  %v479 = vunpack.c.l.b16 %v91
  %v480 = vunpack.c.l.b16 %v92
  %v481 = vunpack.c.l.b16 %v93
  %v482 = vunpack.c.l.b16 %v94
  %v483 = vunpack.c.l.b16 %v95
  %v484 = vunpack.c.l.b16 %v96
  %v485 = vpack.c.b16 %v468, %v467
  %v486 = vpack.c.b16 %v470, %v469
  %v487 = vpack.c.b16 %v472, %v471
  %v488 = vpack.c.b16 %v474, %v473
  %v489 = vpack.c.b16 %v476, %v475
  %v490 = vpack.c.b16 %v478, %v477
  %v491 = vpack.c.b16 %v480, %v479
  %v492 = vpack.c.b16 %v482, %v481
  %v493 = vpack.c.b16 %v484, %v483
  %vm503 = vcmask 130048
  %v505 = vsel %vm503, %v354, 0
  %v508 = vsel %vm503, %v356, 0
  %v511 = vsel %vm503, %v358, 0
  %v514 = vsel %vm503, %v360, 0
  %v517 = vsel %vm503, %v362, 0
  %v520 = vsel %vm503, %v364, 0
  %v523 = vsel %vm503, %v366, 0
  %v526 = vsel %vm503, %v368, 0
  %v529 = vsel %vm503, %v370, 0
  %v532 = vsel %vm503, %v372, 0
  %v535 = vsel %vm503, %v374, 0
  %v538 = vsel %vm503, %v376, 0
  %v541 = vsel %vm503, %v378, 0
  %v544 = vsel %vm503, %v380, 0
  %v547 = vsel %vm503, %v382, 0
  %v550 = vsel %vm503, %v384, 0
  %v553 = vsel %vm503, %v386, 0
  %v556 = vsel %vm503, %v388, 0
  %v559 = vsel %vm503, %v390, 0
  %v562 = vsel %vm503, %v392, 0
  %v565 = vsel %vm503, %v394, 0
  %v568 = vsel %vm503, %v396, 0
  %v571 = vsel %vm503, %v398, 0
  %v574 = vsel %vm503, %v400, 0
  %v577 = vsel %vm503, %v402, 0
  %v580 = vsel %vm503, %v404, 0
  %v583 = vsel %vm503, %v406, 0
  %v586 = vsel %vm503, %v408, 0
  %v589 = vsel %vm503, %v410, 0
  %v592 = vsel %vm503, %v412, 0
  %v595 = vsel %vm503, %v414, 0
  %v598 = vsel %vm503, %v416, 0
  %600 = vmatprep.subr.bf16.mxu0 0
  %601 = vmatpush1.bf16.msra.mxu0 %v492
  %602 = vmatprep.subr.bf16.mxu0 0
  %603 = vmatpush1.bf16.msra.mxu0 %v491
  %604 = vmatprep.subr.bf16.mxu0 0
  %605 = vmatpush1.bf16.msra.mxu0 %v490
  %606 = vmatprep.subr.bf16.mxu0 0
  %607 = vmatpush1.bf16.msra.mxu0 %v489
  %608 = vmatprep.subr.bf16.mxu0 0
  %609 = vmatpush1.bf16.msra.mxu0 %v488
  %610 = vmatprep.subr.bf16.mxu0 0
  %611 = vmatpush1.bf16.msra.mxu0 %v487
  %612 = vmatprep.subr.bf16.mxu0 0
  %613 = vmatpush1.bf16.msra.mxu0 %v486
  %614 = vmatprep.subr.bf16.mxu0 0
  %615 = vmatpush1.bf16.msra.mxu0 %v485
  %616 = vmatprep.subr.bf16.mxu0 0
  %617 = vmatpush2.bf16.msra.mxu0 0
  %618 = vmatprep.subr.bf16.mxu0 0
  %619 = vmatpush2.bf16.msra.mxu0 0
  %620 = vmatprep.subr.bf16.mxu0 0
  %621 = vmatpush2.bf16.msra.mxu0 0
  %622 = vmatprep.subr.bf16.mxu0 0
  %623 = vmatpush2.bf16.msra.mxu0 0
  %624 = vmatprep.subr.bf16.mxu0 0
  %625 = vmatpush2.bf16.msra.mxu0 0
  %626 = vmatprep.subr.bf16.mxu0 0
  %627 = vmatpush2.bf16.msra.mxu0 0
  %628 = vmatprep.subr.bf16.mxu0 0
  %629 = vmatpush2.bf16.msra.mxu0 0
  %630 = vmatprep.subr.bf16.mxu0 0
  %631 = vmatpush2.bf16.msra.mxu0 %v493
  %632 = vmatprep.mubr.bf16.mxu0 %v505
  %633 = vmatmul.mubr.bf16.gmra.mxu0 %v353
  %v634 = vpop.f32.mrf.mxu0
  %v635 = vadd.f32 %v97, %v634
  %v636 = vpop.f32.mrf.mxu0
  %v637 = vpop.f32.mrf.mxu0
  %v638 = vadd.f32 %v98, %v637
  %v639 = vpop.f32.mrf.mxu0
  %640 = vmatprep.mubr.bf16.mxu0 %v508
  %641 = vmatmul.mubr.bf16.gmra.mxu0 %v355
  %v642 = vpop.f32.mrf.mxu0
  %v643 = vadd.f32 %v99, %v642
  %v644 = vpop.f32.mrf.mxu0
  %v645 = vpop.f32.mrf.mxu0
  %v646 = vadd.f32 %v100, %v645
  %v647 = vpop.f32.mrf.mxu0
  %648 = vmatprep.mubr.bf16.mxu0 %v511
  %649 = vmatmul.mubr.bf16.gmra.mxu0 %v357
  %v650 = vpop.f32.mrf.mxu0
  %v651 = vadd.f32 %v101, %v650
  %v652 = vpop.f32.mrf.mxu0
  %v653 = vpop.f32.mrf.mxu0
  %v654 = vadd.f32 %v102, %v653
  %v655 = vpop.f32.mrf.mxu0
  %656 = vmatprep.mubr.bf16.mxu0 %v514
  %657 = vmatmul.mubr.bf16.gmra.mxu0 %v359
  %v658 = vpop.f32.mrf.mxu0
  %v659 = vadd.f32 %v103, %v658
  %v660 = vpop.f32.mrf.mxu0
  %v661 = vpop.f32.mrf.mxu0
  %v662 = vadd.f32 %v104, %v661
  %v663 = vpop.f32.mrf.mxu0
  %664 = vmatprep.mubr.bf16.mxu0 %v517
  %665 = vmatmul.mubr.bf16.gmra.mxu0 %v361
  %v666 = vpop.f32.mrf.mxu0
  %v667 = vadd.f32 %v105, %v666
  %v668 = vpop.f32.mrf.mxu0
  %v669 = vpop.f32.mrf.mxu0
  %v670 = vadd.f32 %v106, %v669
  %v671 = vpop.f32.mrf.mxu0
  %672 = vmatprep.mubr.bf16.mxu0 %v520
  %673 = vmatmul.mubr.bf16.gmra.mxu0 %v363
  %v674 = vpop.f32.mrf.mxu0
  %v675 = vadd.f32 %v107, %v674
  %v676 = vpop.f32.mrf.mxu0
  %v677 = vpop.f32.mrf.mxu0
  %v678 = vadd.f32 %v108, %v677
  %v679 = vpop.f32.mrf.mxu0
  %680 = vmatprep.mubr.bf16.mxu0 %v523
  %681 = vmatmul.mubr.bf16.gmra.mxu0 %v365
  %v682 = vpop.f32.mrf.mxu0
  %v683 = vadd.f32 %v109, %v682
  %v684 = vpop.f32.mrf.mxu0
  %v685 = vpop.f32.mrf.mxu0
  %v686 = vadd.f32 %v110, %v685
  %v687 = vpop.f32.mrf.mxu0
  %688 = vmatprep.mubr.bf16.mxu0 %v526
  %689 = vmatmul.mubr.bf16.gmra.mxu0 %v367
  %v690 = vpop.f32.mrf.mxu0
  %v691 = vadd.f32 %v111, %v690
  %v692 = vpop.f32.mrf.mxu0
  %v693 = vpop.f32.mrf.mxu0
  %v694 = vadd.f32 %v112, %v693
  %v695 = vpop.f32.mrf.mxu0
  %696 = vmatprep.mubr.bf16.mxu0 %v529
  %697 = vmatmul.mubr.bf16.gmra.mxu0 %v369
  %v698 = vpop.f32.mrf.mxu0
  %v699 = vadd.f32 %v113, %v698
  %v700 = vpop.f32.mrf.mxu0
  %v701 = vpop.f32.mrf.mxu0
  %v702 = vadd.f32 %v114, %v701
  %v703 = vpop.f32.mrf.mxu0
  %704 = vmatprep.mubr.bf16.mxu0 %v532
  %705 = vmatmul.mubr.bf16.gmra.mxu0 %v371
  %v706 = vpop.f32.mrf.mxu0
  %v707 = vadd.f32 %v115, %v706
  %v708 = vpop.f32.mrf.mxu0
  %v709 = vpop.f32.mrf.mxu0
  %v710 = vadd.f32 %v116, %v709
  %v711 = vpop.f32.mrf.mxu0
  %712 = vmatprep.mubr.bf16.mxu0 %v535
  %713 = vmatmul.mubr.bf16.gmra.mxu0 %v373
  %v714 = vpop.f32.mrf.mxu0
  %v715 = vadd.f32 %v117, %v714
  %v716 = vpop.f32.mrf.mxu0
  %v717 = vpop.f32.mrf.mxu0
  %v718 = vadd.f32 %v118, %v717
  %v719 = vpop.f32.mrf.mxu0
  %720 = vmatprep.mubr.bf16.mxu0 %v538
  %721 = vmatmul.mubr.bf16.gmra.mxu0 %v375
  %v722 = vpop.f32.mrf.mxu0
  %v723 = vadd.f32 %v119, %v722
  %v724 = vpop.f32.mrf.mxu0
  %v725 = vpop.f32.mrf.mxu0
  %v726 = vadd.f32 %v120, %v725
  %v727 = vpop.f32.mrf.mxu0
  %728 = vmatprep.mubr.bf16.mxu0 %v541
  %729 = vmatmul.mubr.bf16.gmra.mxu0 %v377
  %v730 = vpop.f32.mrf.mxu0
  %v731 = vadd.f32 %v121, %v730
  %v732 = vpop.f32.mrf.mxu0
  %v733 = vpop.f32.mrf.mxu0
  %v734 = vadd.f32 %v122, %v733
  %v735 = vpop.f32.mrf.mxu0
  %736 = vmatprep.mubr.bf16.mxu0 %v544
  %737 = vmatmul.mubr.bf16.gmra.mxu0 %v379
  %v738 = vpop.f32.mrf.mxu0
  %v739 = vadd.f32 %v123, %v738
  %v740 = vpop.f32.mrf.mxu0
  %v741 = vpop.f32.mrf.mxu0
  %v742 = vadd.f32 %v124, %v741
  %v743 = vpop.f32.mrf.mxu0
  %744 = vmatprep.mubr.bf16.mxu0 %v547
  %745 = vmatmul.mubr.bf16.gmra.mxu0 %v381
  %v746 = vpop.f32.mrf.mxu0
  %v747 = vadd.f32 %v125, %v746
  %v748 = vpop.f32.mrf.mxu0
  %v749 = vpop.f32.mrf.mxu0
  %v750 = vadd.f32 %v126, %v749
  %v751 = vpop.f32.mrf.mxu0
  %752 = vmatprep.mubr.bf16.mxu0 %v550
  %753 = vmatmul.mubr.bf16.gmra.mxu0 %v383
  %v754 = vpop.f32.mrf.mxu0
  %v755 = vadd.f32 %v127, %v754
  %v756 = vpop.f32.mrf.mxu0
  %v757 = vpop.f32.mrf.mxu0
  %v758 = vadd.f32 %v128, %v757
  %v759 = vpop.f32.mrf.mxu0
  %760 = vmatprep.mubr.bf16.mxu0 %v553
  %761 = vmatmul.mubr.bf16.gmra.mxu0 %v385
  %v762 = vpop.f32.mrf.mxu0
  %v763 = vadd.f32 %v129, %v762
  %v764 = vpop.f32.mrf.mxu0
  %v765 = vpop.f32.mrf.mxu0
  %v766 = vadd.f32 %v130, %v765
  %v767 = vpop.f32.mrf.mxu0
  %768 = vmatprep.mubr.bf16.mxu0 %v556
  %769 = vmatmul.mubr.bf16.gmra.mxu0 %v387
  %v770 = vpop.f32.mrf.mxu0
  %v771 = vadd.f32 %v131, %v770
  %v772 = vpop.f32.mrf.mxu0
  %v773 = vpop.f32.mrf.mxu0
  %v774 = vadd.f32 %v132, %v773
  %v775 = vpop.f32.mrf.mxu0
  %776 = vmatprep.mubr.bf16.mxu0 %v559
  %777 = vmatmul.mubr.bf16.gmra.mxu0 %v389
  %v778 = vpop.f32.mrf.mxu0
  %v779 = vadd.f32 %v133, %v778
  %v780 = vpop.f32.mrf.mxu0
  %v781 = vpop.f32.mrf.mxu0
  %v782 = vadd.f32 %v134, %v781
  %v783 = vpop.f32.mrf.mxu0
  %784 = vmatprep.mubr.bf16.mxu0 %v562
  %785 = vmatmul.mubr.bf16.gmra.mxu0 %v391
  %v786 = vpop.f32.mrf.mxu0
  %v787 = vadd.f32 %v135, %v786
  %v788 = vpop.f32.mrf.mxu0
  %v789 = vpop.f32.mrf.mxu0
  %v790 = vadd.f32 %v136, %v789
  %v791 = vpop.f32.mrf.mxu0
  %792 = vmatprep.mubr.bf16.mxu0 %v565
  %793 = vmatmul.mubr.bf16.gmra.mxu0 %v393
  %v794 = vpop.f32.mrf.mxu0
  %v795 = vadd.f32 %v137, %v794
  %v796 = vpop.f32.mrf.mxu0
  %v797 = vpop.f32.mrf.mxu0
  %v798 = vadd.f32 %v138, %v797
  %v799 = vpop.f32.mrf.mxu0
  %800 = vmatprep.mubr.bf16.mxu0 %v568
  %801 = vmatmul.mubr.bf16.gmra.mxu0 %v395
  %v802 = vpop.f32.mrf.mxu0
  %v803 = vadd.f32 %v139, %v802
  %v804 = vpop.f32.mrf.mxu0
  %v805 = vpop.f32.mrf.mxu0
  %v806 = vadd.f32 %v140, %v805
  %v807 = vpop.f32.mrf.mxu0
  %808 = vmatprep.mubr.bf16.mxu0 %v571
  %809 = vmatmul.mubr.bf16.gmra.mxu0 %v397
  %v810 = vpop.f32.mrf.mxu0
  %v811 = vadd.f32 %v141, %v810
  %v812 = vpop.f32.mrf.mxu0
  %v813 = vpop.f32.mrf.mxu0
  %v814 = vadd.f32 %v142, %v813
  %v815 = vpop.f32.mrf.mxu0
  %816 = vmatprep.mubr.bf16.mxu0 %v574
  %817 = vmatmul.mubr.bf16.gmra.mxu0 %v399
  %v818 = vpop.f32.mrf.mxu0
  %v819 = vadd.f32 %v143, %v818
  %v820 = vpop.f32.mrf.mxu0
  %v821 = vpop.f32.mrf.mxu0
  %v822 = vadd.f32 %v144, %v821
  %v823 = vpop.f32.mrf.mxu0
  %824 = vmatprep.mubr.bf16.mxu0 %v577
  %825 = vmatmul.mubr.bf16.gmra.mxu0 %v401
  %v826 = vpop.f32.mrf.mxu0
  %v827 = vadd.f32 %v145, %v826
  %v828 = vpop.f32.mrf.mxu0
  %v829 = vpop.f32.mrf.mxu0
  %v830 = vadd.f32 %v146, %v829
  %v831 = vpop.f32.mrf.mxu0
  %832 = vmatprep.mubr.bf16.mxu0 %v580
  %833 = vmatmul.mubr.bf16.gmra.mxu0 %v403
  %v834 = vpop.f32.mrf.mxu0
  %v835 = vadd.f32 %v147, %v834
  %v836 = vpop.f32.mrf.mxu0
  %v837 = vpop.f32.mrf.mxu0
  %v838 = vadd.f32 %v148, %v837
  %v839 = vpop.f32.mrf.mxu0
  %840 = vmatprep.mubr.bf16.mxu0 %v583
  %841 = vmatmul.mubr.bf16.gmra.mxu0 %v405
  %v842 = vpop.f32.mrf.mxu0
  %v843 = vadd.f32 %v149, %v842
  %v844 = vpop.f32.mrf.mxu0
  %v845 = vpop.f32.mrf.mxu0
  %v846 = vadd.f32 %v150, %v845
  %v847 = vpop.f32.mrf.mxu0
  %848 = vmatprep.mubr.bf16.mxu0 %v586
  %849 = vmatmul.mubr.bf16.gmra.mxu0 %v407
  %v850 = vpop.f32.mrf.mxu0
  %v851 = vadd.f32 %v151, %v850
  %v852 = vpop.f32.mrf.mxu0
  %v853 = vpop.f32.mrf.mxu0
  %v854 = vadd.f32 %v152, %v853
  %v855 = vpop.f32.mrf.mxu0
  %856 = vmatprep.mubr.bf16.mxu0 %v589
  %857 = vmatmul.mubr.bf16.gmra.mxu0 %v409
  %v858 = vpop.f32.mrf.mxu0
  %v859 = vadd.f32 %v153, %v858
  %v860 = vpop.f32.mrf.mxu0
  %v861 = vpop.f32.mrf.mxu0
  %v862 = vadd.f32 %v154, %v861
  %v863 = vpop.f32.mrf.mxu0
  %864 = vmatprep.mubr.bf16.mxu0 %v592
  %865 = vmatmul.mubr.bf16.gmra.mxu0 %v411
  %v866 = vpop.f32.mrf.mxu0
  %v867 = vadd.f32 %v155, %v866
  %v868 = vpop.f32.mrf.mxu0
  %v869 = vpop.f32.mrf.mxu0
  %v870 = vadd.f32 %v156, %v869
  %v871 = vpop.f32.mrf.mxu0
  %872 = vmatprep.mubr.bf16.mxu0 %v595
  %873 = vmatmul.mubr.bf16.gmra.mxu0 %v413
  %v874 = vpop.f32.mrf.mxu0
  %v875 = vadd.f32 %v157, %v874
  %v876 = vpop.f32.mrf.mxu0
  %v877 = vpop.f32.mrf.mxu0
  %v878 = vadd.f32 %v158, %v877
  %v879 = vpop.f32.mrf.mxu0
  %880 = vmatprep.mubr.bf16.mxu0 %v598
  %881 = vmatmul.mubr.bf16.gmra.mxu0 %v415
  %v882 = vpop.f32.mrf.mxu0
  %v883 = vadd.f32 %v159, %v882
  %v884 = vpop.f32.mrf.mxu0
  %v885 = vpop.f32.mrf.mxu0
  %v886 = vadd.f32 %v160, %v885
  %v887 = vpop.f32.mrf.mxu0
  %888 = vdwg.mxu0
  %889 = vst.msk [vmem:[%s3] sm:$0xff] %vm503, %v635
  %890 = vst.msk [vmem:[%s3 + $0x8] sm:$0xff] %vm503, %v638
  %891 = vst.msk [vmem:[%s3 + $0x10] sm:$0xff] %vm503, %v643
  %892 = vst.msk [vmem:[%s3 + $0x18] sm:$0xff] %vm503, %v646
  %893 = vst.msk [vmem:[%s3 + $0x20] sm:$0xff] %vm503, %v651
  %894 = vst.msk [vmem:[%s3 + $0x28] sm:$0xff] %vm503, %v654
  %895 = vst.msk [vmem:[%s3 + $0x30] sm:$0xff] %vm503, %v659
  %896 = vst.msk [vmem:[%s3 + $0x38] sm:$0xff] %vm503, %v662
  %897 = vst.msk [vmem:[%s3 + $0x40] sm:$0xff] %vm503, %v667
  %898 = vst.msk [vmem:[%s3 + $0x48] sm:$0xff] %vm503, %v670
  %899 = vst.msk [vmem:[%s3 + $0x50] sm:$0xff] %vm503, %v675
  %900 = vst.msk [vmem:[%s3 + $0x58] sm:$0xff] %vm503, %v678
  %901 = vst.msk [vmem:[%s3 + $0x60] sm:$0xff] %vm503, %v683
  %902 = vst.msk [vmem:[%s3 + $0x68] sm:$0xff] %vm503, %v686
  %903 = vst.msk [vmem:[%s3 + $0x70] sm:$0xff] %vm503, %v691
  %904 = vst.msk [vmem:[%s3 + $0x78] sm:$0xff] %vm503, %v694
  %905 = vst.msk [vmem:[%s3 + $0x80] sm:$0xff] %vm503, %v699
  %906 = vst.msk [vmem:[%s3 + $0x88] sm:$0xff] %vm503, %v702
  %907 = vst.msk [vmem:[%s3 + $0x90] sm:$0xff] %vm503, %v707
  %908 = vst.msk [vmem:[%s3 + $0x98] sm:$0xff] %vm503, %v710
  %909 = vst.msk [vmem:[%s3 + $0xa0] sm:$0xff] %vm503, %v715
  %910 = vst.msk [vmem:[%s3 + $0xa8] sm:$0xff] %vm503, %v718
  %911 = vst.msk [vmem:[%s3 + $0xb0] sm:$0xff] %vm503, %v723
  %912 = vst.msk [vmem:[%s3 + $0xb8] sm:$0xff] %vm503, %v726
  %913 = vst.msk [vmem:[%s3 + $0xc0] sm:$0xff] %vm503, %v731
  %914 = vst.msk [vmem:[%s3 + $0xc8] sm:$0xff] %vm503, %v734
  %915 = vst.msk [vmem:[%s3 + $0xd0] sm:$0xff] %vm503, %v739
  %916 = vst.msk [vmem:[%s3 + $0xd8] sm:$0xff] %vm503, %v742
  %917 = vst.msk [vmem:[%s3 + $0xe0] sm:$0xff] %vm503, %v747
  %918 = vst.msk [vmem:[%s3 + $0xe8] sm:$0xff] %vm503, %v750
  %919 = vst.msk [vmem:[%s3 + $0xf0] sm:$0xff] %vm503, %v755
  %920 = vst.msk [vmem:[%s3 + $0xf8] sm:$0xff] %vm503, %v758
  %921 = vst.msk [vmem:[%s3 + $0x100] sm:$0xff] %vm503, %v763
  %922 = vst.msk [vmem:[%s3 + $0x108] sm:$0xff] %vm503, %v766
  %923 = vst.msk [vmem:[%s3 + $0x110] sm:$0xff] %vm503, %v771
  %924 = vst.msk [vmem:[%s3 + $0x118] sm:$0xff] %vm503, %v774
  %925 = vst.msk [vmem:[%s3 + $0x120] sm:$0xff] %vm503, %v779
  %926 = vst.msk [vmem:[%s3 + $0x128] sm:$0xff] %vm503, %v782
  %927 = vst.msk [vmem:[%s3 + $0x130] sm:$0xff] %vm503, %v787
  %928 = vst.msk [vmem:[%s3 + $0x138] sm:$0xff] %vm503, %v790
  %929 = vst.msk [vmem:[%s3 + $0x140] sm:$0xff] %vm503, %v795
  %930 = vst.msk [vmem:[%s3 + $0x148] sm:$0xff] %vm503, %v798
  %931 = vst.msk [vmem:[%s3 + $0x150] sm:$0xff] %vm503, %v803
  %932 = vst.msk [vmem:[%s3 + $0x158] sm:$0xff] %vm503, %v806
  %933 = vst.msk [vmem:[%s3 + $0x160] sm:$0xff] %vm503, %v811
  %934 = vst.msk [vmem:[%s3 + $0x168] sm:$0xff] %vm503, %v814
  %935 = vst.msk [vmem:[%s3 + $0x170] sm:$0xff] %vm503, %v819
  %936 = vst.msk [vmem:[%s3 + $0x178] sm:$0xff] %vm503, %v822
  %937 = vst.msk [vmem:[%s3 + $0x180] sm:$0xff] %vm503, %v827
  %938 = vst.msk [vmem:[%s3 + $0x188] sm:$0xff] %vm503, %v830
  %939 = vst.msk [vmem:[%s3 + $0x190] sm:$0xff] %vm503, %v835
  %940 = vst.msk [vmem:[%s3 + $0x198] sm:$0xff] %vm503, %v838
  %941 = vst.msk [vmem:[%s3 + $0x1a0] sm:$0xff] %vm503, %v843
  %942 = vst.msk [vmem:[%s3 + $0x1a8] sm:$0xff] %vm503, %v846
  %943 = vst.msk [vmem:[%s3 + $0x1b0] sm:$0xff] %vm503, %v851
  %944 = vst.msk [vmem:[%s3 + $0x1b8] sm:$0xff] %vm503, %v854
  %945 = vst.msk [vmem:[%s3 + $0x1c0] sm:$0xff] %vm503, %v859
  %946 = vst.msk [vmem:[%s3 + $0x1c8] sm:$0xff] %vm503, %v862
  %947 = vst.msk [vmem:[%s3 + $0x1d0] sm:$0xff] %vm503, %v867
  %948 = vst.msk [vmem:[%s3 + $0x1d8] sm:$0xff] %vm503, %v870
  %949 = vst.msk [vmem:[%s3 + $0x1e0] sm:$0xff] %vm503, %v875
  %950 = vst.msk [vmem:[%s3 + $0x1e8] sm:$0xff] %vm503, %v878
  %951 = vst.msk [vmem:[%s3 + $0x1f0] sm:$0xff] %vm503, %v883
  %952 = vst.msk [vmem:[%s3 + $0x1f8] sm:$0xff] %vm503, %v886
  // Predicated region
  $region14: #{resnet_forward.16} parent=0 // pred_check
    _
  $region15: #{resnet_forward.16} parent=0 // pred_check_branch
    %954 = sbr.rel (0) target = $region17
  $region16: #{resnet_forward.16} parent=0 // pred_region
    _
  $region17: #{resnet_forward.16} parent=0 // pred_fallthru
    _
  // Predicated region
  $region18: #{resnet_forward.16} parent=0 // pred_check
    _
  $region19: #{resnet_forward.16} parent=0 // pred_check_branch
    %956 = sbr.rel (0) target = $region21
  $region20: #{resnet_forward.16} parent=0 // pred_region
    _
  $region21: #{resnet_forward.16} parent=0 // pred_fallthru
    _

// kernel: resnet_forward.19
$region0: #{resnet_forward.19}
  #allocation0 [shape = 'u32[]', space=smem, size = 0x4, offset = 0x4, fixed_abs, tag = 'smem constant byte address 0x4 - core index']
  #allocation1 [shape = 'u32[144,128]{1,0:T(1,128)}', space=vmem, size = 0x12000, scoped, tag = 'internal scratch']
  %s0 = inlined_call_operand.vmem [shape: bf16[128,16], index: 0, kind: input, shape index: {}]
  %s1 = inlined_call_operand.vmem [shape: bf16[16,32], index: 1, kind: input, shape index: {}]
  %s2 = inlined_call_operand.vmem [shape: f32[128,32], index: 2, kind: output, shape index: {}]
  %s3 = sld [smem:[#allocation0]]
  $region18: #{resnet_forward.19} parent=0
    _
  %s5 = ssub.s32 1, %s3
  %s6 = scalar_select 0, %s5, %s3
  // Predicated region
  $region2: #{resnet_forward.19} parent=0 // pred_check
    _
  $region3: #{resnet_forward.19} parent=0 // pred_check_branch
    %8 = sbr.rel (0) target = $region5
  $region4: #{resnet_forward.19} parent=0 // pred_region
    _
  $region5: #{resnet_forward.19} parent=0 // pred_fallthru
    _
  // Predicated region
  $region6: #{resnet_forward.19} parent=0 // pred_check
    _
  $region7: #{resnet_forward.19} parent=0 // pred_check_branch
    %10 = sbr.rel (0) target = $region9
  $region8: #{resnet_forward.19} parent=0 // pred_region
    _
  $region9: #{resnet_forward.19} parent=0 // pred_fallthru
    _
  %v12 = vld [vmem:[%s0] sm:$0xf]
  %v13 = vld [vmem:[%s0 + $0x4] sm:$0xf]
  %v14 = vld [vmem:[%s0 + $0x8] sm:$0xf]
  %v15 = vld [vmem:[%s0 + $0xc] sm:$0xf]
  %v16 = vld [vmem:[%s0 + $0x10] sm:$0xf]
  %v17 = vld [vmem:[%s0 + $0x14] sm:$0xf]
  %v18 = vld [vmem:[%s0 + $0x18] sm:$0xf]
  %v19 = vld [vmem:[%s0 + $0x1c] sm:$0xf]
  %v20 = vld [vmem:[%s0 + $0x20] sm:$0xf]
  %v21 = vld [vmem:[%s0 + $0x24] sm:$0xf]
  %v22 = vld [vmem:[%s0 + $0x28] sm:$0xf]
  %v23 = vld [vmem:[%s0 + $0x2c] sm:$0xf]
  %v24 = vld [vmem:[%s0 + $0x30] sm:$0xf]
  %v25 = vld [vmem:[%s0 + $0x34] sm:$0xf]
  %v26 = vld [vmem:[%s0 + $0x38] sm:$0xf]
  %v27 = vld [vmem:[%s0 + $0x3c] sm:$0xf]
  %v28 = vld [vmem:[%s1] sm:$0xf]
  %v29 = vld [vmem:[%s1 + $0x4] sm:$0xf]
  %v46 = vunpack.c.l.b16 %v12
  %v47 = vunpack.c.l.b16 %v13
  %v48 = vunpack.c.l.b16 %v14
  %v49 = vunpack.c.l.b16 %v15
  %v50 = vunpack.c.l.b16 %v16
  %v51 = vunpack.c.l.b16 %v17
  %v52 = vunpack.c.l.b16 %v18
  %v53 = vunpack.c.l.b16 %v19
  %v54 = vunpack.c.l.b16 %v20
  %v55 = vunpack.c.l.b16 %v21
  %v56 = vunpack.c.l.b16 %v22
  %v57 = vunpack.c.l.b16 %v23
  %v58 = vunpack.c.l.b16 %v24
  %v59 = vunpack.c.l.b16 %v25
  %v60 = vunpack.c.l.b16 %v26
  %v61 = vunpack.c.l.b16 %v27
  %v62 = vpack.c.b16 %v47, %v46
  %v63 = vpack.c.b16 %v49, %v48
  %v64 = vpack.c.b16 %v51, %v50
  %v65 = vpack.c.b16 %v53, %v52
  %v66 = vpack.c.b16 %v55, %v54
  %v67 = vpack.c.b16 %v57, %v56
  %v68 = vpack.c.b16 %v59, %v58
  %v69 = vpack.c.b16 %v61, %v60
  %v72 = vunpack.c.l.b16 %v28
  %v73 = vunpack.c.l.b16 %v29
  %v74 = vpack.c.b16 %v73, %v72
  %vm76 = vcmask 130048
  %v78 = vsel %vm76, %v62, 0
  %v81 = vsel %vm76, %v63, 0
  %v84 = vsel %vm76, %v64, 0
  %v87 = vsel %vm76, %v65, 0
  %v90 = vsel %vm76, %v66, 0
  %v93 = vsel %vm76, %v67, 0
  %v96 = vsel %vm76, %v68, 0
  %v99 = vsel %vm76, %v69, 0
  %101 = vmatprep.subr.bf16.mxu0 0
  %102 = vmatpush1.bf16.msra.mxu0 0
  %103 = vmatprep.subr.bf16.mxu0 0
  %104 = vmatpush1.bf16.msra.mxu0 0
  %105 = vmatprep.subr.bf16.mxu0 0
  %106 = vmatpush1.bf16.msra.mxu0 0
  %107 = vmatprep.subr.bf16.mxu0 0
  %108 = vmatpush1.bf16.msra.mxu0 0
  %109 = vmatprep.subr.bf16.mxu0 0
  %110 = vmatpush1.bf16.msra.mxu0 0
  %111 = vmatprep.subr.bf16.mxu0 0
  %112 = vmatpush1.bf16.msra.mxu0 0
  %113 = vmatprep.subr.bf16.mxu0 0
  %114 = vmatpush1.bf16.msra.mxu0 0
  %115 = vmatprep.subr.bf16.mxu0 0
  %116 = vmatpush1.bf16.msra.mxu0 %v74
  %117 = vmatprep.subr.bf16.mxu0 0
  %118 = vmatpush2.bf16.msra.mxu0 0
  %119 = vmatprep.subr.bf16.mxu0 0
  %120 = vmatpush2.bf16.msra.mxu0 0
  %121 = vmatprep.subr.bf16.mxu0 0
  %122 = vmatpush2.bf16.msra.mxu0 0
  %123 = vmatprep.subr.bf16.mxu0 0
  %124 = vmatpush2.bf16.msra.mxu0 0
  %125 = vmatprep.subr.bf16.mxu0 0
  %126 = vmatpush2.bf16.msra.mxu0 0
  %127 = vmatprep.subr.bf16.mxu0 0
  %128 = vmatpush2.bf16.msra.mxu0 0
  %129 = vmatprep.subr.bf16.mxu0 0
  %130 = vmatpush2.bf16.msra.mxu0 0
  %131 = vmatprep.subr.bf16.mxu0 0
  %132 = vmatpush2.bf16.msra.mxu0 0
  %133 = vmatprep.mubr.bf16.mxu0 0
  %134 = vmatmul.mubr.bf16.gmra.mxu0 %v78
  %v135 = vpop.f32.mrf.mxu0
  %v136 = vadd.f32 0.0, %v135
  %v137 = vpop.f32.mrf.mxu0
  %v138 = vpop.f32.mrf.mxu0
  %v139 = vadd.f32 0.0, %v138
  %v140 = vpop.f32.mrf.mxu0
  %141 = vmatprep.mubr.bf16.mxu0 0
  %142 = vmatmul.mubr.bf16.gmra.mxu0 %v81
  %v143 = vpop.f32.mrf.mxu0
  %v144 = vadd.f32 0.0, %v143
  %v145 = vpop.f32.mrf.mxu0
  %v146 = vpop.f32.mrf.mxu0
  %v147 = vadd.f32 0.0, %v146
  %v148 = vpop.f32.mrf.mxu0
  %149 = vmatprep.mubr.bf16.mxu0 0
  %150 = vmatmul.mubr.bf16.gmra.mxu0 %v84
  %v151 = vpop.f32.mrf.mxu0
  %v152 = vadd.f32 0.0, %v151
  %v153 = vpop.f32.mrf.mxu0
  %v154 = vpop.f32.mrf.mxu0
  %v155 = vadd.f32 0.0, %v154
  %v156 = vpop.f32.mrf.mxu0
  %157 = vmatprep.mubr.bf16.mxu0 0
  %158 = vmatmul.mubr.bf16.gmra.mxu0 %v87
  %v159 = vpop.f32.mrf.mxu0
  %v160 = vadd.f32 0.0, %v159
  %v161 = vpop.f32.mrf.mxu0
  %v162 = vpop.f32.mrf.mxu0
  %v163 = vadd.f32 0.0, %v162
  %v164 = vpop.f32.mrf.mxu0
  %165 = vmatprep.mubr.bf16.mxu0 0
  %166 = vmatmul.mubr.bf16.gmra.mxu0 %v90
  %v167 = vpop.f32.mrf.mxu0
  %v168 = vadd.f32 0.0, %v167
  %v169 = vpop.f32.mrf.mxu0
  %v170 = vpop.f32.mrf.mxu0
  %v171 = vadd.f32 0.0, %v170
  %v172 = vpop.f32.mrf.mxu0
  %173 = vmatprep.mubr.bf16.mxu0 0
  %174 = vmatmul.mubr.bf16.gmra.mxu0 %v93
  %v175 = vpop.f32.mrf.mxu0
  %v176 = vadd.f32 0.0, %v175
  %v177 = vpop.f32.mrf.mxu0
  %v178 = vpop.f32.mrf.mxu0
  %v179 = vadd.f32 0.0, %v178
  %v180 = vpop.f32.mrf.mxu0
  %181 = vmatprep.mubr.bf16.mxu0 0
  %182 = vmatmul.mubr.bf16.gmra.mxu0 %v96
  %v183 = vpop.f32.mrf.mxu0
  %v184 = vadd.f32 0.0, %v183
  %v185 = vpop.f32.mrf.mxu0
  %v186 = vpop.f32.mrf.mxu0
  %v187 = vadd.f32 0.0, %v186
  %v188 = vpop.f32.mrf.mxu0
  %189 = vmatprep.mubr.bf16.mxu0 0
  %190 = vmatmul.mubr.bf16.gmra.mxu0 %v99
  %v191 = vpop.f32.mrf.mxu0
  %v192 = vadd.f32 0.0, %v191
  %v193 = vpop.f32.mrf.mxu0
  %v194 = vpop.f32.mrf.mxu0
  %v195 = vadd.f32 0.0, %v194
  %v196 = vpop.f32.mrf.mxu0
  %197 = vdwg.mxu0
  %vm198 = vcmask 261120
  %199 = vst.msk [vmem:[%s2] sm:$0xff] %vm198, %v136
  %200 = vst.msk [vmem:[%s2 + $0x8] sm:$0xff] %vm198, %v139
  %201 = vst.msk [vmem:[%s2 + $0x10] sm:$0xff] %vm198, %v144
  %202 = vst.msk [vmem:[%s2 + $0x18] sm:$0xff] %vm198, %v147
  %203 = vst.msk [vmem:[%s2 + $0x20] sm:$0xff] %vm198, %v152
  %204 = vst.msk [vmem:[%s2 + $0x28] sm:$0xff] %vm198, %v155
  %205 = vst.msk [vmem:[%s2 + $0x30] sm:$0xff] %vm198, %v160
  %206 = vst.msk [vmem:[%s2 + $0x38] sm:$0xff] %vm198, %v163
  %207 = vst.msk [vmem:[%s2 + $0x40] sm:$0xff] %vm198, %v168
  %208 = vst.msk [vmem:[%s2 + $0x48] sm:$0xff] %vm198, %v171
  %209 = vst.msk [vmem:[%s2 + $0x50] sm:$0xff] %vm198, %v176
  %210 = vst.msk [vmem:[%s2 + $0x58] sm:$0xff] %vm198, %v179
  %211 = vst.msk [vmem:[%s2 + $0x60] sm:$0xff] %vm198, %v184
  %212 = vst.msk [vmem:[%s2 + $0x68] sm:$0xff] %vm198, %v187
  %213 = vst.msk [vmem:[%s2 + $0x70] sm:$0xff] %vm198, %v192
  %214 = vst.msk [vmem:[%s2 + $0x78] sm:$0xff] %vm198, %v195
  // Predicated region
  $region10: #{resnet_forward.19} parent=0 // pred_check
    _
  $region11: #{resnet_forward.19} parent=0 // pred_check_branch
    %216 = sbr.rel (0) target = $region13
  $region12: #{resnet_forward.19} parent=0 // pred_region
    _
  $region13: #{resnet_forward.19} parent=0 // pred_fallthru
    _
  // Predicated region
  $region14: #{resnet_forward.19} parent=0 // pred_check
    _
  $region15: #{resnet_forward.19} parent=0 // pred_check_branch
    %218 = sbr.rel (0) target = $region17
  $region16: #{resnet_forward.19} parent=0 // pred_region
    _
  $region17: #{resnet_forward.19} parent=0 // pred_fallthru
    _

// kernel: resnet_forward.18
$region0: #{resnet_forward.18}
  #allocation0 [shape = 'u32[]', space=smem, size = 0x4, offset = 0x4, fixed_abs, tag = 'smem constant byte address 0x4 - core index']
  #allocation1 [shape = 'u32[144,128]{1,0:T(1,128)}', space=vmem, size = 0x12000, scoped, tag = 'internal scratch']
  %s0 = inlined_call_operand.vmem [shape: bf16[128,144], index: 0, kind: input, shape index: {}]
  %s1 = inlined_call_operand.vmem [shape: bf16[144,32], index: 1, kind: input, shape index: {}]
  %s2 = inlined_call_operand.vmem [shape: f32[1,32], index: 2, kind: input, shape index: {}]
  %s3 = inlined_call_operand.vmem [shape: f32[1,32], index: 3, kind: input, shape index: {}]
  %s4 = inlined_call_operand.vmem [shape: f32[1,32], index: 4, kind: input, shape index: {}]
  %s5 = inlined_call_operand.vmem [shape: f32[128,32], index: 5, kind: output, shape index: {}]
  %s6 = sld [smem:[#allocation0]]
  $region30: #{resnet_forward.18} parent=0
    _
  %s8 = ssub.s32 1, %s6
  %s9 = scalar_select 0, %s8, %s6
  // Predicated region
  $region2: #{resnet_forward.18} parent=0 // pred_check
    _
  $region3: #{resnet_forward.18} parent=0 // pred_check_branch
    %11 = sbr.rel (0) target = $region5
  $region4: #{resnet_forward.18} parent=0 // pred_region
    _
  $region5: #{resnet_forward.18} parent=0 // pred_fallthru
    _
  // Predicated region
  $region6: #{resnet_forward.18} parent=0 // pred_check
    _
  $region7: #{resnet_forward.18} parent=0 // pred_check_branch
    %13 = sbr.rel (0) target = $region9
  $region8: #{resnet_forward.18} parent=0 // pred_region
    _
  $region9: #{resnet_forward.18} parent=0 // pred_fallthru
    _
  // Predicated region
  $region10: #{resnet_forward.18} parent=0 // pred_check
    _
  $region11: #{resnet_forward.18} parent=0 // pred_check_branch
    %15 = sbr.rel (0) target = $region13
  $region12: #{resnet_forward.18} parent=0 // pred_region
    _
  $region13: #{resnet_forward.18} parent=0 // pred_fallthru
    _
  // Predicated region
  $region14: #{resnet_forward.18} parent=0 // pred_check
    _
  $region15: #{resnet_forward.18} parent=0 // pred_check_branch
    %17 = sbr.rel (0) target = $region17
  $region16: #{resnet_forward.18} parent=0 // pred_region
    _
  $region17: #{resnet_forward.18} parent=0 // pred_fallthru
    _
  // Predicated region
  $region18: #{resnet_forward.18} parent=0 // pred_check
    _
  $region19: #{resnet_forward.18} parent=0 // pred_check_branch
    %19 = sbr.rel (0) target = $region21
  $region20: #{resnet_forward.18} parent=0 // pred_region
    _
  $region21: #{resnet_forward.18} parent=0 // pred_fallthru
    _
  %v21 = vld [vmem:[%s0] sm:$0xff]
  %v22 = vld [vmem:[%s0 + $0x8] sm:$0xff]
  %v23 = vld [vmem:[%s0 + $0x10] sm:$0xff]
  %v24 = vld [vmem:[%s0 + $0x18] sm:$0xff]
  %v25 = vld [vmem:[%s0 + $0x20] sm:$0xff]
  %v26 = vld [vmem:[%s0 + $0x28] sm:$0xff]
  %v27 = vld [vmem:[%s0 + $0x30] sm:$0xff]
  %v28 = vld [vmem:[%s0 + $0x38] sm:$0xff]
  %v29 = vld [vmem:[%s0 + $0x40] sm:$0xff]
  %v30 = vld [vmem:[%s0 + $0x48] sm:$0xff]
  %v31 = vld [vmem:[%s0 + $0x50] sm:$0xff]
  %v32 = vld [vmem:[%s0 + $0x58] sm:$0xff]
  %v33 = vld [vmem:[%s0 + $0x60] sm:$0xff]
  %v34 = vld [vmem:[%s0 + $0x68] sm:$0xff]
  %v35 = vld [vmem:[%s0 + $0x70] sm:$0xff]
  %v36 = vld [vmem:[%s0 + $0x78] sm:$0xff]
  %v37 = vld [vmem:[%s1] sm:$0xf]
  %v38 = vld [vmem:[%s1 + $0x4] sm:$0xf]
  %v39 = vld [vmem:[%s1 + $0x8] sm:$0xf]
  %v40 = vld [vmem:[%s1 + $0xc] sm:$0xf]
  %v41 = vld [vmem:[%s1 + $0x10] sm:$0xf]
  %v42 = vld [vmem:[%s1 + $0x14] sm:$0xf]
  %v43 = vld [vmem:[%s1 + $0x18] sm:$0xf]
  %v44 = vld [vmem:[%s1 + $0x1c] sm:$0xf]
  %v45 = vld [vmem:[%s1 + $0x20] sm:$0xf]
  %v46 = vld [vmem:[%s1 + $0x24] sm:$0xf]
  %v47 = vld [vmem:[%s1 + $0x28] sm:$0xf]
  %v48 = vld [vmem:[%s1 + $0x2c] sm:$0xf]
  %v49 = vld [vmem:[%s1 + $0x30] sm:$0xf]
  %v50 = vld [vmem:[%s1 + $0x34] sm:$0xf]
  %v51 = vld [vmem:[%s1 + $0x38] sm:$0xf]
  %v52 = vld [vmem:[%s1 + $0x3c] sm:$0xf]
  %v53 = vld [vmem:[%s1 + $0x40] sm:$0xf]
  %v54 = vld [vmem:[%s1 + $0x44] sm:$0xf]
  %v55 = vld [vmem:[%s2] sm:$0x1]
  %v57 = vlaneseq
  %v58 = vshrl.u32 %v57, 7
  %v59 = vsub.s32 0, %v58
  %v60 = vrot.slane %v55, %v59
  %v78 = vunpack.c.l.b16 %v21
  %v79 = vunpack.c.h.b16 %v21
  %v80 = vunpack.c.l.b16 %v22
  %v81 = vunpack.c.h.b16 %v22
  %v82 = vunpack.c.l.b16 %v23
  %v83 = vunpack.c.h.b16 %v23
  %v84 = vunpack.c.l.b16 %v24
  %v85 = vunpack.c.h.b16 %v24
  %v86 = vunpack.c.l.b16 %v25
  %v87 = vunpack.c.h.b16 %v25
  %v88 = vunpack.c.l.b16 %v26
  %v89 = vunpack.c.h.b16 %v26
  %v90 = vunpack.c.l.b16 %v27
  %v91 = vunpack.c.h.b16 %v27
  %v92 = vunpack.c.l.b16 %v28
  %v93 = vunpack.c.h.b16 %v28
  %v94 = vunpack.c.l.b16 %v29
  %v95 = vunpack.c.h.b16 %v29
  %v96 = vunpack.c.l.b16 %v30
  %v97 = vunpack.c.h.b16 %v30
  %v98 = vunpack.c.l.b16 %v31
  %v99 = vunpack.c.h.b16 %v31
  %v100 = vunpack.c.l.b16 %v32
  %v101 = vunpack.c.h.b16 %v32
  %v102 = vunpack.c.l.b16 %v33
  %v103 = vunpack.c.h.b16 %v33
  %v104 = vunpack.c.l.b16 %v34
  %v105 = vunpack.c.h.b16 %v34
  %v106 = vunpack.c.l.b16 %v35
  %v107 = vunpack.c.h.b16 %v35
  %v108 = vunpack.c.l.b16 %v36
  %v109 = vunpack.c.h.b16 %v36
  %v110 = vpack.c.b16 %v80, %v78
  %v111 = vpack.c.b16 %v81, %v79
  %v112 = vpack.c.b16 %v84, %v82
  %v113 = vpack.c.b16 %v85, %v83
  %v114 = vpack.c.b16 %v88, %v86
  %v115 = vpack.c.b16 %v89, %v87
  %v116 = vpack.c.b16 %v92, %v90
  %v117 = vpack.c.b16 %v93, %v91
  %v118 = vpack.c.b16 %v96, %v94
  %v119 = vpack.c.b16 %v97, %v95
  %v120 = vpack.c.b16 %v100, %v98
  %v121 = vpack.c.b16 %v101, %v99
  %v122 = vpack.c.b16 %v104, %v102
  %v123 = vpack.c.b16 %v105, %v103
  %v124 = vpack.c.b16 %v108, %v106
  %v125 = vpack.c.b16 %v109, %v107
  %v152 = vunpack.c.l.b16 %v37
  %v153 = vunpack.c.l.b16 %v38
  %v154 = vunpack.c.l.b16 %v39
  %v155 = vunpack.c.l.b16 %v40
  %v156 = vunpack.c.l.b16 %v41
  %v157 = vunpack.c.l.b16 %v42
  %v158 = vunpack.c.l.b16 %v43
  %v159 = vunpack.c.l.b16 %v44
  %v160 = vunpack.c.l.b16 %v45
  %v161 = vunpack.c.l.b16 %v46
  %v162 = vunpack.c.l.b16 %v47
  %v163 = vunpack.c.l.b16 %v48
  %v164 = vunpack.c.l.b16 %v49
  %v165 = vunpack.c.l.b16 %v50
  %v166 = vunpack.c.l.b16 %v51
  %v167 = vunpack.c.l.b16 %v52
  %v168 = vunpack.c.l.b16 %v53
  %v169 = vunpack.c.l.b16 %v54
  %v170 = vpack.c.b16 %v153, %v152
  %v171 = vpack.c.b16 %v155, %v154
  %v172 = vpack.c.b16 %v157, %v156
  %v173 = vpack.c.b16 %v159, %v158
  %v174 = vpack.c.b16 %v161, %v160
  %v175 = vpack.c.b16 %v163, %v162
  %v176 = vpack.c.b16 %v165, %v164
  %v177 = vpack.c.b16 %v167, %v166
  %v178 = vpack.c.b16 %v169, %v168
  %vm188 = vcmask 130048
  %v190 = vsel %vm188, %v111, 0
  %v193 = vsel %vm188, %v113, 0
  %v196 = vsel %vm188, %v115, 0
  %v199 = vsel %vm188, %v117, 0
  %v202 = vsel %vm188, %v119, 0
  %v205 = vsel %vm188, %v121, 0
  %v208 = vsel %vm188, %v123, 0
  %v211 = vsel %vm188, %v125, 0
  %213 = vmatprep.subr.bf16.mxu0 0
  %214 = vmatpush1.bf16.msra.mxu0 %v177
  %215 = vmatprep.subr.bf16.mxu0 0
  %216 = vmatpush1.bf16.msra.mxu0 %v176
  %217 = vmatprep.subr.bf16.mxu0 0
  %218 = vmatpush1.bf16.msra.mxu0 %v175
  %219 = vmatprep.subr.bf16.mxu0 0
  %220 = vmatpush1.bf16.msra.mxu0 %v174
  %221 = vmatprep.subr.bf16.mxu0 0
  %222 = vmatpush1.bf16.msra.mxu0 %v173
  %223 = vmatprep.subr.bf16.mxu0 0
  %224 = vmatpush1.bf16.msra.mxu0 %v172
  %225 = vmatprep.subr.bf16.mxu0 0
  %226 = vmatpush1.bf16.msra.mxu0 %v171
  %227 = vmatprep.subr.bf16.mxu0 0
  %228 = vmatpush1.bf16.msra.mxu0 %v170
  %229 = vmatprep.subr.bf16.mxu0 0
  %230 = vmatpush2.bf16.msra.mxu0 0
  %231 = vmatprep.subr.bf16.mxu0 0
  %232 = vmatpush2.bf16.msra.mxu0 0
  %233 = vmatprep.subr.bf16.mxu0 0
  %234 = vmatpush2.bf16.msra.mxu0 0
  %235 = vmatprep.subr.bf16.mxu0 0
  %236 = vmatpush2.bf16.msra.mxu0 0
  %237 = vmatprep.subr.bf16.mxu0 0
  %238 = vmatpush2.bf16.msra.mxu0 0
  %239 = vmatprep.subr.bf16.mxu0 0
  %240 = vmatpush2.bf16.msra.mxu0 0
  %241 = vmatprep.subr.bf16.mxu0 0
  %242 = vmatpush2.bf16.msra.mxu0 0
  %243 = vmatprep.subr.bf16.mxu0 0
  %244 = vmatpush2.bf16.msra.mxu0 %v178
  %245 = vmatprep.mubr.bf16.mxu0 %v190
  %246 = vmatmul.mubr.bf16.gmra.mxu0 %v110
  %v247 = vpop.f32.mrf.mxu0
  %v248 = vadd.f32 %v60, %v247
  %v249 = vpop.f32.mrf.mxu0
  %v250 = vpop.f32.mrf.mxu0
  %v251 = vadd.f32 %v60, %v250
  %v252 = vpop.f32.mrf.mxu0
  %253 = vmatprep.mubr.bf16.mxu0 %v193
  %254 = vmatmul.mubr.bf16.gmra.mxu0 %v112
  %v255 = vpop.f32.mrf.mxu0
  %v256 = vadd.f32 %v60, %v255
  %v257 = vpop.f32.mrf.mxu0
  %v258 = vpop.f32.mrf.mxu0
  %v259 = vadd.f32 %v60, %v258
  %v260 = vpop.f32.mrf.mxu0
  %261 = vmatprep.mubr.bf16.mxu0 %v196
  %262 = vmatmul.mubr.bf16.gmra.mxu0 %v114
  %v263 = vpop.f32.mrf.mxu0
  %v264 = vadd.f32 %v60, %v263
  %v265 = vpop.f32.mrf.mxu0
  %v266 = vpop.f32.mrf.mxu0
  %v267 = vadd.f32 %v60, %v266
  %v268 = vpop.f32.mrf.mxu0
  %269 = vmatprep.mubr.bf16.mxu0 %v199
  %270 = vmatmul.mubr.bf16.gmra.mxu0 %v116
  %v271 = vpop.f32.mrf.mxu0
  %v272 = vadd.f32 %v60, %v271
  %v273 = vpop.f32.mrf.mxu0
  %v274 = vpop.f32.mrf.mxu0
  %v275 = vadd.f32 %v60, %v274
  %v276 = vpop.f32.mrf.mxu0
  %277 = vmatprep.mubr.bf16.mxu0 %v202
  %278 = vmatmul.mubr.bf16.gmra.mxu0 %v118
  %v279 = vpop.f32.mrf.mxu0
  %v280 = vadd.f32 %v60, %v279
  %v281 = vpop.f32.mrf.mxu0
  %v282 = vpop.f32.mrf.mxu0
  %v283 = vadd.f32 %v60, %v282
  %v284 = vpop.f32.mrf.mxu0
  %285 = vmatprep.mubr.bf16.mxu0 %v205
  %286 = vmatmul.mubr.bf16.gmra.mxu0 %v120
  %v287 = vpop.f32.mrf.mxu0
  %v288 = vadd.f32 %v60, %v287
  %v289 = vpop.f32.mrf.mxu0
  %v290 = vpop.f32.mrf.mxu0
  %v291 = vadd.f32 %v60, %v290
  %v292 = vpop.f32.mrf.mxu0
  %293 = vmatprep.mubr.bf16.mxu0 %v208
  %294 = vmatmul.mubr.bf16.gmra.mxu0 %v122
  %v295 = vpop.f32.mrf.mxu0
  %v296 = vadd.f32 %v60, %v295
  %v297 = vpop.f32.mrf.mxu0
  %v298 = vpop.f32.mrf.mxu0
  %v299 = vadd.f32 %v60, %v298
  %v300 = vpop.f32.mrf.mxu0
  %301 = vmatprep.mubr.bf16.mxu0 %v211
  %302 = vmatmul.mubr.bf16.gmra.mxu0 %v124
  %v303 = vpop.f32.mrf.mxu0
  %v304 = vadd.f32 %v60, %v303
  %v305 = vpop.f32.mrf.mxu0
  %v306 = vpop.f32.mrf.mxu0
  %v307 = vadd.f32 %v60, %v306
  %v308 = vpop.f32.mrf.mxu0
  %309 = vdwg.mxu0
  %v310 = vld [vmem:[%s3] sm:$0x1]
  %v312 = vlaneseq
  %v313 = vshrl.u32 %v312, 7
  %v314 = vsub.s32 0, %v313
  %v315 = vrot.slane %v310, %v314
  %v317 = vmul.f32 %v248, %v315
  %v318 = vmul.f32 %v251, %v315
  %v319 = vmul.f32 %v256, %v315
  %v320 = vmul.f32 %v259, %v315
  %v321 = vmul.f32 %v264, %v315
  %v322 = vmul.f32 %v267, %v315
  %v323 = vmul.f32 %v272, %v315
  %v324 = vmul.f32 %v275, %v315
  %v325 = vmul.f32 %v280, %v315
  %v326 = vmul.f32 %v283, %v315
  %v327 = vmul.f32 %v288, %v315
  %v328 = vmul.f32 %v291, %v315
  %v329 = vmul.f32 %v296, %v315
  %v330 = vmul.f32 %v299, %v315
  %v331 = vmul.f32 %v304, %v315
  %v332 = vmul.f32 %v307, %v315
  %v333 = vld [vmem:[%s4] sm:$0x1]
  %v335 = vlaneseq
  %v336 = vshrl.u32 %v335, 7
  %v337 = vsub.s32 0, %v336
  %v338 = vrot.slane %v333, %v337
  %v340 = vadd.f32 %v317, %v338
  %v341 = vadd.f32 %v318, %v338
  %v342 = vadd.f32 %v319, %v338
  %v343 = vadd.f32 %v320, %v338
  %v344 = vadd.f32 %v321, %v338
  %v345 = vadd.f32 %v322, %v338
  %v346 = vadd.f32 %v323, %v338
  %v347 = vadd.f32 %v324, %v338
  %v348 = vadd.f32 %v325, %v338
  %v349 = vadd.f32 %v326, %v338
  %v350 = vadd.f32 %v327, %v338
  %v351 = vadd.f32 %v328, %v338
  %v352 = vadd.f32 %v329, %v338
  %v353 = vadd.f32 %v330, %v338
  %v354 = vadd.f32 %v331, %v338
  %v355 = vadd.f32 %v332, %v338
  %v356 = vmax.f32 %v340, 0.0
  %v357 = vmax.f32 %v341, 0.0
  %v358 = vmax.f32 %v342, 0.0
  %v359 = vmax.f32 %v343, 0.0
  %v360 = vmax.f32 %v344, 0.0
  %v361 = vmax.f32 %v345, 0.0
  %v362 = vmax.f32 %v346, 0.0
  %v363 = vmax.f32 %v347, 0.0
  %v364 = vmax.f32 %v348, 0.0
  %v365 = vmax.f32 %v349, 0.0
  %v366 = vmax.f32 %v350, 0.0
  %v367 = vmax.f32 %v351, 0.0
  %v368 = vmax.f32 %v352, 0.0
  %v369 = vmax.f32 %v353, 0.0
  %v370 = vmax.f32 %v354, 0.0
  %v371 = vmax.f32 %v355, 0.0
  %vm372 = vcmask 261120
  %373 = vst.msk [vmem:[%s5] sm:$0xff] %vm372, %v356
  %374 = vst.msk [vmem:[%s5 + $0x8] sm:$0xff] %vm372, %v357
  %375 = vst.msk [vmem:[%s5 + $0x10] sm:$0xff] %vm372, %v358
  %376 = vst.msk [vmem:[%s5 + $0x18] sm:$0xff] %vm372, %v359
  %377 = vst.msk [vmem:[%s5 + $0x20] sm:$0xff] %vm372, %v360
  %378 = vst.msk [vmem:[%s5 + $0x28] sm:$0xff] %vm372, %v361
  %379 = vst.msk [vmem:[%s5 + $0x30] sm:$0xff] %vm372, %v362
  %380 = vst.msk [vmem:[%s5 + $0x38] sm:$0xff] %vm372, %v363
  %381 = vst.msk [vmem:[%s5 + $0x40] sm:$0xff] %vm372, %v364
  %382 = vst.msk [vmem:[%s5 + $0x48] sm:$0xff] %vm372, %v365
  %383 = vst.msk [vmem:[%s5 + $0x50] sm:$0xff] %vm372, %v366
  %384 = vst.msk [vmem:[%s5 + $0x58] sm:$0xff] %vm372, %v367
  %385 = vst.msk [vmem:[%s5 + $0x60] sm:$0xff] %vm372, %v368
  %386 = vst.msk [vmem:[%s5 + $0x68] sm:$0xff] %vm372, %v369
  %387 = vst.msk [vmem:[%s5 + $0x70] sm:$0xff] %vm372, %v370
  %388 = vst.msk [vmem:[%s5 + $0x78] sm:$0xff] %vm372, %v371
  // Predicated region
  $region22: #{resnet_forward.18} parent=0 // pred_check
    _
  $region23: #{resnet_forward.18} parent=0 // pred_check_branch
    %390 = sbr.rel (0) target = $region25
  $region24: #{resnet_forward.18} parent=0 // pred_region
    _
  $region25: #{resnet_forward.18} parent=0 // pred_fallthru
    _
  // Predicated region
  $region26: #{resnet_forward.18} parent=0 // pred_check
    _
  $region27: #{resnet_forward.18} parent=0 // pred_check_branch
    %392 = sbr.rel (0) target = $region29
  $region28: #{resnet_forward.18} parent=0 // pred_region
    _
  $region29: #{resnet_forward.18} parent=0 // pred_fallthru
    _

// kernel: resnet_forward.20
$region0: #{resnet_forward.20}
  #allocation0 [shape = 'u32[]', space=smem, size = 0x4, offset = 0x4, fixed_abs, tag = 'smem constant byte address 0x4 - core index']
  #allocation1 [shape = 'u32[144,128]{1,0:T(1,128)}', space=vmem, size = 0x12000, scoped, tag = 'internal scratch']
  %s0 = inlined_call_operand.vmem [shape: bf16[128,288], index: 0, kind: input, shape index: {}]
  %s1 = inlined_call_operand.vmem [shape: bf16[288,32], index: 1, kind: input, shape index: {}]
  %s2 = inlined_call_operand.vmem [shape: f32[128,32], index: 2, kind: input, shape index: {}]
  %s3 = inlined_call_operand.vmem [shape: f32[128,32], index: 3, kind: output, shape index: {}]
  %s4 = sld [smem:[#allocation0]]
  $region22: #{resnet_forward.20} parent=0
    _
  %s6 = ssub.s32 1, %s4
  %s7 = scalar_select 0, %s6, %s4
  // Predicated region
  $region2: #{resnet_forward.20} parent=0 // pred_check
    _
  $region3: #{resnet_forward.20} parent=0 // pred_check_branch
    %9 = sbr.rel (0) target = $region5
  $region4: #{resnet_forward.20} parent=0 // pred_region
    _
  $region5: #{resnet_forward.20} parent=0 // pred_fallthru
    _
  // Predicated region
  $region6: #{resnet_forward.20} parent=0 // pred_check
    _
  $region7: #{resnet_forward.20} parent=0 // pred_check_branch
    %11 = sbr.rel (0) target = $region9
  $region8: #{resnet_forward.20} parent=0 // pred_region
    _
  $region9: #{resnet_forward.20} parent=0 // pred_fallthru
    _
  // Predicated region
  $region10: #{resnet_forward.20} parent=0 // pred_check
    _
  $region11: #{resnet_forward.20} parent=0 // pred_check_branch
    %13 = sbr.rel (0) target = $region13
  $region12: #{resnet_forward.20} parent=0 // pred_region
    _
  $region13: #{resnet_forward.20} parent=0 // pred_fallthru
    _
  %v15 = vld [vmem:[%s0] sm:$0xff]
  %v16 = vld [vmem:[%s0 + $0x8] sm:$0xf]
  %v17 = vld [vmem:[%s0 + $0xc] sm:$0xff]
  %v18 = vld [vmem:[%s0 + $0x14] sm:$0xf]
  %v19 = vld [vmem:[%s0 + $0x18] sm:$0xff]
  %v20 = vld [vmem:[%s0 + $0x20] sm:$0xf]
  %v21 = vld [vmem:[%s0 + $0x24] sm:$0xff]
  %v22 = vld [vmem:[%s0 + $0x2c] sm:$0xf]
  %v23 = vld [vmem:[%s0 + $0x30] sm:$0xff]
  %v24 = vld [vmem:[%s0 + $0x38] sm:$0xf]
  %v25 = vld [vmem:[%s0 + $0x3c] sm:$0xff]
  %v26 = vld [vmem:[%s0 + $0x44] sm:$0xf]
  %v27 = vld [vmem:[%s0 + $0x48] sm:$0xff]
  %v28 = vld [vmem:[%s0 + $0x50] sm:$0xf]
  %v29 = vld [vmem:[%s0 + $0x54] sm:$0xff]
  %v30 = vld [vmem:[%s0 + $0x5c] sm:$0xf]
  %v31 = vld [vmem:[%s0 + $0x60] sm:$0xff]
  %v32 = vld [vmem:[%s0 + $0x68] sm:$0xf]
  %v33 = vld [vmem:[%s0 + $0x6c] sm:$0xff]
  %v34 = vld [vmem:[%s0 + $0x74] sm:$0xf]
  %v35 = vld [vmem:[%s0 + $0x78] sm:$0xff]
  %v36 = vld [vmem:[%s0 + $0x80] sm:$0xf]
  %v37 = vld [vmem:[%s0 + $0x84] sm:$0xff]
  %v38 = vld [vmem:[%s0 + $0x8c] sm:$0xf]
  %v39 = vld [vmem:[%s0 + $0x90] sm:$0xff]
  %v40 = vld [vmem:[%s0 + $0x98] sm:$0xf]
  %v41 = vld [vmem:[%s0 + $0x9c] sm:$0xff]
  %v42 = vld [vmem:[%s0 + $0xa4] sm:$0xf]
  %v43 = vld [vmem:[%s0 + $0xa8] sm:$0xff]
  %v44 = vld [vmem:[%s0 + $0xb0] sm:$0xf]
  %v45 = vld [vmem:[%s0 + $0xb4] sm:$0xff]
  %v46 = vld [vmem:[%s0 + $0xbc] sm:$0xf]
  %v47 = vld [vmem:[%s1] sm:$0xf]
  %v48 = vld [vmem:[%s1 + $0x4] sm:$0xf]
  %v49 = vld [vmem:[%s1 + $0x8] sm:$0xf]
  %v50 = vld [vmem:[%s1 + $0xc] sm:$0xf]
  %v51 = vld [vmem:[%s1 + $0x10] sm:$0xf]
  %v52 = vld [vmem:[%s1 + $0x14] sm:$0xf]
  %v53 = vld [vmem:[%s1 + $0x18] sm:$0xf]
  %v54 = vld [vmem:[%s1 + $0x1c] sm:$0xf]
  %v55 = vld [vmem:[%s1 + $0x20] sm:$0xf]
  %v56 = vld [vmem:[%s1 + $0x24] sm:$0xf]
  %v57 = vld [vmem:[%s1 + $0x28] sm:$0xf]
  %v58 = vld [vmem:[%s1 + $0x2c] sm:$0xf]
  %v59 = vld [vmem:[%s1 + $0x30] sm:$0xf]
  %v60 = vld [vmem:[%s1 + $0x34] sm:$0xf]
  %v61 = vld [vmem:[%s1 + $0x38] sm:$0xf]
  %v62 = vld [vmem:[%s1 + $0x3c] sm:$0xf]
  %v63 = vld [vmem:[%s1 + $0x40] sm:$0xf]
  %v64 = vld [vmem:[%s1 + $0x44] sm:$0xf]
  %v65 = vld [vmem:[%s1 + $0x48] sm:$0xf]
  %v66 = vld [vmem:[%s1 + $0x4c] sm:$0xf]
  %v67 = vld [vmem:[%s1 + $0x50] sm:$0xf]
  %v68 = vld [vmem:[%s1 + $0x54] sm:$0xf]
  %v69 = vld [vmem:[%s1 + $0x58] sm:$0xf]
  %v70 = vld [vmem:[%s1 + $0x5c] sm:$0xf]
  %v71 = vld [vmem:[%s1 + $0x60] sm:$0xf]
  %v72 = vld [vmem:[%s1 + $0x64] sm:$0xf]
  %v73 = vld [vmem:[%s1 + $0x68] sm:$0xf]
  %v74 = vld [vmem:[%s1 + $0x6c] sm:$0xf]
  %v75 = vld [vmem:[%s1 + $0x70] sm:$0xf]
  %v76 = vld [vmem:[%s1 + $0x74] sm:$0xf]
  %v77 = vld [vmem:[%s1 + $0x78] sm:$0xf]
  %v78 = vld [vmem:[%s1 + $0x7c] sm:$0xf]
  %v79 = vld [vmem:[%s1 + $0x80] sm:$0xf]
  %v80 = vld [vmem:[%s1 + $0x84] sm:$0xf]
  %v81 = vld [vmem:[%s1 + $0x88] sm:$0xf]
  %v82 = vld [vmem:[%s1 + $0x8c] sm:$0xf]
  %v83 = vld [vmem:[%s2] sm:$0xff]
  %v84 = vld [vmem:[%s2 + $0x8] sm:$0xff]
  %v85 = vld [vmem:[%s2 + $0x10] sm:$0xff]
  %v86 = vld [vmem:[%s2 + $0x18] sm:$0xff]
  %v87 = vld [vmem:[%s2 + $0x20] sm:$0xff]
  %v88 = vld [vmem:[%s2 + $0x28] sm:$0xff]
  %v89 = vld [vmem:[%s2 + $0x30] sm:$0xff]
  %v90 = vld [vmem:[%s2 + $0x38] sm:$0xff]
  %v91 = vld [vmem:[%s2 + $0x40] sm:$0xff]
  %v92 = vld [vmem:[%s2 + $0x48] sm:$0xff]
  %v93 = vld [vmem:[%s2 + $0x50] sm:$0xff]
  %v94 = vld [vmem:[%s2 + $0x58] sm:$0xff]
  %v95 = vld [vmem:[%s2 + $0x60] sm:$0xff]
  %v96 = vld [vmem:[%s2 + $0x68] sm:$0xff]
  %v97 = vld [vmem:[%s2 + $0x70] sm:$0xff]
  %v98 = vld [vmem:[%s2 + $0x78] sm:$0xff]
  %v131 = vunpack.c.l.b16 %v15
  %v132 = vunpack.c.h.b16 %v15
  %v133 = vunpack.c.l.b16 %v16
  %v134 = vunpack.c.l.b16 %v17
  %v135 = vunpack.c.h.b16 %v17
  %v136 = vunpack.c.l.b16 %v18
  %v137 = vunpack.c.l.b16 %v19
  %v138 = vunpack.c.h.b16 %v19
  %v139 = vunpack.c.l.b16 %v20
  %v140 = vunpack.c.l.b16 %v21
  %v141 = vunpack.c.h.b16 %v21
  %v142 = vunpack.c.l.b16 %v22
  %v143 = vunpack.c.l.b16 %v23
  %v144 = vunpack.c.h.b16 %v23
  %v145 = vunpack.c.l.b16 %v24
  %v146 = vunpack.c.l.b16 %v25
  %v147 = vunpack.c.h.b16 %v25
  %v148 = vunpack.c.l.b16 %v26
  %v149 = vunpack.c.l.b16 %v27
  %v150 = vunpack.c.h.b16 %v27
  %v151 = vunpack.c.l.b16 %v28
  %v152 = vunpack.c.l.b16 %v29
  %v153 = vunpack.c.h.b16 %v29
  %v154 = vunpack.c.l.b16 %v30
  %v155 = vunpack.c.l.b16 %v31
  %v156 = vunpack.c.h.b16 %v31
  %v157 = vunpack.c.l.b16 %v32
  %v158 = vunpack.c.l.b16 %v33
  %v159 = vunpack.c.h.b16 %v33
  %v160 = vunpack.c.l.b16 %v34
  %v161 = vunpack.c.l.b16 %v35
  %v162 = vunpack.c.h.b16 %v35
  %v163 = vunpack.c.l.b16 %v36
  %v164 = vunpack.c.l.b16 %v37
  %v165 = vunpack.c.h.b16 %v37
  %v166 = vunpack.c.l.b16 %v38
  %v167 = vunpack.c.l.b16 %v39
  %v168 = vunpack.c.h.b16 %v39
  %v169 = vunpack.c.l.b16 %v40
  %v170 = vunpack.c.l.b16 %v41
  %v171 = vunpack.c.h.b16 %v41
  %v172 = vunpack.c.l.b16 %v42
  %v173 = vunpack.c.l.b16 %v43
  %v174 = vunpack.c.h.b16 %v43
  %v175 = vunpack.c.l.b16 %v44
  %v176 = vunpack.c.l.b16 %v45
  %v177 = vunpack.c.h.b16 %v45
  %v178 = vunpack.c.l.b16 %v46
  %v179 = vpack.c.b16 %v134, %v131
  %v180 = vpack.c.b16 %v135, %v132
  %v181 = vpack.c.b16 %v136, %v133
  %v182 = vpack.c.b16 %v140, %v137
  %v183 = vpack.c.b16 %v141, %v138
  %v184 = vpack.c.b16 %v142, %v139
  %v185 = vpack.c.b16 %v146, %v143
  %v186 = vpack.c.b16 %v147, %v144
  %v187 = vpack.c.b16 %v148, %v145
  %v188 = vpack.c.b16 %v152, %v149
  %v189 = vpack.c.b16 %v153, %v150
  %v190 = vpack.c.b16 %v154, %v151
  %v191 = vpack.c.b16 %v158, %v155
  %v192 = vpack.c.b16 %v159, %v156
  %v193 = vpack.c.b16 %v160, %v157
  %v194 = vpack.c.b16 %v164, %v161
  %v195 = vpack.c.b16 %v165, %v162
  %v196 = vpack.c.b16 %v166, %v163
  %v197 = vpack.c.b16 %v170, %v167
  %v198 = vpack.c.b16 %v171, %v168
  %v199 = vpack.c.b16 %v172, %v169
  %v200 = vpack.c.b16 %v176, %v173
  %v201 = vpack.c.b16 %v177, %v174
  %v202 = vpack.c.b16 %v178, %v175
  %v255 = vunpack.c.l.b16 %v47
  %v256 = vunpack.c.l.b16 %v48
  %v257 = vunpack.c.l.b16 %v49
  %v258 = vunpack.c.l.b16 %v50
  %v259 = vunpack.c.l.b16 %v51
  %v260 = vunpack.c.l.b16 %v52
  %v261 = vunpack.c.l.b16 %v53
  %v262 = vunpack.c.l.b16 %v54
  %v263 = vunpack.c.l.b16 %v55
  %v264 = vunpack.c.l.b16 %v56
  %v265 = vunpack.c.l.b16 %v57
  %v266 = vunpack.c.l.b16 %v58
  %v267 = vunpack.c.l.b16 %v59
  %v268 = vunpack.c.l.b16 %v60
  %v269 = vunpack.c.l.b16 %v61
  %v270 = vunpack.c.l.b16 %v62
  %v271 = vunpack.c.l.b16 %v63
  %v272 = vunpack.c.l.b16 %v64
  %v273 = vunpack.c.l.b16 %v65
  %v274 = vunpack.c.l.b16 %v66
  %v275 = vunpack.c.l.b16 %v67
  %v276 = vunpack.c.l.b16 %v68
  %v277 = vunpack.c.l.b16 %v69
  %v278 = vunpack.c.l.b16 %v70
  %v279 = vunpack.c.l.b16 %v71
  %v280 = vunpack.c.l.b16 %v72
  %v281 = vunpack.c.l.b16 %v73
  %v282 = vunpack.c.l.b16 %v74
  %v283 = vunpack.c.l.b16 %v75
  %v284 = vunpack.c.l.b16 %v76
  %v285 = vunpack.c.l.b16 %v77
  %v286 = vunpack.c.l.b16 %v78
  %v287 = vunpack.c.l.b16 %v79
  %v288 = vunpack.c.l.b16 %v80
  %v289 = vunpack.c.l.b16 %v81
  %v290 = vunpack.c.l.b16 %v82
  %v291 = vpack.c.b16 %v256, %v255
  %v292 = vpack.c.b16 %v258, %v257
  %v293 = vpack.c.b16 %v260, %v259
  %v294 = vpack.c.b16 %v262, %v261
  %v295 = vpack.c.b16 %v264, %v263
  %v296 = vpack.c.b16 %v266, %v265
  %v297 = vpack.c.b16 %v268, %v267
  %v298 = vpack.c.b16 %v270, %v269
  %v299 = vpack.c.b16 %v272, %v271
  %v300 = vpack.c.b16 %v274, %v273
  %v301 = vpack.c.b16 %v276, %v275
  %v302 = vpack.c.b16 %v278, %v277
  %v303 = vpack.c.b16 %v280, %v279
  %v304 = vpack.c.b16 %v282, %v281
  %v305 = vpack.c.b16 %v284, %v283
  %v306 = vpack.c.b16 %v286, %v285
  %v307 = vpack.c.b16 %v288, %v287
  %v308 = vpack.c.b16 %v290, %v289
  %vm327 = vcmask 261120
  %v329 = vsel %vm327, %v181, 0
  %v332 = vsel %vm327, %v184, 0
  %v335 = vsel %vm327, %v187, 0
  %v338 = vsel %vm327, %v190, 0
  %v341 = vsel %vm327, %v193, 0
  %v344 = vsel %vm327, %v196, 0
  %v347 = vsel %vm327, %v199, 0
  %v350 = vsel %vm327, %v202, 0
  %352 = vmatprep.subr.bf16.mxu0 0
  %353 = vmatpush1.bf16.msra.mxu0 %v298
  %354 = vmatprep.subr.bf16.mxu0 0
  %355 = vmatpush1.bf16.msra.mxu0 %v297
  %356 = vmatprep.subr.bf16.mxu0 0
  %357 = vmatpush1.bf16.msra.mxu0 %v296
  %358 = vmatprep.subr.bf16.mxu0 0
  %359 = vmatpush1.bf16.msra.mxu0 %v295
  %360 = vmatprep.subr.bf16.mxu0 0
  %361 = vmatpush1.bf16.msra.mxu0 %v294
  %362 = vmatprep.subr.bf16.mxu0 0
  %363 = vmatpush1.bf16.msra.mxu0 %v293
  %364 = vmatprep.subr.bf16.mxu0 0
  %365 = vmatpush1.bf16.msra.mxu0 %v292
  %366 = vmatprep.subr.bf16.mxu0 0
  %367 = vmatpush1.bf16.msra.mxu0 %v291
  %368 = vmatprep.subr.bf16.mxu0 0
  %369 = vmatpush2.bf16.msra.mxu0 %v306
  %370 = vmatprep.subr.bf16.mxu0 0
  %371 = vmatpush2.bf16.msra.mxu0 %v305
  %372 = vmatprep.subr.bf16.mxu0 0
  %373 = vmatpush2.bf16.msra.mxu0 %v304
  %374 = vmatprep.subr.bf16.mxu0 0
  %375 = vmatpush2.bf16.msra.mxu0 %v303
  %376 = vmatprep.subr.bf16.mxu0 0
  %377 = vmatpush2.bf16.msra.mxu0 %v302
  %378 = vmatprep.subr.bf16.mxu0 0
  %379 = vmatpush2.bf16.msra.mxu0 %v301
  %380 = vmatprep.subr.bf16.mxu0 0
  %381 = vmatpush2.bf16.msra.mxu0 %v300
  %382 = vmatprep.subr.bf16.mxu0 0
  %383 = vmatpush2.bf16.msra.mxu0 %v299
  %384 = vmatprep.mubr.bf16.mxu0 %v180
  %385 = vmatmul.mubr.bf16.gmra.mxu0 %v179
  %v386 = vpop.f32.mrf.mxu0
  %v387 = vadd.f32 %v83, %v386
  %v388 = vpop.f32.mrf.mxu0
  %v389 = vpop.f32.mrf.mxu0
  %v390 = vadd.f32 %v84, %v389
  %v391 = vpop.f32.mrf.mxu0
  %392 = vmatprep.mubr.bf16.mxu0 %v183
  %393 = vmatmul.mubr.bf16.gmra.mxu0 %v182
  %v394 = vpop.f32.mrf.mxu0
  %v395 = vadd.f32 %v85, %v394
  %v396 = vpop.f32.mrf.mxu0
  %v397 = vpop.f32.mrf.mxu0
  %v398 = vadd.f32 %v86, %v397
  %v399 = vpop.f32.mrf.mxu0
  %400 = vmatprep.mubr.bf16.mxu0 %v186
  %401 = vmatmul.mubr.bf16.gmra.mxu0 %v185
  %v402 = vpop.f32.mrf.mxu0
  %v403 = vadd.f32 %v87, %v402
  %v404 = vpop.f32.mrf.mxu0
  %v405 = vpop.f32.mrf.mxu0
  %v406 = vadd.f32 %v88, %v405
  %v407 = vpop.f32.mrf.mxu0
  %408 = vmatprep.mubr.bf16.mxu0 %v189
  %409 = vmatmul.mubr.bf16.gmra.mxu0 %v188
  %v410 = vpop.f32.mrf.mxu0
  %v411 = vadd.f32 %v89, %v410
  %v412 = vpop.f32.mrf.mxu0
  %v413 = vpop.f32.mrf.mxu0
  %v414 = vadd.f32 %v90, %v413
  %v415 = vpop.f32.mrf.mxu0
  %416 = vmatprep.mubr.bf16.mxu0 %v192
  %417 = vmatmul.mubr.bf16.gmra.mxu0 %v191
  %v418 = vpop.f32.mrf.mxu0
  %v419 = vadd.f32 %v91, %v418
  %v420 = vpop.f32.mrf.mxu0
  %v421 = vpop.f32.mrf.mxu0
  %v422 = vadd.f32 %v92, %v421
  %v423 = vpop.f32.mrf.mxu0
  %424 = vmatprep.mubr.bf16.mxu0 %v195
  %425 = vmatmul.mubr.bf16.gmra.mxu0 %v194
  %v426 = vpop.f32.mrf.mxu0
  %v427 = vadd.f32 %v93, %v426
  %v428 = vpop.f32.mrf.mxu0
  %v429 = vpop.f32.mrf.mxu0
  %v430 = vadd.f32 %v94, %v429
  %v431 = vpop.f32.mrf.mxu0
  %432 = vmatprep.mubr.bf16.mxu0 %v198
  %433 = vmatmul.mubr.bf16.gmra.mxu0 %v197
  %v434 = vpop.f32.mrf.mxu0
  %v435 = vadd.f32 %v95, %v434
  %v436 = vpop.f32.mrf.mxu0
  %v437 = vpop.f32.mrf.mxu0
  %v438 = vadd.f32 %v96, %v437
  %v439 = vpop.f32.mrf.mxu0
  %440 = vmatprep.mubr.bf16.mxu0 %v201
  %441 = vmatmul.mubr.bf16.gmra.mxu0 %v200
  %v442 = vpop.f32.mrf.mxu0
  %v443 = vadd.f32 %v97, %v442
  %v444 = vpop.f32.mrf.mxu0
  %v445 = vpop.f32.mrf.mxu0
  %v446 = vadd.f32 %v98, %v445
  %v447 = vpop.f32.mrf.mxu0
  %448 = vdwg.mxu0
  %449 = vmatprep.subr.bf16.mxu0 0
  %450 = vmatpush1.bf16.msra.mxu0 0
  %451 = vmatprep.subr.bf16.mxu0 0
  %452 = vmatpush1.bf16.msra.mxu0 0
  %453 = vmatprep.subr.bf16.mxu0 0
  %454 = vmatpush1.bf16.msra.mxu0 0
  %455 = vmatprep.subr.bf16.mxu0 0
  %456 = vmatpush1.bf16.msra.mxu0 0
  %457 = vmatprep.subr.bf16.mxu0 0
  %458 = vmatpush1.bf16.msra.mxu0 0
  %459 = vmatprep.subr.bf16.mxu0 0
  %460 = vmatpush1.bf16.msra.mxu0 0
  %461 = vmatprep.subr.bf16.mxu0 0
  %462 = vmatpush1.bf16.msra.mxu0 %v308
  %463 = vmatprep.subr.bf16.mxu0 0
  %464 = vmatpush1.bf16.msra.mxu0 %v307
  %465 = vmatprep.subr.bf16.mxu0 0
  %466 = vmatpush2.bf16.msra.mxu0 0
  %467 = vmatprep.subr.bf16.mxu0 0
  %468 = vmatpush2.bf16.msra.mxu0 0
  %469 = vmatprep.subr.bf16.mxu0 0
  %470 = vmatpush2.bf16.msra.mxu0 0
  %471 = vmatprep.subr.bf16.mxu0 0
  %472 = vmatpush2.bf16.msra.mxu0 0
  %473 = vmatprep.subr.bf16.mxu0 0
  %474 = vmatpush2.bf16.msra.mxu0 0
  %475 = vmatprep.subr.bf16.mxu0 0
  %476 = vmatpush2.bf16.msra.mxu0 0
  %477 = vmatprep.subr.bf16.mxu0 0
  %478 = vmatpush2.bf16.msra.mxu0 0
  %479 = vmatprep.subr.bf16.mxu0 0
  %480 = vmatpush2.bf16.msra.mxu0 0
  %481 = vmatprep.mubr.bf16.mxu0 0
  %482 = vmatmul.mubr.bf16.gmra.mxu0 %v329
  %v483 = vpop.f32.mrf.mxu0
  %v484 = vadd.f32 %v387, %v483
  %v485 = vpop.f32.mrf.mxu0
  %v486 = vpop.f32.mrf.mxu0
  %v487 = vadd.f32 %v390, %v486
  %v488 = vpop.f32.mrf.mxu0
  %489 = vmatprep.mubr.bf16.mxu0 0
  %490 = vmatmul.mubr.bf16.gmra.mxu0 %v332
  %v491 = vpop.f32.mrf.mxu0
  %v492 = vadd.f32 %v395, %v491
  %v493 = vpop.f32.mrf.mxu0
  %v494 = vpop.f32.mrf.mxu0
  %v495 = vadd.f32 %v398, %v494
  %v496 = vpop.f32.mrf.mxu0
  %497 = vmatprep.mubr.bf16.mxu0 0
  %498 = vmatmul.mubr.bf16.gmra.mxu0 %v335
  %v499 = vpop.f32.mrf.mxu0
  %v500 = vadd.f32 %v403, %v499
  %v501 = vpop.f32.mrf.mxu0
  %v502 = vpop.f32.mrf.mxu0
  %v503 = vadd.f32 %v406, %v502
  %v504 = vpop.f32.mrf.mxu0
  %505 = vmatprep.mubr.bf16.mxu0 0
  %506 = vmatmul.mubr.bf16.gmra.mxu0 %v338
  %v507 = vpop.f32.mrf.mxu0
  %v508 = vadd.f32 %v411, %v507
  %v509 = vpop.f32.mrf.mxu0
  %v510 = vpop.f32.mrf.mxu0
  %v511 = vadd.f32 %v414, %v510
  %v512 = vpop.f32.mrf.mxu0
  %513 = vmatprep.mubr.bf16.mxu0 0
  %514 = vmatmul.mubr.bf16.gmra.mxu0 %v341
  %v515 = vpop.f32.mrf.mxu0
  %v516 = vadd.f32 %v419, %v515
  %v517 = vpop.f32.mrf.mxu0
  %v518 = vpop.f32.mrf.mxu0
  %v519 = vadd.f32 %v422, %v518
  %v520 = vpop.f32.mrf.mxu0
  %521 = vmatprep.mubr.bf16.mxu0 0
  %522 = vmatmul.mubr.bf16.gmra.mxu0 %v344
  %v523 = vpop.f32.mrf.mxu0
  %v524 = vadd.f32 %v427, %v523
  %v525 = vpop.f32.mrf.mxu0
  %v526 = vpop.f32.mrf.mxu0
  %v527 = vadd.f32 %v430, %v526
  %v528 = vpop.f32.mrf.mxu0
  %529 = vmatprep.mubr.bf16.mxu0 0
  %530 = vmatmul.mubr.bf16.gmra.mxu0 %v347
  %v531 = vpop.f32.mrf.mxu0
  %v532 = vadd.f32 %v435, %v531
  %v533 = vpop.f32.mrf.mxu0
  %v534 = vpop.f32.mrf.mxu0
  %v535 = vadd.f32 %v438, %v534
  %v536 = vpop.f32.mrf.mxu0
  %537 = vmatprep.mubr.bf16.mxu0 0
  %538 = vmatmul.mubr.bf16.gmra.mxu0 %v350
  %v539 = vpop.f32.mrf.mxu0
  %v540 = vadd.f32 %v443, %v539
  %v541 = vpop.f32.mrf.mxu0
  %v542 = vpop.f32.mrf.mxu0
  %v543 = vadd.f32 %v446, %v542
  %v544 = vpop.f32.mrf.mxu0
  %545 = vdwg.mxu0
  %546 = vst.msk [vmem:[%s3] sm:$0xff] %vm327, %v484
  %547 = vst.msk [vmem:[%s3 + $0x8] sm:$0xff] %vm327, %v487
  %548 = vst.msk [vmem:[%s3 + $0x10] sm:$0xff] %vm327, %v492
  %549 = vst.msk [vmem:[%s3 + $0x18] sm:$0xff] %vm327, %v495
  %550 = vst.msk [vmem:[%s3 + $0x20] sm:$0xff] %vm327, %v500
  %551 = vst.msk [vmem:[%s3 + $0x28] sm:$0xff] %vm327, %v503
  %552 = vst.msk [vmem:[%s3 + $0x30] sm:$0xff] %vm327, %v508
  %553 = vst.msk [vmem:[%s3 + $0x38] sm:$0xff] %vm327, %v511
  %554 = vst.msk [vmem:[%s3 + $0x40] sm:$0xff] %vm327, %v516
  %555 = vst.msk [vmem:[%s3 + $0x48] sm:$0xff] %vm327, %v519
  %556 = vst.msk [vmem:[%s3 + $0x50] sm:$0xff] %vm327, %v524
  %557 = vst.msk [vmem:[%s3 + $0x58] sm:$0xff] %vm327, %v527
  %558 = vst.msk [vmem:[%s3 + $0x60] sm:$0xff] %vm327, %v532
  %559 = vst.msk [vmem:[%s3 + $0x68] sm:$0xff] %vm327, %v535
  %560 = vst.msk [vmem:[%s3 + $0x70] sm:$0xff] %vm327, %v540
  %561 = vst.msk [vmem:[%s3 + $0x78] sm:$0xff] %vm327, %v543
  // Predicated region
  $region14: #{resnet_forward.20} parent=0 // pred_check
    _
  $region15: #{resnet_forward.20} parent=0 // pred_check_branch
    %563 = sbr.rel (0) target = $region17
  $region16: #{resnet_forward.20} parent=0 // pred_region
    _
  $region17: #{resnet_forward.20} parent=0 // pred_fallthru
    _
  // Predicated region
  $region18: #{resnet_forward.20} parent=0 // pred_check
    _
  $region19: #{resnet_forward.20} parent=0 // pred_check_branch
    %565 = sbr.rel (0) target = $region21
  $region20: #{resnet_forward.20} parent=0 // pred_region
    _
  $region21: #{resnet_forward.20} parent=0 // pred_fallthru
    _

// kernel: resnet_forward.21
$region0: #{resnet_forward.21}
  #allocation0 [shape = 'u32[]', space=smem, size = 0x4, offset = 0x4, fixed_abs, tag = 'smem constant byte address 0x4 - core index']
  #allocation1 [shape = 'u32[144,128]{1,0:T(1,128)}', space=vmem, size = 0x12000, scoped, tag = 'internal scratch']
  %s0 = inlined_call_operand.vmem [shape: f32[128,32], index: 0, kind: input, shape index: {}]
  %s1 = inlined_call_operand.vmem [shape: f32[1,32], index: 1, kind: input, shape index: {}]
  %s2 = inlined_call_operand.vmem [shape: f32[1,32], index: 2, kind: input, shape index: {}]
  %s3 = inlined_call_operand.vmem [shape: f32[128,32], index: 3, kind: output, shape index: {}]
  %s4 = sld [smem:[#allocation0]]
  $region22: #{resnet_forward.21} parent=0
    _
  %s6 = ssub.s32 1, %s4
  %s7 = scalar_select 0, %s6, %s4
  // Predicated region
  $region2: #{resnet_forward.21} parent=0 // pred_check
    _
  $region3: #{resnet_forward.21} parent=0 // pred_check_branch
    %9 = sbr.rel (0) target = $region5
  $region4: #{resnet_forward.21} parent=0 // pred_region
    _
  $region5: #{resnet_forward.21} parent=0 // pred_fallthru
    _
  // Predicated region
  $region6: #{resnet_forward.21} parent=0 // pred_check
    _
  $region7: #{resnet_forward.21} parent=0 // pred_check_branch
    %11 = sbr.rel (0) target = $region9
  $region8: #{resnet_forward.21} parent=0 // pred_region
    _
  $region9: #{resnet_forward.21} parent=0 // pred_fallthru
    _
  // Predicated region
  $region10: #{resnet_forward.21} parent=0 // pred_check
    _
  $region11: #{resnet_forward.21} parent=0 // pred_check_branch
    %13 = sbr.rel (0) target = $region13
  $region12: #{resnet_forward.21} parent=0 // pred_region
    _
  $region13: #{resnet_forward.21} parent=0 // pred_fallthru
    _
  %v14 = vld [vmem:[%s0] sm:$0xff]
  %v15 = vld [vmem:[%s0 + $0x8] sm:$0xff]
  %v16 = vld [vmem:[%s0 + $0x10] sm:$0xff]
  %v17 = vld [vmem:[%s0 + $0x18] sm:$0xff]
  %v18 = vld [vmem:[%s0 + $0x20] sm:$0xff]
  %v19 = vld [vmem:[%s0 + $0x28] sm:$0xff]
  %v20 = vld [vmem:[%s0 + $0x30] sm:$0xff]
  %v21 = vld [vmem:[%s0 + $0x38] sm:$0xff]
  %v22 = vld [vmem:[%s0 + $0x40] sm:$0xff]
  %v23 = vld [vmem:[%s0 + $0x48] sm:$0xff]
  %v24 = vld [vmem:[%s0 + $0x50] sm:$0xff]
  %v25 = vld [vmem:[%s0 + $0x58] sm:$0xff]
  %v26 = vld [vmem:[%s0 + $0x60] sm:$0xff]
  %v27 = vld [vmem:[%s0 + $0x68] sm:$0xff]
  %v28 = vld [vmem:[%s0 + $0x70] sm:$0xff]
  %v29 = vld [vmem:[%s0 + $0x78] sm:$0xff]
  %v30 = vld [vmem:[%s1] sm:$0x1]
  %v32 = vlaneseq
  %v33 = vshrl.u32 %v32, 7
  %v34 = vsub.s32 0, %v33
  %v35 = vrot.slane %v30, %v34
  %v37 = vmul.f32 %v14, %v35
  %v38 = vmul.f32 %v15, %v35
  %v39 = vmul.f32 %v16, %v35
  %v40 = vmul.f32 %v17, %v35
  %v41 = vmul.f32 %v18, %v35
  %v42 = vmul.f32 %v19, %v35
  %v43 = vmul.f32 %v20, %v35
  %v44 = vmul.f32 %v21, %v35
  %v45 = vmul.f32 %v22, %v35
  %v46 = vmul.f32 %v23, %v35
  %v47 = vmul.f32 %v24, %v35
  %v48 = vmul.f32 %v25, %v35
  %v49 = vmul.f32 %v26, %v35
  %v50 = vmul.f32 %v27, %v35
  %v51 = vmul.f32 %v28, %v35
  %v52 = vmul.f32 %v29, %v35
  %v53 = vld [vmem:[%s2] sm:$0x1]
  %v55 = vlaneseq
  %v56 = vshrl.u32 %v55, 7
  %v57 = vsub.s32 0, %v56
  %v58 = vrot.slane %v53, %v57
  %v60 = vadd.f32 %v37, %v58
  %v61 = vadd.f32 %v38, %v58
  %v62 = vadd.f32 %v39, %v58
  %v63 = vadd.f32 %v40, %v58
  %v64 = vadd.f32 %v41, %v58
  %v65 = vadd.f32 %v42, %v58
  %v66 = vadd.f32 %v43, %v58
  %v67 = vadd.f32 %v44, %v58
  %v68 = vadd.f32 %v45, %v58
  %v69 = vadd.f32 %v46, %v58
  %v70 = vadd.f32 %v47, %v58
  %v71 = vadd.f32 %v48, %v58
  %v72 = vadd.f32 %v49, %v58
  %v73 = vadd.f32 %v50, %v58
  %v74 = vadd.f32 %v51, %v58
  %v75 = vadd.f32 %v52, %v58
  %v76 = vmax.f32 %v60, 0.0
  %v77 = vmax.f32 %v61, 0.0
  %v78 = vmax.f32 %v62, 0.0
  %v79 = vmax.f32 %v63, 0.0
  %v80 = vmax.f32 %v64, 0.0
  %v81 = vmax.f32 %v65, 0.0
  %v82 = vmax.f32 %v66, 0.0
  %v83 = vmax.f32 %v67, 0.0
  %v84 = vmax.f32 %v68, 0.0
  %v85 = vmax.f32 %v69, 0.0
  %v86 = vmax.f32 %v70, 0.0
  %v87 = vmax.f32 %v71, 0.0
  %v88 = vmax.f32 %v72, 0.0
  %v89 = vmax.f32 %v73, 0.0
  %v90 = vmax.f32 %v74, 0.0
  %v91 = vmax.f32 %v75, 0.0
  %vm92 = vcmask 261120
  %93 = vst.msk [vmem:[%s3] sm:$0xff] %vm92, %v76
  %94 = vst.msk [vmem:[%s3 + $0x8] sm:$0xff] %vm92, %v77
  %95 = vst.msk [vmem:[%s3 + $0x10] sm:$0xff] %vm92, %v78
  %96 = vst.msk [vmem:[%s3 + $0x18] sm:$0xff] %vm92, %v79
  %97 = vst.msk [vmem:[%s3 + $0x20] sm:$0xff] %vm92, %v80
  %98 = vst.msk [vmem:[%s3 + $0x28] sm:$0xff] %vm92, %v81
  %99 = vst.msk [vmem:[%s3 + $0x30] sm:$0xff] %vm92, %v82
  %100 = vst.msk [vmem:[%s3 + $0x38] sm:$0xff] %vm92, %v83
  %101 = vst.msk [vmem:[%s3 + $0x40] sm:$0xff] %vm92, %v84
  %102 = vst.msk [vmem:[%s3 + $0x48] sm:$0xff] %vm92, %v85
  %103 = vst.msk [vmem:[%s3 + $0x50] sm:$0xff] %vm92, %v86
  %104 = vst.msk [vmem:[%s3 + $0x58] sm:$0xff] %vm92, %v87
  %105 = vst.msk [vmem:[%s3 + $0x60] sm:$0xff] %vm92, %v88
  %106 = vst.msk [vmem:[%s3 + $0x68] sm:$0xff] %vm92, %v89
  %107 = vst.msk [vmem:[%s3 + $0x70] sm:$0xff] %vm92, %v90
  %108 = vst.msk [vmem:[%s3 + $0x78] sm:$0xff] %vm92, %v91
  // Predicated region
  $region14: #{resnet_forward.21} parent=0 // pred_check
    _
  $region15: #{resnet_forward.21} parent=0 // pred_check_branch
    %110 = sbr.rel (0) target = $region17
  $region16: #{resnet_forward.21} parent=0 // pred_region
    _
  $region17: #{resnet_forward.21} parent=0 // pred_fallthru
    _
  // Predicated region
  $region18: #{resnet_forward.21} parent=0 // pred_check
    _
  $region19: #{resnet_forward.21} parent=0 // pred_check_branch
    %112 = sbr.rel (0) target = $region21
  $region20: #{resnet_forward.21} parent=0 // pred_region
    _
  $region21: #{resnet_forward.21} parent=0 // pred_fallthru
    _

// kernel: resnet_forward.23
$region0: #{resnet_forward.23}
  #allocation0 [shape = 'u32[]', space=smem, size = 0x4, offset = 0x4, fixed_abs, tag = 'smem constant byte address 0x4 - core index']
  #allocation1 [shape = 'u32[144,128]{1,0:T(1,128)}', space=vmem, size = 0x12000, scoped, tag = 'internal scratch']
  %s0 = inlined_call_operand.vmem [shape: bf16[32,32], index: 0, kind: input, shape index: {}]
  %s1 = inlined_call_operand.vmem [shape: bf16[32,64], index: 1, kind: input, shape index: {}]
  %s2 = inlined_call_operand.vmem [shape: f32[32,64], index: 2, kind: output, shape index: {}]
  %s3 = sld [smem:[#allocation0]]
  $region18: #{resnet_forward.23} parent=0
    _
  %s5 = ssub.s32 1, %s3
  %s6 = scalar_select 0, %s5, %s3
  // Predicated region
  $region2: #{resnet_forward.23} parent=0 // pred_check
    _
  $region3: #{resnet_forward.23} parent=0 // pred_check_branch
    %8 = sbr.rel (0) target = $region5
  $region4: #{resnet_forward.23} parent=0 // pred_region
    _
  $region5: #{resnet_forward.23} parent=0 // pred_fallthru
    _
  // Predicated region
  $region6: #{resnet_forward.23} parent=0 // pred_check
    _
  $region7: #{resnet_forward.23} parent=0 // pred_check_branch
    %10 = sbr.rel (0) target = $region9
  $region8: #{resnet_forward.23} parent=0 // pred_region
    _
  $region9: #{resnet_forward.23} parent=0 // pred_fallthru
    _
  %v12 = vld [vmem:[%s0] sm:$0xf]
  %v13 = vld [vmem:[%s0 + $0x4] sm:$0xf]
  %v14 = vld [vmem:[%s0 + $0x8] sm:$0xf]
  %v15 = vld [vmem:[%s0 + $0xc] sm:$0xf]
  %v16 = vld [vmem:[%s1] sm:$0xf]
  %v17 = vld [vmem:[%s1 + $0x4] sm:$0xf]
  %v18 = vld [vmem:[%s1 + $0x8] sm:$0xf]
  %v19 = vld [vmem:[%s1 + $0xc] sm:$0xf]
  %v24 = vunpack.c.l.b16 %v12
  %v25 = vunpack.c.l.b16 %v13
  %v26 = vunpack.c.l.b16 %v14
  %v27 = vunpack.c.l.b16 %v15
  %v28 = vpack.c.b16 %v25, %v24
  %v29 = vpack.c.b16 %v27, %v26
  %v34 = vunpack.c.l.b16 %v16
  %v35 = vunpack.c.l.b16 %v17
  %v36 = vunpack.c.l.b16 %v18
  %v37 = vunpack.c.l.b16 %v19
  %v38 = vpack.c.b16 %v35, %v34
  %v39 = vpack.c.b16 %v37, %v36
  %vm42 = vcmask 261120
  %v44 = vsel %vm42, %v28, 0
  %v47 = vsel %vm42, %v29, 0
  %49 = vmatprep.subr.bf16.mxu0 0
  %50 = vmatpush1.bf16.msra.mxu0 0
  %51 = vmatprep.subr.bf16.mxu0 0
  %52 = vmatpush1.bf16.msra.mxu0 0
  %53 = vmatprep.subr.bf16.mxu0 0
  %54 = vmatpush1.bf16.msra.mxu0 0
  %55 = vmatprep.subr.bf16.mxu0 0
  %56 = vmatpush1.bf16.msra.mxu0 0
  %57 = vmatprep.subr.bf16.mxu0 0
  %58 = vmatpush1.bf16.msra.mxu0 0
  %59 = vmatprep.subr.bf16.mxu0 0
  %60 = vmatpush1.bf16.msra.mxu0 0
  %61 = vmatprep.subr.bf16.mxu0 0
  %62 = vmatpush1.bf16.msra.mxu0 %v39
  %63 = vmatprep.subr.bf16.mxu0 0
  %64 = vmatpush1.bf16.msra.mxu0 %v38
  %65 = vmatprep.subr.bf16.mxu0 0
  %66 = vmatpush2.bf16.msra.mxu0 0
  %67 = vmatprep.subr.bf16.mxu0 0
  %68 = vmatpush2.bf16.msra.mxu0 0
  %69 = vmatprep.subr.bf16.mxu0 0
  %70 = vmatpush2.bf16.msra.mxu0 0
  %71 = vmatprep.subr.bf16.mxu0 0
  %72 = vmatpush2.bf16.msra.mxu0 0
  %73 = vmatprep.subr.bf16.mxu0 0
  %74 = vmatpush2.bf16.msra.mxu0 0
  %75 = vmatprep.subr.bf16.mxu0 0
  %76 = vmatpush2.bf16.msra.mxu0 0
  %77 = vmatprep.subr.bf16.mxu0 0
  %78 = vmatpush2.bf16.msra.mxu0 0
  %79 = vmatprep.subr.bf16.mxu0 0
  %80 = vmatpush2.bf16.msra.mxu0 0
  %81 = vmatprep.mubr.bf16.mxu0 0
  %82 = vmatmul.mubr.bf16.gmra.mxu0 %v44
  %v83 = vpop.f32.mrf.mxu0
  %v84 = vadd.f32 0.0, %v83
  %v85 = vpop.f32.mrf.mxu0
  %v86 = vpop.f32.mrf.mxu0
  %v87 = vadd.f32 0.0, %v86
  %v88 = vpop.f32.mrf.mxu0
  %89 = vmatprep.mubr.bf16.mxu0 0
  %90 = vmatmul.mubr.bf16.gmra.mxu0 %v47
  %v91 = vpop.f32.mrf.mxu0
  %v92 = vadd.f32 0.0, %v91
  %v93 = vpop.f32.mrf.mxu0
  %v94 = vpop.f32.mrf.mxu0
  %v95 = vadd.f32 0.0, %v94
  %v96 = vpop.f32.mrf.mxu0
  %97 = vdwg.mxu0
  %vm98 = vcmask 523264
  %99 = vst.msk [vmem:[%s2] sm:$0xff] %vm98, %v84
  %100 = vst.msk [vmem:[%s2 + $0x8] sm:$0xff] %vm98, %v87
  %101 = vst.msk [vmem:[%s2 + $0x10] sm:$0xff] %vm98, %v92
  %102 = vst.msk [vmem:[%s2 + $0x18] sm:$0xff] %vm98, %v95
  // Predicated region
  $region10: #{resnet_forward.23} parent=0 // pred_check
    _
  $region11: #{resnet_forward.23} parent=0 // pred_check_branch
    %104 = sbr.rel (0) target = $region13
  $region12: #{resnet_forward.23} parent=0 // pred_region
    _
  $region13: #{resnet_forward.23} parent=0 // pred_fallthru
    _
  // Predicated region
  $region14: #{resnet_forward.23} parent=0 // pred_check
    _
  $region15: #{resnet_forward.23} parent=0 // pred_check_branch
    %106 = sbr.rel (0) target = $region17
  $region16: #{resnet_forward.23} parent=0 // pred_region
    _
  $region17: #{resnet_forward.23} parent=0 // pred_fallthru
    _

// kernel: resnet_forward.22
$region0: #{resnet_forward.22}
  #allocation0 [shape = 'u32[]', space=smem, size = 0x4, offset = 0x4, fixed_abs, tag = 'smem constant byte address 0x4 - core index']
  #allocation1 [shape = 'u32[144,128]{1,0:T(1,128)}', space=vmem, size = 0x12000, scoped, tag = 'internal scratch']
  %s0 = inlined_call_operand.vmem [shape: bf16[32,288], index: 0, kind: input, shape index: {}]
  %s1 = inlined_call_operand.vmem [shape: bf16[288,64], index: 1, kind: input, shape index: {}]
  %s2 = inlined_call_operand.vmem [shape: f32[1,64], index: 2, kind: input, shape index: {}]
  %s3 = inlined_call_operand.vmem [shape: f32[1,64], index: 3, kind: input, shape index: {}]
  %s4 = inlined_call_operand.vmem [shape: f32[1,64], index: 4, kind: input, shape index: {}]
  %s5 = inlined_call_operand.vmem [shape: f32[32,64], index: 5, kind: output, shape index: {}]
  %s6 = sld [smem:[#allocation0]]
  $region30: #{resnet_forward.22} parent=0
    _
  %s8 = ssub.s32 1, %s6
  %s9 = scalar_select 0, %s8, %s6
  // Predicated region
  $region2: #{resnet_forward.22} parent=0 // pred_check
    _
  $region3: #{resnet_forward.22} parent=0 // pred_check_branch
    %11 = sbr.rel (0) target = $region5
  $region4: #{resnet_forward.22} parent=0 // pred_region
    _
  $region5: #{resnet_forward.22} parent=0 // pred_fallthru
    _
  // Predicated region
  $region6: #{resnet_forward.22} parent=0 // pred_check
    _
  $region7: #{resnet_forward.22} parent=0 // pred_check_branch
    %13 = sbr.rel (0) target = $region9
  $region8: #{resnet_forward.22} parent=0 // pred_region
    _
  $region9: #{resnet_forward.22} parent=0 // pred_fallthru
    _
  // Predicated region
  $region10: #{resnet_forward.22} parent=0 // pred_check
    _
  $region11: #{resnet_forward.22} parent=0 // pred_check_branch
    %15 = sbr.rel (0) target = $region13
  $region12: #{resnet_forward.22} parent=0 // pred_region
    _
  $region13: #{resnet_forward.22} parent=0 // pred_fallthru
    _
  // Predicated region
  $region14: #{resnet_forward.22} parent=0 // pred_check
    _
  $region15: #{resnet_forward.22} parent=0 // pred_check_branch
    %17 = sbr.rel (0) target = $region17
  $region16: #{resnet_forward.22} parent=0 // pred_region
    _
  $region17: #{resnet_forward.22} parent=0 // pred_fallthru
    _
  // Predicated region
  $region18: #{resnet_forward.22} parent=0 // pred_check
    _
  $region19: #{resnet_forward.22} parent=0 // pred_check_branch
    %19 = sbr.rel (0) target = $region21
  $region20: #{resnet_forward.22} parent=0 // pred_region
    _
  $region21: #{resnet_forward.22} parent=0 // pred_fallthru
    _
  %v21 = vld [vmem:[%s0] sm:$0xff]
  %v22 = vld [vmem:[%s0 + $0x8] sm:$0xf]
  %v23 = vld [vmem:[%s0 + $0xc] sm:$0xff]
  %v24 = vld [vmem:[%s0 + $0x14] sm:$0xf]
  %v25 = vld [vmem:[%s0 + $0x18] sm:$0xff]
  %v26 = vld [vmem:[%s0 + $0x20] sm:$0xf]
  %v27 = vld [vmem:[%s0 + $0x24] sm:$0xff]
  %v28 = vld [vmem:[%s0 + $0x2c] sm:$0xf]
  %v29 = vld [vmem:[%s1] sm:$0xf]
  %v30 = vld [vmem:[%s1 + $0x4] sm:$0xf]
  %v31 = vld [vmem:[%s1 + $0x8] sm:$0xf]
  %v32 = vld [vmem:[%s1 + $0xc] sm:$0xf]
  %v33 = vld [vmem:[%s1 + $0x10] sm:$0xf]
  %v34 = vld [vmem:[%s1 + $0x14] sm:$0xf]
  %v35 = vld [vmem:[%s1 + $0x18] sm:$0xf]
  %v36 = vld [vmem:[%s1 + $0x1c] sm:$0xf]
  %v37 = vld [vmem:[%s1 + $0x20] sm:$0xf]
  %v38 = vld [vmem:[%s1 + $0x24] sm:$0xf]
  %v39 = vld [vmem:[%s1 + $0x28] sm:$0xf]
  %v40 = vld [vmem:[%s1 + $0x2c] sm:$0xf]
  %v41 = vld [vmem:[%s1 + $0x30] sm:$0xf]
  %v42 = vld [vmem:[%s1 + $0x34] sm:$0xf]
  %v43 = vld [vmem:[%s1 + $0x38] sm:$0xf]
  %v44 = vld [vmem:[%s1 + $0x3c] sm:$0xf]
  %v45 = vld [vmem:[%s1 + $0x40] sm:$0xf]
  %v46 = vld [vmem:[%s1 + $0x44] sm:$0xf]
  %v47 = vld [vmem:[%s1 + $0x48] sm:$0xf]
  %v48 = vld [vmem:[%s1 + $0x4c] sm:$0xf]
  %v49 = vld [vmem:[%s1 + $0x50] sm:$0xf]
  %v50 = vld [vmem:[%s1 + $0x54] sm:$0xf]
  %v51 = vld [vmem:[%s1 + $0x58] sm:$0xf]
  %v52 = vld [vmem:[%s1 + $0x5c] sm:$0xf]
  %v53 = vld [vmem:[%s1 + $0x60] sm:$0xf]
  %v54 = vld [vmem:[%s1 + $0x64] sm:$0xf]
  %v55 = vld [vmem:[%s1 + $0x68] sm:$0xf]
  %v56 = vld [vmem:[%s1 + $0x6c] sm:$0xf]
  %v57 = vld [vmem:[%s1 + $0x70] sm:$0xf]
  %v58 = vld [vmem:[%s1 + $0x74] sm:$0xf]
  %v59 = vld [vmem:[%s1 + $0x78] sm:$0xf]
  %v60 = vld [vmem:[%s1 + $0x7c] sm:$0xf]
  %v61 = vld [vmem:[%s1 + $0x80] sm:$0xf]
  %v62 = vld [vmem:[%s1 + $0x84] sm:$0xf]
  %v63 = vld [vmem:[%s1 + $0x88] sm:$0xf]
  %v64 = vld [vmem:[%s1 + $0x8c] sm:$0xf]
  %v65 = vld [vmem:[%s2] sm:$0x1]
  %v67 = vlaneseq
  %v68 = vshrl.u32 %v67, 7
  %v69 = vsub.s32 0, %v68
  %v70 = vrot.slane %v65, %v69
  %v80 = vunpack.c.l.b16 %v21
  %v81 = vunpack.c.h.b16 %v21
  %v82 = vunpack.c.l.b16 %v22
  %v83 = vunpack.c.l.b16 %v23
  %v84 = vunpack.c.h.b16 %v23
  %v85 = vunpack.c.l.b16 %v24
  %v86 = vunpack.c.l.b16 %v25
  %v87 = vunpack.c.h.b16 %v25
  %v88 = vunpack.c.l.b16 %v26
  %v89 = vunpack.c.l.b16 %v27
  %v90 = vunpack.c.h.b16 %v27
  %v91 = vunpack.c.l.b16 %v28
  %v92 = vpack.c.b16 %v83, %v80
  %v93 = vpack.c.b16 %v84, %v81
  %v94 = vpack.c.b16 %v85, %v82
  %v95 = vpack.c.b16 %v89, %v86
  %v96 = vpack.c.b16 %v90, %v87
  %v97 = vpack.c.b16 %v91, %v88
  %v138 = vunpack.c.l.b16 %v29
  %v139 = vunpack.c.l.b16 %v30
  %v140 = vunpack.c.l.b16 %v31
  %v141 = vunpack.c.l.b16 %v32
  %v142 = vunpack.c.l.b16 %v33
  %v143 = vunpack.c.l.b16 %v34
  %v144 = vunpack.c.l.b16 %v35
  %v145 = vunpack.c.l.b16 %v36
  %v146 = vunpack.c.l.b16 %v37
  %v147 = vunpack.c.l.b16 %v38
  %v148 = vunpack.c.l.b16 %v39
  %v149 = vunpack.c.l.b16 %v40
  %v150 = vunpack.c.l.b16 %v41
  %v151 = vunpack.c.l.b16 %v42
  %v152 = vunpack.c.l.b16 %v43
  %v153 = vunpack.c.l.b16 %v44
  %v154 = vunpack.c.l.b16 %v45
  %v155 = vunpack.c.l.b16 %v46
  %v156 = vunpack.c.l.b16 %v47
  %v157 = vunpack.c.l.b16 %v48
  %v158 = vunpack.c.l.b16 %v49
  %v159 = vunpack.c.l.b16 %v50
  %v160 = vunpack.c.l.b16 %v51
  %v161 = vunpack.c.l.b16 %v52
  %v162 = vunpack.c.l.b16 %v53
  %v163 = vunpack.c.l.b16 %v54
  %v164 = vunpack.c.l.b16 %v55
  %v165 = vunpack.c.l.b16 %v56
  %v166 = vunpack.c.l.b16 %v57
  %v167 = vunpack.c.l.b16 %v58
  %v168 = vunpack.c.l.b16 %v59
  %v169 = vunpack.c.l.b16 %v60
  %v170 = vunpack.c.l.b16 %v61
  %v171 = vunpack.c.l.b16 %v62
  %v172 = vunpack.c.l.b16 %v63
  %v173 = vunpack.c.l.b16 %v64
  %v174 = vpack.c.b16 %v139, %v138
  %v175 = vpack.c.b16 %v141, %v140
  %v176 = vpack.c.b16 %v143, %v142
  %v177 = vpack.c.b16 %v145, %v144
  %v178 = vpack.c.b16 %v147, %v146
  %v179 = vpack.c.b16 %v149, %v148
  %v180 = vpack.c.b16 %v151, %v150
  %v181 = vpack.c.b16 %v153, %v152
  %v182 = vpack.c.b16 %v155, %v154
  %v183 = vpack.c.b16 %v157, %v156
  %v184 = vpack.c.b16 %v159, %v158
  %v185 = vpack.c.b16 %v161, %v160
  %v186 = vpack.c.b16 %v163, %v162
  %v187 = vpack.c.b16 %v165, %v164
  %v188 = vpack.c.b16 %v167, %v166
  %v189 = vpack.c.b16 %v169, %v168
  %v190 = vpack.c.b16 %v171, %v170
  %v191 = vpack.c.b16 %v173, %v172
  %vm210 = vcmask 261120
  %v212 = vsel %vm210, %v94, 0
  %v215 = vsel %vm210, %v97, 0
  %217 = vmatprep.subr.bf16.mxu0 0
  %218 = vmatpush1.bf16.msra.mxu0 %v181
  %219 = vmatprep.subr.bf16.mxu0 0
  %220 = vmatpush1.bf16.msra.mxu0 %v180
  %221 = vmatprep.subr.bf16.mxu0 0
  %222 = vmatpush1.bf16.msra.mxu0 %v179
  %223 = vmatprep.subr.bf16.mxu0 0
  %224 = vmatpush1.bf16.msra.mxu0 %v178
  %225 = vmatprep.subr.bf16.mxu0 0
  %226 = vmatpush1.bf16.msra.mxu0 %v177
  %227 = vmatprep.subr.bf16.mxu0 0
  %228 = vmatpush1.bf16.msra.mxu0 %v176
  %229 = vmatprep.subr.bf16.mxu0 0
  %230 = vmatpush1.bf16.msra.mxu0 %v175
  %231 = vmatprep.subr.bf16.mxu0 0
  %232 = vmatpush1.bf16.msra.mxu0 %v174
  %233 = vmatprep.subr.bf16.mxu0 0
  %234 = vmatpush2.bf16.msra.mxu0 %v189
  %235 = vmatprep.subr.bf16.mxu0 0
  %236 = vmatpush2.bf16.msra.mxu0 %v188
  %237 = vmatprep.subr.bf16.mxu0 0
  %238 = vmatpush2.bf16.msra.mxu0 %v187
  %239 = vmatprep.subr.bf16.mxu0 0
  %240 = vmatpush2.bf16.msra.mxu0 %v186
  %241 = vmatprep.subr.bf16.mxu0 0
  %242 = vmatpush2.bf16.msra.mxu0 %v185
  %243 = vmatprep.subr.bf16.mxu0 0
  %244 = vmatpush2.bf16.msra.mxu0 %v184
  %245 = vmatprep.subr.bf16.mxu0 0
  %246 = vmatpush2.bf16.msra.mxu0 %v183
  %247 = vmatprep.subr.bf16.mxu0 0
  %248 = vmatpush2.bf16.msra.mxu0 %v182
  %249 = vmatprep.mubr.bf16.mxu0 %v93
  %250 = vmatmul.mubr.bf16.gmra.mxu0 %v92
  %v251 = vpop.f32.mrf.mxu0
  %v252 = vadd.f32 %v70, %v251
  %v253 = vpop.f32.mrf.mxu0
  %v254 = vpop.f32.mrf.mxu0
  %v255 = vadd.f32 %v70, %v254
  %v256 = vpop.f32.mrf.mxu0
  %257 = vmatprep.mubr.bf16.mxu0 %v96
  %258 = vmatmul.mubr.bf16.gmra.mxu0 %v95
  %v259 = vpop.f32.mrf.mxu0
  %v260 = vadd.f32 %v70, %v259
  %v261 = vpop.f32.mrf.mxu0
  %v262 = vpop.f32.mrf.mxu0
  %v263 = vadd.f32 %v70, %v262
  %v264 = vpop.f32.mrf.mxu0
  %265 = vdwg.mxu0
  %266 = vmatprep.subr.bf16.mxu0 0
  %267 = vmatpush1.bf16.msra.mxu0 0
  %268 = vmatprep.subr.bf16.mxu0 0
  %269 = vmatpush1.bf16.msra.mxu0 0
  %270 = vmatprep.subr.bf16.mxu0 0
  %271 = vmatpush1.bf16.msra.mxu0 0
  %272 = vmatprep.subr.bf16.mxu0 0
  %273 = vmatpush1.bf16.msra.mxu0 0
  %274 = vmatprep.subr.bf16.mxu0 0
  %275 = vmatpush1.bf16.msra.mxu0 0
  %276 = vmatprep.subr.bf16.mxu0 0
  %277 = vmatpush1.bf16.msra.mxu0 0
  %278 = vmatprep.subr.bf16.mxu0 0
  %279 = vmatpush1.bf16.msra.mxu0 %v191
  %280 = vmatprep.subr.bf16.mxu0 0
  %281 = vmatpush1.bf16.msra.mxu0 %v190
  %282 = vmatprep.subr.bf16.mxu0 0
  %283 = vmatpush2.bf16.msra.mxu0 0
  %284 = vmatprep.subr.bf16.mxu0 0
  %285 = vmatpush2.bf16.msra.mxu0 0
  %286 = vmatprep.subr.bf16.mxu0 0
  %287 = vmatpush2.bf16.msra.mxu0 0
  %288 = vmatprep.subr.bf16.mxu0 0
  %289 = vmatpush2.bf16.msra.mxu0 0
  %290 = vmatprep.subr.bf16.mxu0 0
  %291 = vmatpush2.bf16.msra.mxu0 0
  %292 = vmatprep.subr.bf16.mxu0 0
  %293 = vmatpush2.bf16.msra.mxu0 0
  %294 = vmatprep.subr.bf16.mxu0 0
  %295 = vmatpush2.bf16.msra.mxu0 0
  %296 = vmatprep.subr.bf16.mxu0 0
  %297 = vmatpush2.bf16.msra.mxu0 0
  %298 = vmatprep.mubr.bf16.mxu0 0
  %299 = vmatmul.mubr.bf16.gmra.mxu0 %v212
  %v300 = vpop.f32.mrf.mxu0
  %v301 = vadd.f32 %v252, %v300
  %v302 = vpop.f32.mrf.mxu0
  %v303 = vpop.f32.mrf.mxu0
  %v304 = vadd.f32 %v255, %v303
  %v305 = vpop.f32.mrf.mxu0
  %306 = vmatprep.mubr.bf16.mxu0 0
  %307 = vmatmul.mubr.bf16.gmra.mxu0 %v215
  %v308 = vpop.f32.mrf.mxu0
  %v309 = vadd.f32 %v260, %v308
  %v310 = vpop.f32.mrf.mxu0
  %v311 = vpop.f32.mrf.mxu0
  %v312 = vadd.f32 %v263, %v311
  %v313 = vpop.f32.mrf.mxu0
  %314 = vdwg.mxu0
  %v315 = vld [vmem:[%s3] sm:$0x1]
  %v317 = vlaneseq
  %v318 = vshrl.u32 %v317, 7
  %v319 = vsub.s32 0, %v318
  %v320 = vrot.slane %v315, %v319
  %v322 = vmul.f32 %v301, %v320
  %v323 = vmul.f32 %v304, %v320
  %v324 = vmul.f32 %v309, %v320
  %v325 = vmul.f32 %v312, %v320
  %v326 = vld [vmem:[%s4] sm:$0x1]
  %v328 = vlaneseq
  %v329 = vshrl.u32 %v328, 7
  %v330 = vsub.s32 0, %v329
  %v331 = vrot.slane %v326, %v330
  %v333 = vadd.f32 %v322, %v331
  %v334 = vadd.f32 %v323, %v331
  %v335 = vadd.f32 %v324, %v331
  %v336 = vadd.f32 %v325, %v331
  %v337 = vmax.f32 %v333, 0.0
  %v338 = vmax.f32 %v334, 0.0
  %v339 = vmax.f32 %v335, 0.0
  %v340 = vmax.f32 %v336, 0.0
  %vm341 = vcmask 523264
  %342 = vst.msk [vmem:[%s5] sm:$0xff] %vm341, %v337
  %343 = vst.msk [vmem:[%s5 + $0x8] sm:$0xff] %vm341, %v338
  %344 = vst.msk [vmem:[%s5 + $0x10] sm:$0xff] %vm341, %v339
  %345 = vst.msk [vmem:[%s5 + $0x18] sm:$0xff] %vm341, %v340
  // Predicated region
  $region22: #{resnet_forward.22} parent=0 // pred_check
    _
  $region23: #{resnet_forward.22} parent=0 // pred_check_branch
    %347 = sbr.rel (0) target = $region25
  $region24: #{resnet_forward.22} parent=0 // pred_region
    _
  $region25: #{resnet_forward.22} parent=0 // pred_fallthru
    _
  // Predicated region
  $region26: #{resnet_forward.22} parent=0 // pred_check
    _
  $region27: #{resnet_forward.22} parent=0 // pred_check_branch
    %349 = sbr.rel (0) target = $region29
  $region28: #{resnet_forward.22} parent=0 // pred_region
    _
  $region29: #{resnet_forward.22} parent=0 // pred_fallthru
    _

// kernel: resnet_forward.25
$region0: #{resnet_forward.25}
  #allocation0 [shape = 'u32[]', space=smem, size = 0x4, offset = 0x4, fixed_abs, tag = 'smem constant byte address 0x4 - core index']
  #allocation1 [shape = 'u32[144,128]{1,0:T(1,128)}', space=vmem, size = 0x12000, scoped, tag = 'internal scratch']
  %s0 = inlined_call_operand.vmem [shape: f32[2,16,64], index: 0, kind: input, shape index: {}]
  %s1 = inlined_call_operand.vmem [shape: f32[1,1,64], index: 1, kind: input, shape index: {}]
  %s2 = inlined_call_operand.vmem [shape: f32[1,1,64], index: 2, kind: input, shape index: {}]
  %s3 = inlined_call_operand.vmem [shape: f32[64,10], index: 3, kind: input, shape index: {}]
  %s4 = inlined_call_operand.vmem [shape: f32[1,10], index: 4, kind: input, shape index: {}]
  %s5 = inlined_call_operand.hbm [shape: f32[2,10], index: 5, kind: output, shape index: {}]
  %s6 = sld [smem:[#allocation0]]
  $region30: #{resnet_forward.25} parent=0
    _
  %s8 = ssub.s32 1, %s6
  %s9 = scalar_select 0, %s8, %s6
  $region1: #{resnet_forward.25} parent=0
    #allocation2 [shape = 'u8[1024]{0}', space=vmem, size = 0x400, scoped, tag = 'output window, operand 0, single buffered']
    #allocation3 [shape = 's32[1]{0}', space=sflag, size = 0x4, scoped, tag = 'scoped memory for resnet_forward.25']
    %10 = vsyncpa [#allocation3], 0
    // Predicated region
    $region2: #{resnet_forward.25} parent=1 // pred_check
      _
    $region3: #{resnet_forward.25} parent=1 // pred_check_branch
      %12 = sbr.rel (0) target = $region5
    $region4: #{resnet_forward.25} parent=1 // pred_region
      _
    $region5: #{resnet_forward.25} parent=1 // pred_fallthru
      _
    // Predicated region
    $region6: #{resnet_forward.25} parent=1 // pred_check
      _
    $region7: #{resnet_forward.25} parent=1 // pred_check_branch
      %14 = sbr.rel (0) target = $region9
    $region8: #{resnet_forward.25} parent=1 // pred_region
      _
    $region9: #{resnet_forward.25} parent=1 // pred_fallthru
      _
    // Predicated region
    $region10: #{resnet_forward.25} parent=1 // pred_check
      _
    $region11: #{resnet_forward.25} parent=1 // pred_check_branch
      %16 = sbr.rel (0) target = $region13
    $region12: #{resnet_forward.25} parent=1 // pred_region
      _
    $region13: #{resnet_forward.25} parent=1 // pred_fallthru
      _
    // Predicated region
    $region14: #{resnet_forward.25} parent=1 // pred_check
      _
    $region15: #{resnet_forward.25} parent=1 // pred_check_branch
      %18 = sbr.rel (0) target = $region17
    $region16: #{resnet_forward.25} parent=1 // pred_region
      _
    $region17: #{resnet_forward.25} parent=1 // pred_fallthru
      _
    // Predicated region
    $region18: #{resnet_forward.25} parent=1 // pred_check
      _
    $region19: #{resnet_forward.25} parent=1 // pred_check_branch
      %20 = sbr.rel (0) target = $region21
    $region20: #{resnet_forward.25} parent=1 // pred_region
      _
    $region21: #{resnet_forward.25} parent=1 // pred_fallthru
      _
    %v21 = vld [vmem:[%s0] sm:$0xff]
    %v22 = vld [vmem:[%s0 + $0x8] sm:$0xff]
    %v23 = vld [vmem:[%s0 + $0x10] sm:$0xff]
    %v24 = vld [vmem:[%s0 + $0x18] sm:$0xff]
    %v25 = vld [vmem:[%s1] sm:$0x1]
    %v27 = vlaneseq
    %v28 = vshrl.u32 %v27, 7
    %v29 = vsub.s32 0, %v28
    %v30 = vrot.slane %v25, %v29
    %v32 = vmul.f32 %v21, %v30
    %v33 = vmul.f32 %v22, %v30
    %v34 = vmul.f32 %v23, %v30
    %v35 = vmul.f32 %v24, %v30
    %v36 = vld [vmem:[%s2] sm:$0x1]
    %v38 = vlaneseq
    %v39 = vshrl.u32 %v38, 7
    %v40 = vsub.s32 0, %v39
    %v41 = vrot.slane %v36, %v40
    %v43 = vadd.f32 %v32, %v41
    %v44 = vadd.f32 %v33, %v41
    %v45 = vadd.f32 %v34, %v41
    %v46 = vadd.f32 %v35, %v41
    %v47 = vmax.f32 %v43, 0.0
    %v48 = vmax.f32 %v44, 0.0
    %v49 = vmax.f32 %v45, 0.0
    %v50 = vmax.f32 %v46, 0.0
    %vm51 = vcmask 523264
    %v52 = vsel %vm51, %v47, 0.0
    %v53 = vsel %vm51, %v48, 0.0
    %v54 = vadd.f32 %v52, %v53
    %v55 = vrot.slane %v54, 4
    %v56 = vadd.f32 %v54, %v55
    %v57 = vrot.slane %v56, 2
    %v58 = vadd.f32 %v56, %v57
    %v59 = vrot.slane %v58, 1
    %v60 = vadd.f32 %v58, %v59
    %v61 = vsel %vm51, %v49, 0.0
    %v62 = vsel %vm51, %v50, 0.0
    %v63 = vadd.f32 %v61, %v62
    %v64 = vrot.slane %v63, 4
    %v65 = vadd.f32 %v63, %v64
    %v66 = vrot.slane %v65, 2
    %v67 = vadd.f32 %v65, %v66
    %v68 = vrot.slane %v67, 1
    %v69 = vadd.f32 %v67, %v68
    %v70 = vmul.f32 %v60, 0.0625
    %v71 = vmul.f32 %v69, 0.0625
    %v72 = vld [vmem:[%s3] sm:$0xff]
    %v73 = vld [vmem:[%s3 + $0x8] sm:$0xff]
    %v74 = vld [vmem:[%s3 + $0x10] sm:$0xff]
    %v75 = vld [vmem:[%s3 + $0x18] sm:$0xff]
    %v76 = vld [vmem:[%s3 + $0x20] sm:$0xff]
    %v77 = vld [vmem:[%s3 + $0x28] sm:$0xff]
    %v78 = vld [vmem:[%s3 + $0x30] sm:$0xff]
    %v79 = vld [vmem:[%s3 + $0x38] sm:$0xff]
    %v80 = vld [vmem:[%s4] sm:$0x1]
    %v82 = vlaneseq
    %v83 = vshrl.u32 %v82, 7
    %v84 = vsub.s32 0, %v83
    %v85 = vrot.slane %v80, %v84
    %vm89 = vcmask 1041409
    %v90 = vsel %vm89, %v71, %v70
    %v91 = vsel %vm51, %v90, 0
    %93 = vmatprep.subr.mxu0 0.0
    %94 = vmatpush1.msra.mxu0 0.0
    %95 = vmatprep.subr.mxu0 0.0
    %96 = vmatpush1.msra.mxu0 0.0
    %97 = vmatprep.subr.mxu0 0.0
    %98 = vmatpush1.msra.mxu0 0.0
    %99 = vmatprep.subr.mxu0 0.0
    %100 = vmatpush1.msra.mxu0 0.0
    %101 = vmatprep.subr.mxu0 0.0
    %102 = vmatpush1.msra.mxu0 0.0
    %103 = vmatprep.subr.mxu0 0.0
    %104 = vmatpush1.msra.mxu0 0.0
    %105 = vmatprep.subr.mxu0 0.0
    %106 = vmatpush1.msra.mxu0 0.0
    %107 = vmatprep.subr.mxu0 0.0
    %108 = vmatpush1.msra.mxu0 0.0
    %109 = vmatprep.subr.mxu0 0.0
    %110 = vmatpush1.msra.mxu0 %v79
    %111 = vmatprep.subr.mxu0 0.0
    %112 = vmatpush1.msra.mxu0 %v78
    %113 = vmatprep.subr.mxu0 0.0
    %114 = vmatpush1.msra.mxu0 %v77
    %115 = vmatprep.subr.mxu0 0.0
    %116 = vmatpush1.msra.mxu0 %v76
    %117 = vmatprep.subr.mxu0 0.0
    %118 = vmatpush1.msra.mxu0 %v75
    %119 = vmatprep.subr.mxu0 0.0
    %120 = vmatpush1.msra.mxu0 %v74
    %121 = vmatprep.subr.mxu0 0.0
    %122 = vmatpush1.msra.mxu0 %v73
    %123 = vmatprep.subr.mxu0 0.0
    %124 = vmatpush1.msra.mxu0 %v72
    %125 = vmatprep.subr.mxu0 0.0
    %126 = vmatpush2.msra.mxu0 0.0
    %127 = vmatprep.subr.mxu0 0.0
    %128 = vmatpush2.msra.mxu0 0.0
    %129 = vmatprep.subr.mxu0 0.0
    %130 = vmatpush2.msra.mxu0 0.0
    %131 = vmatprep.subr.mxu0 0.0
    %132 = vmatpush2.msra.mxu0 0.0
    %133 = vmatprep.subr.mxu0 0.0
    %134 = vmatpush2.msra.mxu0 0.0
    %135 = vmatprep.subr.mxu0 0.0
    %136 = vmatpush2.msra.mxu0 0.0
    %137 = vmatprep.subr.mxu0 0.0
    %138 = vmatpush2.msra.mxu0 0.0
    %139 = vmatprep.subr.mxu0 0.0
    %140 = vmatpush2.msra.mxu0 0.0
    %141 = vmatprep.subr.mxu0 0.0
    %142 = vmatpush2.msra.mxu0 0.0
    %143 = vmatprep.subr.mxu0 0.0
    %144 = vmatpush2.msra.mxu0 0.0
    %145 = vmatprep.subr.mxu0 0.0
    %146 = vmatpush2.msra.mxu0 0.0
    %147 = vmatprep.subr.mxu0 0.0
    %148 = vmatpush2.msra.mxu0 0.0
    %149 = vmatprep.subr.mxu0 0.0
    %150 = vmatpush2.msra.mxu0 0.0
    %151 = vmatprep.subr.mxu0 0.0
    %152 = vmatpush2.msra.mxu0 0.0
    %153 = vmatprep.subr.mxu0 0.0
    %154 = vmatpush2.msra.mxu0 0.0
    %155 = vmatprep.subr.mxu0 0.0
    %156 = vmatpush2.msra.mxu0 0.0
    %157 = vmatprep.mubr.f32.mxu0 0.0
    %158 = vmatmul.mubr.f32.gmra.mxu0 %v91
    %v159 = vpop.f32.mrf.mxu0
    %v160 = vadd.f32 %v85, %v159
    %v161 = vpop.f32.mrf.mxu0
    %162 = vdwg.mxu0
    %vm163 = vcmask 74752
    %164 = vst.msk [vmem:[#allocation2] sm:$0x3] %vm163, %v160
    // Predicated region
    $region22: #{resnet_forward.25} parent=1 // pred_check
      _
    $region23: #{resnet_forward.25} parent=1 // pred_check_branch
      %166 = sbr.rel (0) target = $region25
    $region24: #{resnet_forward.25} parent=1 // pred_region
      %s168 = ssub.s32 32, 32
      %169 = vsyncadd [#allocation3], %s168
      %s171 = sshll.u32 [#allocation2], 4
      %s172 = int_to_ptr.vmem [resolvable:$true] %s171
      %174 = dma.vmem_to_hbm [thread:$0]  %s172, 32, %s5, [#allocation3]
    $region25: #{resnet_forward.25} parent=1 // pred_fallthru
      _
    // Predicated region
    $region26: #{resnet_forward.25} parent=1 // pred_check
      _
    $region27: #{resnet_forward.25} parent=1 // pred_check_branch
      %176 = sbr.rel (0) target = $region29
    $region28: #{resnet_forward.25} parent=1 // pred_region
      %177 = dma.done [#allocation3], 32
    $region29: #{resnet_forward.25} parent=1 // pred_fallthru
      _
    %178 = vsyncpa [#allocation3], 1

// kernel: resnet_forward.24
$region0: #{resnet_forward.24}
  #allocation0 [shape = 'u32[]', space=smem, size = 0x4, offset = 0x4, fixed_abs, tag = 'smem constant byte address 0x4 - core index']
  #allocation1 [shape = 'u32[144,128]{1,0:T(1,128)}', space=vmem, size = 0x12000, scoped, tag = 'internal scratch']
  %s0 = inlined_call_operand.vmem [shape: bf16[32,576], index: 0, kind: input, shape index: {}]
  %s1 = inlined_call_operand.vmem [shape: bf16[576,64], index: 1, kind: input, shape index: {}]
  %s2 = inlined_call_operand.vmem [shape: f32[32,64], index: 2, kind: input, shape index: {}]
  %s3 = inlined_call_operand.vmem [shape: f32[32,64], index: 3, kind: output, shape index: {}]
  %s4 = sld [smem:[#allocation0]]
  $region22: #{resnet_forward.24} parent=0
    _
  %s6 = ssub.s32 1, %s4
  %s7 = scalar_select 0, %s6, %s4
  // Predicated region
  $region2: #{resnet_forward.24} parent=0 // pred_check
    _
  $region3: #{resnet_forward.24} parent=0 // pred_check_branch
    %9 = sbr.rel (0) target = $region5
  $region4: #{resnet_forward.24} parent=0 // pred_region
    _
  $region5: #{resnet_forward.24} parent=0 // pred_fallthru
    _
  // Predicated region
  $region6: #{resnet_forward.24} parent=0 // pred_check
    _
  $region7: #{resnet_forward.24} parent=0 // pred_check_branch
    %11 = sbr.rel (0) target = $region9
  $region8: #{resnet_forward.24} parent=0 // pred_region
    _
  $region9: #{resnet_forward.24} parent=0 // pred_fallthru
    _
  // Predicated region
  $region10: #{resnet_forward.24} parent=0 // pred_check
    _
  $region11: #{resnet_forward.24} parent=0 // pred_check_branch
    %13 = sbr.rel (0) target = $region13
  $region12: #{resnet_forward.24} parent=0 // pred_region
    _
  $region13: #{resnet_forward.24} parent=0 // pred_fallthru
    _
  %v15 = vld [vmem:[%s0] sm:$0xff]
  %v16 = vld [vmem:[%s0 + $0x8] sm:$0xff]
  %v17 = vld [vmem:[%s0 + $0x10] sm:$0xf]
  %v18 = vld [vmem:[%s0 + $0x14] sm:$0xff]
  %v19 = vld [vmem:[%s0 + $0x1c] sm:$0xff]
  %v20 = vld [vmem:[%s0 + $0x24] sm:$0xf]
  %v21 = vld [vmem:[%s0 + $0x28] sm:$0xff]
  %v22 = vld [vmem:[%s0 + $0x30] sm:$0xff]
  %v23 = vld [vmem:[%s0 + $0x38] sm:$0xf]
  %v24 = vld [vmem:[%s0 + $0x3c] sm:$0xff]
  %v25 = vld [vmem:[%s0 + $0x44] sm:$0xff]
  %v26 = vld [vmem:[%s0 + $0x4c] sm:$0xf]
  %v27 = vld [vmem:[%s1] sm:$0xf]
  %v28 = vld [vmem:[%s1 + $0x4] sm:$0xf]
  %v29 = vld [vmem:[%s1 + $0x8] sm:$0xf]
  %v30 = vld [vmem:[%s1 + $0xc] sm:$0xf]
  %v31 = vld [vmem:[%s1 + $0x10] sm:$0xf]
  %v32 = vld [vmem:[%s1 + $0x14] sm:$0xf]
  %v33 = vld [vmem:[%s1 + $0x18] sm:$0xf]
  %v34 = vld [vmem:[%s1 + $0x1c] sm:$0xf]
  %v35 = vld [vmem:[%s1 + $0x20] sm:$0xf]
  %v36 = vld [vmem:[%s1 + $0x24] sm:$0xf]
  %v37 = vld [vmem:[%s1 + $0x28] sm:$0xf]
  %v38 = vld [vmem:[%s1 + $0x2c] sm:$0xf]
  %v39 = vld [vmem:[%s1 + $0x30] sm:$0xf]
  %v40 = vld [vmem:[%s1 + $0x34] sm:$0xf]
  %v41 = vld [vmem:[%s1 + $0x38] sm:$0xf]
  %v42 = vld [vmem:[%s1 + $0x3c] sm:$0xf]
  %v43 = vld [vmem:[%s1 + $0x40] sm:$0xf]
  %v44 = vld [vmem:[%s1 + $0x44] sm:$0xf]
  %v45 = vld [vmem:[%s1 + $0x48] sm:$0xf]
  %v46 = vld [vmem:[%s1 + $0x4c] sm:$0xf]
  %v47 = vld [vmem:[%s1 + $0x50] sm:$0xf]
  %v48 = vld [vmem:[%s1 + $0x54] sm:$0xf]
  %v49 = vld [vmem:[%s1 + $0x58] sm:$0xf]
  %v50 = vld [vmem:[%s1 + $0x5c] sm:$0xf]
  %v51 = vld [vmem:[%s1 + $0x60] sm:$0xf]
  %v52 = vld [vmem:[%s1 + $0x64] sm:$0xf]
  %v53 = vld [vmem:[%s1 + $0x68] sm:$0xf]
  %v54 = vld [vmem:[%s1 + $0x6c] sm:$0xf]
  %v55 = vld [vmem:[%s1 + $0x70] sm:$0xf]
  %v56 = vld [vmem:[%s1 + $0x74] sm:$0xf]
  %v57 = vld [vmem:[%s1 + $0x78] sm:$0xf]
  %v58 = vld [vmem:[%s1 + $0x7c] sm:$0xf]
  %v59 = vld [vmem:[%s1 + $0x80] sm:$0xf]
  %v60 = vld [vmem:[%s1 + $0x84] sm:$0xf]
  %v61 = vld [vmem:[%s1 + $0x88] sm:$0xf]
  %v62 = vld [vmem:[%s1 + $0x8c] sm:$0xf]
  %v63 = vld [vmem:[%s1 + $0x90] sm:$0xf]
  %v64 = vld [vmem:[%s1 + $0x94] sm:$0xf]
  %v65 = vld [vmem:[%s1 + $0x98] sm:$0xf]
  %v66 = vld [vmem:[%s1 + $0x9c] sm:$0xf]
  %v67 = vld [vmem:[%s1 + $0xa0] sm:$0xf]
  %v68 = vld [vmem:[%s1 + $0xa4] sm:$0xf]
  %v69 = vld [vmem:[%s1 + $0xa8] sm:$0xf]
  %v70 = vld [vmem:[%s1 + $0xac] sm:$0xf]
  %v71 = vld [vmem:[%s1 + $0xb0] sm:$0xf]
  %v72 = vld [vmem:[%s1 + $0xb4] sm:$0xf]
  %v73 = vld [vmem:[%s1 + $0xb8] sm:$0xf]
  %v74 = vld [vmem:[%s1 + $0xbc] sm:$0xf]
  %v75 = vld [vmem:[%s1 + $0xc0] sm:$0xf]
  %v76 = vld [vmem:[%s1 + $0xc4] sm:$0xf]
  %v77 = vld [vmem:[%s1 + $0xc8] sm:$0xf]
  %v78 = vld [vmem:[%s1 + $0xcc] sm:$0xf]
  %v79 = vld [vmem:[%s1 + $0xd0] sm:$0xf]
  %v80 = vld [vmem:[%s1 + $0xd4] sm:$0xf]
  %v81 = vld [vmem:[%s1 + $0xd8] sm:$0xf]
  %v82 = vld [vmem:[%s1 + $0xdc] sm:$0xf]
  %v83 = vld [vmem:[%s1 + $0xe0] sm:$0xf]
  %v84 = vld [vmem:[%s1 + $0xe4] sm:$0xf]
  %v85 = vld [vmem:[%s1 + $0xe8] sm:$0xf]
  %v86 = vld [vmem:[%s1 + $0xec] sm:$0xf]
  %v87 = vld [vmem:[%s1 + $0xf0] sm:$0xf]
  %v88 = vld [vmem:[%s1 + $0xf4] sm:$0xf]
  %v89 = vld [vmem:[%s1 + $0xf8] sm:$0xf]
  %v90 = vld [vmem:[%s1 + $0xfc] sm:$0xf]
  %v91 = vld [vmem:[%s1 + $0x100] sm:$0xf]
  %v92 = vld [vmem:[%s1 + $0x104] sm:$0xf]
  %v93 = vld [vmem:[%s1 + $0x108] sm:$0xf]
  %v94 = vld [vmem:[%s1 + $0x10c] sm:$0xf]
  %v95 = vld [vmem:[%s1 + $0x110] sm:$0xf]
  %v96 = vld [vmem:[%s1 + $0x114] sm:$0xf]
  %v97 = vld [vmem:[%s1 + $0x118] sm:$0xf]
  %v98 = vld [vmem:[%s1 + $0x11c] sm:$0xf]
  %v99 = vld [vmem:[%s2] sm:$0xff]
  %v100 = vld [vmem:[%s2 + $0x8] sm:$0xff]
  %v101 = vld [vmem:[%s2 + $0x10] sm:$0xff]
  %v102 = vld [vmem:[%s2 + $0x18] sm:$0xff]
  %v115 = vunpack.c.l.b16 %v15
  %v116 = vunpack.c.h.b16 %v15
  %v117 = vunpack.c.l.b16 %v16
  %v118 = vunpack.c.h.b16 %v16
  %v119 = vunpack.c.l.b16 %v17
  %v120 = vunpack.c.l.b16 %v18
  %v121 = vunpack.c.h.b16 %v18
  %v122 = vunpack.c.l.b16 %v19
  %v123 = vunpack.c.h.b16 %v19
  %v124 = vunpack.c.l.b16 %v20
  %v125 = vunpack.c.l.b16 %v21
  %v126 = vunpack.c.h.b16 %v21
  %v127 = vunpack.c.l.b16 %v22
  %v128 = vunpack.c.h.b16 %v22
  %v129 = vunpack.c.l.b16 %v23
  %v130 = vunpack.c.l.b16 %v24
  %v131 = vunpack.c.h.b16 %v24
  %v132 = vunpack.c.l.b16 %v25
  %v133 = vunpack.c.h.b16 %v25
  %v134 = vunpack.c.l.b16 %v26
  %v135 = vpack.c.b16 %v120, %v115
  %v136 = vpack.c.b16 %v121, %v116
  %v137 = vpack.c.b16 %v122, %v117
  %v138 = vpack.c.b16 %v123, %v118
  %v139 = vpack.c.b16 %v124, %v119
  %v140 = vpack.c.b16 %v130, %v125
  %v141 = vpack.c.b16 %v131, %v126
  %v142 = vpack.c.b16 %v132, %v127
  %v143 = vpack.c.b16 %v133, %v128
  %v144 = vpack.c.b16 %v134, %v129
  %v225 = vunpack.c.l.b16 %v27
  %v226 = vunpack.c.l.b16 %v28
  %v227 = vunpack.c.l.b16 %v29
  %v228 = vunpack.c.l.b16 %v30
  %v229 = vunpack.c.l.b16 %v31
  %v230 = vunpack.c.l.b16 %v32
  %v231 = vunpack.c.l.b16 %v33
  %v232 = vunpack.c.l.b16 %v34
  %v233 = vunpack.c.l.b16 %v35
  %v234 = vunpack.c.l.b16 %v36
  %v235 = vunpack.c.l.b16 %v37
  %v236 = vunpack.c.l.b16 %v38
  %v237 = vunpack.c.l.b16 %v39
  %v238 = vunpack.c.l.b16 %v40
  %v239 = vunpack.c.l.b16 %v41
  %v240 = vunpack.c.l.b16 %v42
  %v241 = vunpack.c.l.b16 %v43
  %v242 = vunpack.c.l.b16 %v44
  %v243 = vunpack.c.l.b16 %v45
  %v244 = vunpack.c.l.b16 %v46
  %v245 = vunpack.c.l.b16 %v47
  %v246 = vunpack.c.l.b16 %v48
  %v247 = vunpack.c.l.b16 %v49
  %v248 = vunpack.c.l.b16 %v50
  %v249 = vunpack.c.l.b16 %v51
  %v250 = vunpack.c.l.b16 %v52
  %v251 = vunpack.c.l.b16 %v53
  %v252 = vunpack.c.l.b16 %v54
  %v253 = vunpack.c.l.b16 %v55
  %v254 = vunpack.c.l.b16 %v56
  %v255 = vunpack.c.l.b16 %v57
  %v256 = vunpack.c.l.b16 %v58
  %v257 = vunpack.c.l.b16 %v59
  %v258 = vunpack.c.l.b16 %v60
  %v259 = vunpack.c.l.b16 %v61
  %v260 = vunpack.c.l.b16 %v62
  %v261 = vunpack.c.l.b16 %v63
  %v262 = vunpack.c.l.b16 %v64
  %v263 = vunpack.c.l.b16 %v65
  %v264 = vunpack.c.l.b16 %v66
  %v265 = vunpack.c.l.b16 %v67
  %v266 = vunpack.c.l.b16 %v68
  %v267 = vunpack.c.l.b16 %v69
  %v268 = vunpack.c.l.b16 %v70
  %v269 = vunpack.c.l.b16 %v71
  %v270 = vunpack.c.l.b16 %v72
  %v271 = vunpack.c.l.b16 %v73
  %v272 = vunpack.c.l.b16 %v74
  %v273 = vunpack.c.l.b16 %v75
  %v274 = vunpack.c.l.b16 %v76
  %v275 = vunpack.c.l.b16 %v77
  %v276 = vunpack.c.l.b16 %v78
  %v277 = vunpack.c.l.b16 %v79
  %v278 = vunpack.c.l.b16 %v80
  %v279 = vunpack.c.l.b16 %v81
  %v280 = vunpack.c.l.b16 %v82
  %v281 = vunpack.c.l.b16 %v83
  %v282 = vunpack.c.l.b16 %v84
  %v283 = vunpack.c.l.b16 %v85
  %v284 = vunpack.c.l.b16 %v86
  %v285 = vunpack.c.l.b16 %v87
  %v286 = vunpack.c.l.b16 %v88
  %v287 = vunpack.c.l.b16 %v89
  %v288 = vunpack.c.l.b16 %v90
  %v289 = vunpack.c.l.b16 %v91
  %v290 = vunpack.c.l.b16 %v92
  %v291 = vunpack.c.l.b16 %v93
  %v292 = vunpack.c.l.b16 %v94
  %v293 = vunpack.c.l.b16 %v95
  %v294 = vunpack.c.l.b16 %v96
  %v295 = vunpack.c.l.b16 %v97
  %v296 = vunpack.c.l.b16 %v98
  %v297 = vpack.c.b16 %v226, %v225
  %v298 = vpack.c.b16 %v228, %v227
  %v299 = vpack.c.b16 %v230, %v229
  %v300 = vpack.c.b16 %v232, %v231
  %v301 = vpack.c.b16 %v234, %v233
  %v302 = vpack.c.b16 %v236, %v235
  %v303 = vpack.c.b16 %v238, %v237
  %v304 = vpack.c.b16 %v240, %v239
  %v305 = vpack.c.b16 %v242, %v241
  %v306 = vpack.c.b16 %v244, %v243
  %v307 = vpack.c.b16 %v246, %v245
  %v308 = vpack.c.b16 %v248, %v247
  %v309 = vpack.c.b16 %v250, %v249
  %v310 = vpack.c.b16 %v252, %v251
  %v311 = vpack.c.b16 %v254, %v253
  %v312 = vpack.c.b16 %v256, %v255
  %v313 = vpack.c.b16 %v258, %v257
  %v314 = vpack.c.b16 %v260, %v259
  %v315 = vpack.c.b16 %v262, %v261
  %v316 = vpack.c.b16 %v264, %v263
  %v317 = vpack.c.b16 %v266, %v265
  %v318 = vpack.c.b16 %v268, %v267
  %v319 = vpack.c.b16 %v270, %v269
  %v320 = vpack.c.b16 %v272, %v271
  %v321 = vpack.c.b16 %v274, %v273
  %v322 = vpack.c.b16 %v276, %v275
  %v323 = vpack.c.b16 %v278, %v277
  %v324 = vpack.c.b16 %v280, %v279
  %v325 = vpack.c.b16 %v282, %v281
  %v326 = vpack.c.b16 %v284, %v283
  %v327 = vpack.c.b16 %v286, %v285
  %v328 = vpack.c.b16 %v288, %v287
  %v329 = vpack.c.b16 %v290, %v289
  %v330 = vpack.c.b16 %v292, %v291
  %v331 = vpack.c.b16 %v294, %v293
  %v332 = vpack.c.b16 %v296, %v295
  %vm369 = vcmask 523264
  %v371 = vsel %vm369, %v139, 0
  %v374 = vsel %vm369, %v144, 0
  %376 = vmatprep.subr.bf16.mxu0 0
  %377 = vmatpush1.bf16.msra.mxu0 %v304
  %378 = vmatprep.subr.bf16.mxu0 0
  %379 = vmatpush1.bf16.msra.mxu0 %v303
  %380 = vmatprep.subr.bf16.mxu0 0
  %381 = vmatpush1.bf16.msra.mxu0 %v302
  %382 = vmatprep.subr.bf16.mxu0 0
  %383 = vmatpush1.bf16.msra.mxu0 %v301
  %384 = vmatprep.subr.bf16.mxu0 0
  %385 = vmatpush1.bf16.msra.mxu0 %v300
  %386 = vmatprep.subr.bf16.mxu0 0
  %387 = vmatpush1.bf16.msra.mxu0 %v299
  %388 = vmatprep.subr.bf16.mxu0 0
  %389 = vmatpush1.bf16.msra.mxu0 %v298
  %390 = vmatprep.subr.bf16.mxu0 0
  %391 = vmatpush1.bf16.msra.mxu0 %v297
  %392 = vmatprep.subr.bf16.mxu0 0
  %393 = vmatpush2.bf16.msra.mxu0 %v312
  %394 = vmatprep.subr.bf16.mxu0 0
  %395 = vmatpush2.bf16.msra.mxu0 %v311
  %396 = vmatprep.subr.bf16.mxu0 0
  %397 = vmatpush2.bf16.msra.mxu0 %v310
  %398 = vmatprep.subr.bf16.mxu0 0
  %399 = vmatpush2.bf16.msra.mxu0 %v309
  %400 = vmatprep.subr.bf16.mxu0 0
  %401 = vmatpush2.bf16.msra.mxu0 %v308
  %402 = vmatprep.subr.bf16.mxu0 0
  %403 = vmatpush2.bf16.msra.mxu0 %v307
  %404 = vmatprep.subr.bf16.mxu0 0
  %405 = vmatpush2.bf16.msra.mxu0 %v306
  %406 = vmatprep.subr.bf16.mxu0 0
  %407 = vmatpush2.bf16.msra.mxu0 %v305
  %408 = vmatprep.mubr.bf16.mxu0 %v136
  %409 = vmatmul.mubr.bf16.gmra.mxu0 %v135
  %v410 = vpop.f32.mrf.mxu0
  %v411 = vadd.f32 %v99, %v410
  %v412 = vpop.f32.mrf.mxu0
  %v413 = vpop.f32.mrf.mxu0
  %v414 = vadd.f32 %v100, %v413
  %v415 = vpop.f32.mrf.mxu0
  %416 = vmatprep.mubr.bf16.mxu0 %v141
  %417 = vmatmul.mubr.bf16.gmra.mxu0 %v140
  %v418 = vpop.f32.mrf.mxu0
  %v419 = vadd.f32 %v101, %v418
  %v420 = vpop.f32.mrf.mxu0
  %v421 = vpop.f32.mrf.mxu0
  %v422 = vadd.f32 %v102, %v421
  %v423 = vpop.f32.mrf.mxu0
  %424 = vdwg.mxu0
  %425 = vmatprep.subr.bf16.mxu0 0
  %426 = vmatpush1.bf16.msra.mxu0 %v320
  %427 = vmatprep.subr.bf16.mxu0 0
  %428 = vmatpush1.bf16.msra.mxu0 %v319
  %429 = vmatprep.subr.bf16.mxu0 0
  %430 = vmatpush1.bf16.msra.mxu0 %v318
  %431 = vmatprep.subr.bf16.mxu0 0
  %432 = vmatpush1.bf16.msra.mxu0 %v317
  %433 = vmatprep.subr.bf16.mxu0 0
  %434 = vmatpush1.bf16.msra.mxu0 %v316
  %435 = vmatprep.subr.bf16.mxu0 0
  %436 = vmatpush1.bf16.msra.mxu0 %v315
  %437 = vmatprep.subr.bf16.mxu0 0
  %438 = vmatpush1.bf16.msra.mxu0 %v314
  %439 = vmatprep.subr.bf16.mxu0 0
  %440 = vmatpush1.bf16.msra.mxu0 %v313
  %441 = vmatprep.subr.bf16.mxu0 0
  %442 = vmatpush2.bf16.msra.mxu0 %v328
  %443 = vmatprep.subr.bf16.mxu0 0
  %444 = vmatpush2.bf16.msra.mxu0 %v327
  %445 = vmatprep.subr.bf16.mxu0 0
  %446 = vmatpush2.bf16.msra.mxu0 %v326
  %447 = vmatprep.subr.bf16.mxu0 0
  %448 = vmatpush2.bf16.msra.mxu0 %v325
  %449 = vmatprep.subr.bf16.mxu0 0
  %450 = vmatpush2.bf16.msra.mxu0 %v324
  %451 = vmatprep.subr.bf16.mxu0 0
  %452 = vmatpush2.bf16.msra.mxu0 %v323
  %453 = vmatprep.subr.bf16.mxu0 0
  %454 = vmatpush2.bf16.msra.mxu0 %v322
  %455 = vmatprep.subr.bf16.mxu0 0
  %456 = vmatpush2.bf16.msra.mxu0 %v321
  %457 = vmatprep.mubr.bf16.mxu0 %v138
  %458 = vmatmul.mubr.bf16.gmra.mxu0 %v137
  %v459 = vpop.f32.mrf.mxu0
  %v460 = vadd.f32 %v411, %v459
  %v461 = vpop.f32.mrf.mxu0
  %v462 = vpop.f32.mrf.mxu0
  %v463 = vadd.f32 %v414, %v462
  %v464 = vpop.f32.mrf.mxu0
  %465 = vmatprep.mubr.bf16.mxu0 %v143
  %466 = vmatmul.mubr.bf16.gmra.mxu0 %v142
  %v467 = vpop.f32.mrf.mxu0
  %v468 = vadd.f32 %v419, %v467
  %v469 = vpop.f32.mrf.mxu0
  %v470 = vpop.f32.mrf.mxu0
  %v471 = vadd.f32 %v422, %v470
  %v472 = vpop.f32.mrf.mxu0
  %473 = vdwg.mxu0
  %474 = vmatprep.subr.bf16.mxu0 0
  %475 = vmatpush1.bf16.msra.mxu0 0
  %476 = vmatprep.subr.bf16.mxu0 0
  %477 = vmatpush1.bf16.msra.mxu0 0
  %478 = vmatprep.subr.bf16.mxu0 0
  %479 = vmatpush1.bf16.msra.mxu0 0
  %480 = vmatprep.subr.bf16.mxu0 0
  %481 = vmatpush1.bf16.msra.mxu0 0
  %482 = vmatprep.subr.bf16.mxu0 0
  %483 = vmatpush1.bf16.msra.mxu0 %v332
  %484 = vmatprep.subr.bf16.mxu0 0
  %485 = vmatpush1.bf16.msra.mxu0 %v331
  %486 = vmatprep.subr.bf16.mxu0 0
  %487 = vmatpush1.bf16.msra.mxu0 %v330
  %488 = vmatprep.subr.bf16.mxu0 0
  %489 = vmatpush1.bf16.msra.mxu0 %v329
  %490 = vmatprep.subr.bf16.mxu0 0
  %491 = vmatpush2.bf16.msra.mxu0 0
  %492 = vmatprep.subr.bf16.mxu0 0
  %493 = vmatpush2.bf16.msra.mxu0 0
  %494 = vmatprep.subr.bf16.mxu0 0
  %495 = vmatpush2.bf16.msra.mxu0 0
  %496 = vmatprep.subr.bf16.mxu0 0
  %497 = vmatpush2.bf16.msra.mxu0 0
  %498 = vmatprep.subr.bf16.mxu0 0
  %499 = vmatpush2.bf16.msra.mxu0 0
  %500 = vmatprep.subr.bf16.mxu0 0
  %501 = vmatpush2.bf16.msra.mxu0 0
  %502 = vmatprep.subr.bf16.mxu0 0
  %503 = vmatpush2.bf16.msra.mxu0 0
  %504 = vmatprep.subr.bf16.mxu0 0
  %505 = vmatpush2.bf16.msra.mxu0 0
  %506 = vmatprep.mubr.bf16.mxu0 0
  %507 = vmatmul.mubr.bf16.gmra.mxu0 %v371
  %v508 = vpop.f32.mrf.mxu0
  %v509 = vadd.f32 %v460, %v508
  %v510 = vpop.f32.mrf.mxu0
  %v511 = vpop.f32.mrf.mxu0
  %v512 = vadd.f32 %v463, %v511
  %v513 = vpop.f32.mrf.mxu0
  %514 = vmatprep.mubr.bf16.mxu0 0
  %515 = vmatmul.mubr.bf16.gmra.mxu0 %v374
  %v516 = vpop.f32.mrf.mxu0
  %v517 = vadd.f32 %v468, %v516
  %v518 = vpop.f32.mrf.mxu0
  %v519 = vpop.f32.mrf.mxu0
  %v520 = vadd.f32 %v471, %v519
  %v521 = vpop.f32.mrf.mxu0
  %522 = vdwg.mxu0
  %523 = vst.msk [vmem:[%s3] sm:$0xff] %vm369, %v509
  %524 = vst.msk [vmem:[%s3 + $0x8] sm:$0xff] %vm369, %v512
  %525 = vst.msk [vmem:[%s3 + $0x10] sm:$0xff] %vm369, %v517
  %526 = vst.msk [vmem:[%s3 + $0x18] sm:$0xff] %vm369, %v520
  // Predicated region
  $region14: #{resnet_forward.24} parent=0 // pred_check
    _
  $region15: #{resnet_forward.24} parent=0 // pred_check_branch
    %528 = sbr.rel (0) target = $region17
  $region16: #{resnet_forward.24} parent=0 // pred_region
    _
  $region17: #{resnet_forward.24} parent=0 // pred_fallthru
    _
  // Predicated region
  $region18: #{resnet_forward.24} parent=0 // pred_check
    _
  $region19: #{resnet_forward.24} parent=0 // pred_check_branch
    %530 = sbr.rel (0) target = $region21
  $region20: #{resnet_forward.24} parent=0 // pred_region
    _
  $region21: #{resnet_forward.24} parent=0 // pred_fallthru
    _

</llo_original>
